<compile_context>
chip_gen: v6e
topology: v6e:2x2x1
jax: 0.10.0
libtpu: 0.0.40
codegen_flags: <defaults>
</compile_context>

<pallas_src>
import jax
import jax.numpy as jnp
import numpy as np
from jax.experimental import pallas as pl
from jax.experimental.pallas import tpu as pltpu


# --------------------------------------------------------------------------- #
# Kernel
# --------------------------------------------------------------------------- #
def feat_encode_kernel(feats2_ref, ts2_ref, tw_ref, wff_ref, wtl_ref, wtr_ref,
                       b2_ref, out_ref):
    # TimeEncode: cos(t * w + 0) -- transcendental path stays f32 (v5e has no
    # bf16 EUP/VPU datapath; cos accuracy matters).
    ts = ts2_ref[...]                                     # (tile, 2) f32
    tw = tw_ref[...]                                      # (1, T)    f32
    tf_even = jnp.cos(ts[:, 0:1] * tw)                    # (tile, T) f32
    tf_odd = jnp.cos(ts[:, 1:2] * tw)                     # (tile, T) f32

    # In-kernel cast to the matmul dtype: a free VPU op hidden under DMA,
    # instead of a separate wrapper-side HBM pass.
    x = feats2_ref[...].astype(wff_ref.dtype)             # (tile, 2F)

    # concat([feats, time_feats]) @ W.T folded into block-diagonal weights so
    # the result is already the lane-dense [tile, 2*out] row-pair layout.
    acc = jnp.dot(x, wff_ref[...], preferred_element_type=jnp.float32)
    acc = acc + jnp.dot(tf_even.astype(wtl_ref.dtype), wtl_ref[...],
                        preferred_element_type=jnp.float32)
    acc = acc + jnp.dot(tf_odd.astype(wtr_ref.dtype), wtr_ref[...],
                        preferred_element_type=jnp.float32)
    out_ref[...] = (acc + b2_ref[...]).astype(out_ref.dtype)


# --------------------------------------------------------------------------- #
# One-time parameter preparation (hoisted out of the per-call path)
# --------------------------------------------------------------------------- #
def prepare_feat_encode_params(time_w, fe_weight, fe_bias, *, use_bf16=True):
    """
    time_w:    [T]            TimeEncode fixed weight (bias == 0)
    fe_weight: [out, F + T]   nn.Linear weight (PyTorch layout)
    fe_bias:   [out]
    Builds the block-diagonal / split weights for the row-pair kernel.
    """
    T = time_w.shape[0]
    out_dims, in_dims = fe_weight.shape
    F = in_dims - T
    mm_dtype = jnp.bfloat16 if use_bf16 else jnp.float32

    w_t = jnp.asarray(fe_weight, jnp.float32).T            # [F+T, out]
    # concat order is [edge_feats, time_feats]: first F rows act on feats.
    w_feat = w_t[:F, :]                                     # [F, out]
    w_time = w_t[F:, :]                                     # [T, out]
    zf = jnp.zeros((F, out_dims), jnp.float32)
    zt = jnp.zeros((T, out_dims), jnp.float32)

    w_ff = jnp.concatenate(
        [jnp.concatenate([w_feat, zf], axis=1),
         jnp.concatenate([zf, w_feat], axis=1)], axis=0).astype(mm_dtype)  # [2F, 2*out]
    w_tl = jnp.concatenate([w_time, zt], axis=1).astype(mm_dtype)          # [T, 2*out]
    w_tr = jnp.concatenate([zt, w_time], axis=1).astype(mm_dtype)          # [T, 2*out]

    bias = jnp.asarray(fe_bias, jnp.float32)
    return {
        "w_ff": w_ff,
        "w_tl": w_tl,
        "w_tr": w_tr,
        "bias2": jnp.concatenate([bias, bias]).reshape(1, 2 * out_dims),
        "time_w": jnp.asarray(time_w, jnp.float32).reshape(1, T),
    }


# --------------------------------------------------------------------------- #
# Tile selection
# --------------------------------------------------------------------------- #
def _min_grid_steps():
    """2-TC chips (v7x / v4 megacore) want >=2 pipelined steps per core."""
    try:
        kind = jax.devices()[0].device_kind.lower()
    except Exception:
        return 1
    return 4 if ("v7" in kind or "v4" in kind) else 1


def _pick_tile_rows(n_rows, max_tile, min_steps):
    """Block row count in pair-rows: multiple of 8 unless full-extent."""
    if min_steps <= 1 and n_rows <= max_tile:
        return n_rows                              # single full-extent block
    target = min(max_tile, pl.cdiv(n_rows, max(min_steps, 1)))
    tile = max((target // 8) * 8, 8)
    if tile >= n_rows:
        return n_rows
    return tile


# --------------------------------------------------------------------------- #
# Wrapper
# --------------------------------------------------------------------------- #
def feat_encode(edge_feats, edge_ts, params, *, max_tile_rows=2048,
                out_dtype=jnp.float32):
    """
    edge_feats: [N, F] float32
    edge_ts:    [N]    float32
    params:     output of prepare_feat_encode_params
    returns:    [N, out] (out_dtype; set jnp.bfloat16 if the consumer tolerates
                it -- halves the dominant output HBM traffic)
    """
    N, F = edge_feats.shape
    T = params["time_w"].shape[1]
    out_dims = params["w_ff"].shape[1] // 2
    assert params["w_ff"].shape[0] == 2 * F

    # Pair adjacent rows (metadata-only reshapes on row-major arrays) so the
    # output tile is lane-dense (2*out lanes) and feats tiles are 2F wide.
    if N % 2:
        # Rare corner case: one extra zero row so rows pair up (single copy).
        edge_feats = jnp.concatenate(
            [edge_feats, jnp.zeros((1, F), edge_feats.dtype)], axis=0)
        edge_ts = jnp.concatenate(
            [edge_ts, jnp.zeros((1,), edge_ts.dtype)], axis=0)
    n_even = edge_feats.shape[0]
    n_rows = n_even // 2
    feats2 = edge_feats.reshape(n_rows, 2 * F)              # no dtype cast here
    ts2 = edge_ts.astype(jnp.float32).reshape(n_rows, 2)

    tile = _pick_tile_rows(n_rows, max_tile_rows, _min_grid_steps())
    # Ragged final block (n_rows % tile != 0) is handled by Pallas: OOB input
    # rows are garbage but independent, OOB output rows are not written back.
    grid_rows = pl.cdiv(n_rows, tile)

    w_itemsize = jnp.dtype(params["w_ff"].dtype).itemsize
    cost = pl.CostEstimate(
        flops=2 * N * (F + T) * out_dims,
        transcendentals=N * T,
        bytes_accessed=N * (F * 4 + 4 + out_dims * jnp.dtype(out_dtype).itemsize)
        + 2 * (F + 2 * T) * 2 * out_dims * w_itemsize,
    )

    out2 = pl.pallas_call(
        feat_encode_kernel,
        out_shape=jax.ShapeDtypeStruct((n_rows, 2 * out_dims), out_dtype),
        grid_spec=pl.GridSpec(
            grid=(grid_rows,),
            in_specs=[
                pl.BlockSpec((tile, 2 * F), lambda i: (i, 0)),          # feats pairs
                pl.BlockSpec((tile, 2), lambda i: (i, 0)),              # ts pairs
                pl.BlockSpec((1, T), lambda i: (0, 0)),                 # time weights
                pl.BlockSpec((2 * F, 2 * out_dims), lambda i: (0, 0)),  # W_feat blk-diag
                pl.BlockSpec((T, 2 * out_dims), lambda i: (0, 0)),      # W_time | 0
                pl.BlockSpec((T, 2 * out_dims), lambda i: (0, 0)),      # 0 | W_time
                pl.BlockSpec((1, 2 * out_dims), lambda i: (0, 0)),      # bias pair
            ],
            out_specs=pl.BlockSpec((tile, 2 * out_dims), lambda i: (i, 0)),
        ),
        compiler_params=pltpu.CompilerParams(
            dimension_semantics=("parallel",),
            vmem_limit_bytes=32 * 1024 * 1024,
        ),
        cost_estimate=cost,
    )(feats2, ts2, params["time_w"], params["w_ff"], params["w_tl"],
      params["w_tr"], params["bias2"])

    out = out2.reshape(n_even, out_dims)                    # metadata-only
    return out[:N] if n_even != N else out


# --------------------------------------------------------------------------- #
# Pure-JAX reference mirroring the PyTorch forward exactly (f32 everywhere)
# --------------------------------------------------------------------------- #
def reference_jax(edge_feats, edge_ts, time_w, fe_weight, fe_bias):
    t = edge_ts.reshape(-1, 1)
    time_feats = jnp.cos(t @ time_w.reshape(-1, 1).T)       # Linear(1, T), bias 0
    x = jnp.concatenate([edge_feats, time_feats], axis=1).astype(jnp.float32)
    return x @ fe_weight.T + fe_bias


if __name__ == "__main__":
    # Module hyper-params (small, consistent with the forward pass).
    time_dims = 32
    feat_dims = 48
    out_dims = 64

    key = jax.random.PRNGKey(0)
    k_feat, k_ts, k_w, k_b = jax.random.split(key, 4)

    # TimeEncode fixed parameters: w = 1/10^linspace(0,9,dim), bias = 0.
    time_w = jnp.asarray(
        1.0 / 10.0 ** np.linspace(0, 9, time_dims, dtype=np.float32),
        dtype=jnp.float32,
    )

    # feat_encoder Linear parameters (nn.Linear(time+feat, out) layout).
    in_dims = time_dims + feat_dims
    bound = 1.0 / np.sqrt(in_dims)
    fe_weight = jax.random.uniform(
        k_w, (out_dims, in_dims), dtype=jnp.float32, minval=-bound, maxval=bound
    )
    fe_bias = jax.random.uniform(
        k_b, (out_dims,), dtype=jnp.float32, minval=-bound, maxval=bound
    )

    params = prepare_feat_encode_params(time_w, fe_weight, fe_bias, use_bf16=True)
    fe_jit = jax.jit(feat_encode, static_argnames=("max_tile_rows", "out_dtype"))

    # --- case 1: even N, default tiling ---
    N = 256
    edge_feats = jax.random.normal(k_feat, (N, feat_dims), dtype=jnp.float32)
    edge_ts = jax.random.uniform(k_ts, (N,), dtype=jnp.float32, maxval=100.0)
    out = jax.block_until_ready(fe_jit(edge_feats, edge_ts, params))
    ref = reference_jax(edge_feats, edge_ts, time_w, fe_weight, fe_bias)
    np.testing.assert_allclose(np.asarray(out), np.asarray(ref), rtol=2e-2, atol=2e-2)

    # --- case 2: N not tile-aligned, small tile -> exercises the ragged
    #     (masked) final block instead of any wrapper-side padding ---
    N2 = 200
    out2 = jax.block_until_ready(
        fe_jit(edge_feats[:N2], edge_ts[:N2], params, max_tile_rows=32)
    )
    ref2 = reference_jax(edge_feats[:N2], edge_ts[:N2], time_w, fe_weight, fe_bias)
    np.testing.assert_allclose(np.asarray(out2), np.asarray(ref2), rtol=2e-2, atol=2e-2)

    # --- case 3: odd N (single-row pairing pad) + ragged blocks ---
    N3 = 101
    out3 = jax.block_until_ready(
        fe_jit(edge_feats[:N3], edge_ts[:N3], params, max_tile_rows=16)
    )
    ref3 = reference_jax(edge_feats[:N3], edge_ts[:N3], time_w, fe_weight, fe_bias)
    np.testing.assert_allclose(np.asarray(out3), np.asarray(ref3), rtol=2e-2, atol=2e-2)

    print("KERNEL_OK")
</pallas_src>

<mosaic_0001>
module attributes {stable_mosaic.version = 11 : i64} {
  func.func @feat_encode_kernel(%arg0: i32, %arg1: memref<128x96xf32, #tpu.memory_space<vmem>>, %arg2: memref<128x2xf32, #tpu.memory_space<vmem>>, %arg3: memref<1x32xf32, #tpu.memory_space<vmem>>, %arg4: memref<96x128xbf16, #tpu.memory_space<vmem>>, %arg5: memref<32x128xbf16, #tpu.memory_space<vmem>>, %arg6: memref<32x128xbf16, #tpu.memory_space<vmem>>, %arg7: memref<1x128xf32, #tpu.memory_space<vmem>>, %arg8: memref<128x128xf32, #tpu.memory_space<vmem>>) attributes {dimension_semantics = [#tpu.dimension_semantics<parallel>], iteration_bounds = array<i64: 1>, scalar_prefetch = 0 : i64, scratch_operands = 0 : i64, tpu.core_type = #tpu.core_type<tc>, window_params = [{transform_indices = @transform_0, window_bounds = array<i64: 128, 96>}, {transform_indices = @transform_1, window_bounds = array<i64: 128, 2>}, {pipeline_mode = #tpu.pipeline_mode<synchronous>, transform_indices = @transform_2, window_bounds = array<i64: 1, 32>}, {pipeline_mode = #tpu.pipeline_mode<synchronous>, transform_indices = @transform_3, window_bounds = array<i64: 96, 128>}, {pipeline_mode = #tpu.pipeline_mode<synchronous>, transform_indices = @transform_4, window_bounds = array<i64: 32, 128>}, {pipeline_mode = #tpu.pipeline_mode<synchronous>, transform_indices = @transform_5, window_bounds = array<i64: 32, 128>}, {pipeline_mode = #tpu.pipeline_mode<synchronous>, transform_indices = @transform_6, window_bounds = array<i64: 1, 128>}, {transform_indices = @transform_7, window_bounds = array<i64: 128, 128>}]} {
    %c0 = arith.constant 0 : index
    %c0_0 = arith.constant 0 : index
    %0 = vector.load %arg2[%c0, %c0_0] : memref<128x2xf32, #tpu.memory_space<vmem>>, vector<128x2xf32>
    %c0_1 = arith.constant 0 : index
    %c0_2 = arith.constant 0 : index
    %1 = vector.load %arg3[%c0_1, %c0_2] : memref<1x32xf32, #tpu.memory_space<vmem>>, vector<1x32xf32>
    %2 = vector.extract_strided_slice %0 {offsets = [0, 0], sizes = [128, 1], strides = [1, 1]} : vector<128x2xf32> to vector<128x1xf32>
    %3 = vector.broadcast %2 : vector<128x1xf32> to vector<128x32xf32>
    %4 = vector.broadcast %1 : vector<1x32xf32> to vector<128x32xf32>
    %5 = arith.mulf %3, %4 : vector<128x32xf32>
    %6 = math.cos %5 : vector<128x32xf32>
    %7 = vector.extract_strided_slice %0 {offsets = [0, 1], sizes = [128, 1], strides = [1, 1]} : vector<128x2xf32> to vector<128x1xf32>
    %8 = vector.broadcast %7 : vector<128x1xf32> to vector<128x32xf32>
    %9 = vector.broadcast %1 : vector<1x32xf32> to vector<128x32xf32>
    %10 = arith.mulf %8, %9 : vector<128x32xf32>
    %11 = math.cos %10 : vector<128x32xf32>
    %c0_3 = arith.constant 0 : index
    %c0_4 = arith.constant 0 : index
    %12 = vector.load %arg1[%c0_3, %c0_4] : memref<128x96xf32, #tpu.memory_space<vmem>>, vector<128x96xf32>
    %13 = arith.truncf %12 : vector<128x96xf32> to vector<128x96xbf16>
    %c0_5 = arith.constant 0 : index
    %c0_6 = arith.constant 0 : index
    %14 = vector.load %arg4[%c0_5, %c0_6] : memref<96x128xbf16, #tpu.memory_space<vmem>>, vector<96x128xbf16>
    %cst = arith.constant dense<0.000000e+00> : vector<128x128xf32>
    %15 = tpu.matmul %13, %14, %cst {dimension_numbers = #tpu.dot_dimension_numbers<[1], [0], [0], [1], [0, 0, 1, 1], [], []>} : vector<128x96xbf16>, vector<96x128xbf16>, vector<128x128xf32> -> vector<128x128xf32>
    %16 = arith.truncf %6 : vector<128x32xf32> to vector<128x32xbf16>
    %c0_7 = arith.constant 0 : index
    %c0_8 = arith.constant 0 : index
    %17 = vector.load %arg5[%c0_7, %c0_8] : memref<32x128xbf16, #tpu.memory_space<vmem>>, vector<32x128xbf16>
    %cst_9 = arith.constant dense<0.000000e+00> : vector<128x128xf32>
    %18 = tpu.matmul %16, %17, %cst_9 {dimension_numbers = #tpu.dot_dimension_numbers<[1], [0], [0], [1], [0, 0, 1, 1], [], []>} : vector<128x32xbf16>, vector<32x128xbf16>, vector<128x128xf32> -> vector<128x128xf32>
    %19 = arith.addf %15, %18 : vector<128x128xf32>
    %20 = arith.truncf %11 : vector<128x32xf32> to vector<128x32xbf16>
    %c0_10 = arith.constant 0 : index
    %c0_11 = arith.constant 0 : index
    %21 = vector.load %arg6[%c0_10, %c0_11] : memref<32x128xbf16, #tpu.memory_space<vmem>>, vector<32x128xbf16>
    %cst_12 = arith.constant dense<0.000000e+00> : vector<128x128xf32>
    %22 = tpu.matmul %20, %21, %cst_12 {dimension_numbers = #tpu.dot_dimension_numbers<[1], [0], [0], [1], [0, 0, 1, 1], [], []>} : vector<128x32xbf16>, vector<32x128xbf16>, vector<128x128xf32> -> vector<128x128xf32>
    %23 = arith.addf %19, %22 : vector<128x128xf32>
    %c0_13 = arith.constant 0 : index
    %c0_14 = arith.constant 0 : index
    %24 = vector.load %arg7[%c0_13, %c0_14] : memref<1x128xf32, #tpu.memory_space<vmem>>, vector<1x128xf32>
    %25 = vector.broadcast %24 : vector<1x128xf32> to vector<128x128xf32>
    %26 = arith.addf %23, %25 : vector<128x128xf32>
    %c0_15 = arith.constant 0 : index
    %c0_16 = arith.constant 0 : index
    %27 = vector.load %arg8[%c0_15, %c0_16] : memref<128x128xf32, #tpu.memory_space<vmem>>, vector<128x128xf32>
    tpu.vector_store %arg8[%c0_15, %c0_16], %26 {strides = array<i32>} : memref<128x128xf32, #tpu.memory_space<vmem>>, vector<128x128xf32>,
    return
  }
  func.func @transform_0(%arg0: i32) -> (i32, i32) {
    %c0_i32 = arith.constant 0 : i32
    %c0_i32_0 = arith.constant 0 : i32
    return %arg0, %c0_i32 : i32, i32
  }
  func.func @transform_1(%arg0: i32) -> (i32, i32) {
    %c0_i32 = arith.constant 0 : i32
    %c0_i32_0 = arith.constant 0 : i32
    return %arg0, %c0_i32 : i32, i32
  }
  func.func @transform_2(%arg0: i32) -> (i32, i32) {
    %c0_i32 = arith.constant 0 : i32
    %c0_i32_0 = arith.constant 0 : i32
    %c0_i32_1 = arith.constant 0 : i32
    return %c0_i32, %c0_i32_0 : i32, i32
  }
  func.func @transform_3(%arg0: i32) -> (i32, i32) {
    %c0_i32 = arith.constant 0 : i32
    %c0_i32_0 = arith.constant 0 : i32
    %c0_i32_1 = arith.constant 0 : i32
    return %c0_i32, %c0_i32_0 : i32, i32
  }
  func.func @transform_4(%arg0: i32) -> (i32, i32) {
    %c0_i32 = arith.constant 0 : i32
    %c0_i32_0 = arith.constant 0 : i32
    %c0_i32_1 = arith.constant 0 : i32
    return %c0_i32, %c0_i32_0 : i32, i32
  }
  func.func @transform_5(%arg0: i32) -> (i32, i32) {
    %c0_i32 = arith.constant 0 : i32
    %c0_i32_0 = arith.constant 0 : i32
    %c0_i32_1 = arith.constant 0 : i32
    return %c0_i32, %c0_i32_0 : i32, i32
  }
  func.func @transform_6(%arg0: i32) -> (i32, i32) {
    %c0_i32 = arith.constant 0 : i32
    %c0_i32_0 = arith.constant 0 : i32
    %c0_i32_1 = arith.constant 0 : i32
    return %c0_i32, %c0_i32_0 : i32, i32
  }
  func.func @transform_7(%arg0: i32) -> (i32, i32) {
    %c0_i32 = arith.constant 0 : i32
    %c0_i32_0 = arith.constant 0 : i32
    return %arg0, %c0_i32 : i32, i32
  }
}

</mosaic_0001>

<llo_original>
// kernel: feat_encode.1
$region0: #{feat_encode.1}
  #allocation0 [shape = 'u32[]', space=smem, size = 0x4, offset = 0x4, fixed_abs, tag = 'smem constant byte address 0x4 - core index']
  #allocation1 [shape = 'u32[144,128]{1,0:T(1,128)}', space=vmem, size = 0x12000, scoped, tag = 'internal scratch']
  %s0 = inlined_call_operand.vmem [shape: f32[128,96], index: 0, kind: input, shape index: {}]
  %s1 = inlined_call_operand.vmem [shape: f32[128,2], index: 1, kind: input, shape index: {}]
  %s2 = inlined_call_operand.vmem [shape: f32[1,32], index: 2, kind: input, shape index: {}]
  %s3 = inlined_call_operand.vmem [shape: bf16[96,128], index: 3, kind: input, shape index: {}]
  %s4 = inlined_call_operand.vmem [shape: bf16[32,128], index: 4, kind: input, shape index: {}]
  %s5 = inlined_call_operand.vmem [shape: bf16[32,128], index: 5, kind: input, shape index: {}]
  %s6 = inlined_call_operand.vmem [shape: f32[1,128], index: 6, kind: input, shape index: {}]
  %s7 = inlined_call_operand.vmem [shape: f32[128,128], index: 7, kind: output, shape index: {}]
  %s8 = sld [smem:[#allocation0]]
  $region38: #{feat_encode.1} parent=0
    _
  %s10 = ssub.s32 1, %s8
  %s11 = scalar_select 0, %s10, %s8
  // Predicated region
  $region2: #{feat_encode.1} parent=0 // pred_check
    _
  $region3: #{feat_encode.1} parent=0 // pred_check_branch
    %13 = sbr.rel (0) target = $region5
  $region4: #{feat_encode.1} parent=0 // pred_region
    _
  $region5: #{feat_encode.1} parent=0 // pred_fallthru
    _
  // Predicated region
  $region6: #{feat_encode.1} parent=0 // pred_check
    _
  $region7: #{feat_encode.1} parent=0 // pred_check_branch
    %15 = sbr.rel (0) target = $region9
  $region8: #{feat_encode.1} parent=0 // pred_region
    _
  $region9: #{feat_encode.1} parent=0 // pred_fallthru
    _
  // Predicated region
  $region10: #{feat_encode.1} parent=0 // pred_check
    _
  $region11: #{feat_encode.1} parent=0 // pred_check_branch
    %17 = sbr.rel (0) target = $region13
  $region12: #{feat_encode.1} parent=0 // pred_region
    _
  $region13: #{feat_encode.1} parent=0 // pred_fallthru
    _
  // Predicated region
  $region14: #{feat_encode.1} parent=0 // pred_check
    _
  $region15: #{feat_encode.1} parent=0 // pred_check_branch
    %19 = sbr.rel (0) target = $region17
  $region16: #{feat_encode.1} parent=0 // pred_region
    _
  $region17: #{feat_encode.1} parent=0 // pred_fallthru
    _
  // Predicated region
  $region18: #{feat_encode.1} parent=0 // pred_check
    _
  $region19: #{feat_encode.1} parent=0 // pred_check_branch
    %21 = sbr.rel (0) target = $region21
  $region20: #{feat_encode.1} parent=0 // pred_region
    _
  $region21: #{feat_encode.1} parent=0 // pred_fallthru
    _
  // Predicated region
  $region22: #{feat_encode.1} parent=0 // pred_check
    _
  $region23: #{feat_encode.1} parent=0 // pred_check_branch
    %23 = sbr.rel (0) target = $region25
  $region24: #{feat_encode.1} parent=0 // pred_region
    _
  $region25: #{feat_encode.1} parent=0 // pred_fallthru
    _
  // Predicated region
  $region26: #{feat_encode.1} parent=0 // pred_check
    _
  $region27: #{feat_encode.1} parent=0 // pred_check_branch
    %25 = sbr.rel (0) target = $region29
  $region28: #{feat_encode.1} parent=0 // pred_region
    _
  $region29: #{feat_encode.1} parent=0 // pred_fallthru
    _
  %v27 = vld [vmem:[%s1] sm:$0xff]
  %v28 = vld [vmem:[%s1 + $0x8] sm:$0xff]
  %v29 = vld [vmem:[%s1 + $0x10] sm:$0xff]
  %v30 = vld [vmem:[%s1 + $0x18] sm:$0xff]
  %v31 = vld [vmem:[%s1 + $0x20] sm:$0xff]
  %v32 = vld [vmem:[%s1 + $0x28] sm:$0xff]
  %v33 = vld [vmem:[%s1 + $0x30] sm:$0xff]
  %v34 = vld [vmem:[%s1 + $0x38] sm:$0xff]
  %v35 = vld [vmem:[%s1 + $0x40] sm:$0xff]
  %v36 = vld [vmem:[%s1 + $0x48] sm:$0xff]
  %v37 = vld [vmem:[%s1 + $0x50] sm:$0xff]
  %v38 = vld [vmem:[%s1 + $0x58] sm:$0xff]
  %v39 = vld [vmem:[%s1 + $0x60] sm:$0xff]
  %v40 = vld [vmem:[%s1 + $0x68] sm:$0xff]
  %v41 = vld [vmem:[%s1 + $0x70] sm:$0xff]
  %v42 = vld [vmem:[%s1 + $0x78] sm:$0xff]
  %v43 = vld [vmem:[%s2] sm:$0x1]
  %45 = vset.pattern.permute.xlu0 0
  %46 = vperm.xlu0 %45, %v27
  %v47 = vpop.permute.xlu0 %46
  %50 = vset.pattern.permute.xlu0 0
  %51 = vperm.xlu0 %50, %v28
  %v52 = vpop.permute.xlu0 %51
  %55 = vset.pattern.permute.xlu0 0
  %56 = vperm.xlu0 %55, %v29
  %v57 = vpop.permute.xlu0 %56
  %60 = vset.pattern.permute.xlu0 0
  %61 = vperm.xlu0 %60, %v30
  %v62 = vpop.permute.xlu0 %61
  %65 = vset.pattern.permute.xlu0 0
  %66 = vperm.xlu0 %65, %v31
  %v67 = vpop.permute.xlu0 %66
  %70 = vset.pattern.permute.xlu0 0
  %71 = vperm.xlu0 %70, %v32
  %v72 = vpop.permute.xlu0 %71
  %75 = vset.pattern.permute.xlu0 0
  %76 = vperm.xlu0 %75, %v33
  %v77 = vpop.permute.xlu0 %76
  %80 = vset.pattern.permute.xlu0 0
  %81 = vperm.xlu0 %80, %v34
  %v82 = vpop.permute.xlu0 %81
  %85 = vset.pattern.permute.xlu0 0
  %86 = vperm.xlu0 %85, %v35
  %v87 = vpop.permute.xlu0 %86
  %90 = vset.pattern.permute.xlu0 0
  %91 = vperm.xlu0 %90, %v36
  %v92 = vpop.permute.xlu0 %91
  %95 = vset.pattern.permute.xlu0 0
  %96 = vperm.xlu0 %95, %v37
  %v97 = vpop.permute.xlu0 %96
  %100 = vset.pattern.permute.xlu0 0
  %101 = vperm.xlu0 %100, %v38
  %v102 = vpop.permute.xlu0 %101
  %105 = vset.pattern.permute.xlu0 0
  %106 = vperm.xlu0 %105, %v39
  %v107 = vpop.permute.xlu0 %106
  %110 = vset.pattern.permute.xlu0 0
  %111 = vperm.xlu0 %110, %v40
  %v112 = vpop.permute.xlu0 %111
  %115 = vset.pattern.permute.xlu0 0
  %116 = vperm.xlu0 %115, %v41
  %v117 = vpop.permute.xlu0 %116
  %120 = vset.pattern.permute.xlu0 0
  %121 = vperm.xlu0 %120, %v42
  %v122 = vpop.permute.xlu0 %121
  %v125 = vlaneseq
  %v126 = vshrl.u32 %v125, 7
  %v127 = vsub.s32 0, %v126
  %v128 = vrot.slane %v43, %v127
  %v130 = vmul.f32 %v47, %v128
  %v131 = vmul.f32 %v52, %v128
  %v132 = vmul.f32 %v57, %v128
  %v133 = vmul.f32 %v62, %v128
  %v134 = vmul.f32 %v67, %v128
  %v135 = vmul.f32 %v72, %v128
  %v136 = vmul.f32 %v77, %v128
  %v137 = vmul.f32 %v82, %v128
  %v138 = vmul.f32 %v87, %v128
  %v139 = vmul.f32 %v92, %v128
  %v140 = vmul.f32 %v97, %v128
  %v141 = vmul.f32 %v102, %v128
  %v142 = vmul.f32 %v107, %v128
  %v143 = vmul.f32 %v112, %v128
  %v144 = vmul.f32 %v117, %v128
  %v145 = vmul.f32 %v122, %v128
  %v146 = vand.u32 2147483647, %v130
  %vm147 = vcmp.le.f32.partialorder %v146, 0.7853982
  %vm148 = vcmp.lt.s32.totalorder %v130, 0
  %v149 = vand.u32 %v130, 2139095040
  %v150 = vshrl.u32 %v149, 23
  %v151 = vsub.s32 %v150, 127
  %v152 = vand.u32 2147483647, %v130
  %v153 = vand.u32 %v152, 8388607
  %v154 = vor.u32 %v153, 8388608
  %v155 = vsub.s32 0, %v154
  %v156 = vadd.s32 %v151, 1
  %vm157 = vcmp.gt.s32.totalorder %v156, 0
  %v158 = vsel %vm157, %v156, 0
  %v159 = vshrl.u32 %v158, 5
  %v160 = vand.u32 %v158, 31
  %v161 = vsub.s32 32, %v160
  %v162 = vshrl.u32 683565275, %v161
  %v163 = vshll.u32 683565275, %v160
  %v164 = vshrl.u32 2475754826, %v161
  %v165 = vor.u32 %v163, %v164
  %v166 = vshll.u32 2475754826, %v160
  %v167 = vshrl.u32 2131351028, %v161
  %v168 = vor.u32 %v166, %v167
  %v169 = vshll.u32 2131351028, %v160
  %v170 = vshrl.u32 2102212464, %v161
  %v171 = vor.u32 %v169, %v170
  %v172 = vshll.u32 2102212464, %v160
  %v173 = vshrl.u32 920167782, %v161
  %v174 = vor.u32 %v172, %v173
  %v175 = vshll.u32 920167782, %v160
  %v176 = vshrl.u32 1326507024, %v161
  %v177 = vor.u32 %v175, %v176
  %vm178 = vcmp.lt.s32.totalorder %v159, 1
  %vm179 = vcmp.lt.s32.totalorder %v159, 2
  %vm180 = vcmp.lt.s32.totalorder %v159, 3
  %vm181 = vcmp.lt.s32.totalorder %v159, 4
  %v182 = vsel %vm178, %v162, %v165
  %v183 = vsel %vm181, %v171, 2102212464
  %v184 = vsel %vm180, %v168, %v183
  %v185 = vsel %vm179, %v182, %v184
  %v186 = vsel %vm178, %v165, %v168
  %v187 = vsel %vm181, %v174, 920167782
  %v188 = vsel %vm180, %v171, %v187
  %v189 = vsel %vm179, %v186, %v188
  %v190 = vsel %vm178, %v168, %v171
  %v191 = vsel %vm181, %v177, 1326507024
  %v192 = vsel %vm180, %v174, %v191
  %v193 = vsel %vm179, %v190, %v192
  %v194 = vshll.u32 %v154, 8
  %v195 = vmul.u32.u64.compose %v194, %v193
  %v196 = vextract.low.u32 %v195
  %v197 = vextract.high.u32 %v195
  %v198 = vmul.u32.u64.compose %v194, %v189
  %v199 = vextract.low.u32 %v198
  %v200 = vextract.high.u32 %v198
  %v201 = vmul.u32 %v194, %v185
  %v202 = vadd.s32 %v197, %v199
  %vm203 = vc.u32 %v197, %v199
  %v204 = vadd.s32 %v200, 1
  %v205 = vsel %vm203, %v204, %v200
  %v206 = vadd.s32 %v201, %v205
  %v207 = vadd.s32 %v206, 536870912
  %v208 = vshrl.u32 %v207, 30
  %v209 = vshll.u32 %v208, 30
  %v210 = vsub.s32 %v206, %v209
  %vm211 = vcmp.lt.s32.totalorder %v210, 0
  %v212 = vsub.s32 0, %v210
  %v213 = vsel %vm211, %v212, %v210
  %v214 = vclz %v213
  %v215 = vsub.s32 %v214, 2
  %vm216 = vcmp.gt.s32.totalorder 0, %v215
  %v217 = vsel %vm216, 0, %v215
  %v218 = vsub.s32 32, %v217
  %v219 = vshll.u32 %v210, %v217
  %v220 = vshrl.u32 %v202, %v218
  %v221 = vor.u32 %v219, %v220
  %v222 = vsub.s32 4294967266, %v217
  %v223 = vadd.s32 %v222, 127
  %v224 = vshll.u32 %v223, 23
  %v225 = vor.u32 4788187, %v224
  %v226 = vand.u32 2147483647, %v225
  %v228 = vcvt.s32.f32 %v221
  %v229 = vmul.f32 %v228, %v226
  %v230 = vxor.u32 %v229, 2147483648
  %v231 = vsel %vm148, %v230, %v229
  %v232 = vsub.s32 4, %v208
  %v233 = vsel %vm148, %v232, %v208
  %v234 = vsel %vm147, %v130, %v231
  %v235 = vsel %vm147, 0, %v233
  %v236 = vcosq.f32.pop %v234
  %v237 = vsinq.f32.pop %v234
  %vm238 = vweird.f32 %v130
  %v239 = vand.u32 %v235, 3
  %vm240 = vcmp.lt.s32.totalorder %v239, 2
  %vm241 = vcmp.eq.s32.totalorder %v239, 0
  %v242 = vxor.u32 %v237, 2147483648
  %v243 = vsel %vm241, %v236, %v242
  %vm244 = vcmp.eq.s32.totalorder %v239, 2
  %v245 = vxor.u32 %v236, 2147483648
  %v246 = vsel %vm244, %v245, %v237
  %v247 = vsel %vm240, %v243, %v246
  %v248 = vsel %vm238, nan, %v247
  %v249 = vand.u32 2147483647, %v131
  %vm250 = vcmp.le.f32.partialorder %v249, 0.7853982
  %vm251 = vcmp.lt.s32.totalorder %v131, 0
  %v252 = vand.u32 %v131, 2139095040
  %v253 = vshrl.u32 %v252, 23
  %v254 = vsub.s32 %v253, 127
  %v255 = vand.u32 2147483647, %v131
  %v256 = vand.u32 %v255, 8388607
  %v257 = vor.u32 %v256, 8388608
  %v258 = vsub.s32 0, %v257
  %v259 = vadd.s32 %v254, 1
  %vm260 = vcmp.gt.s32.totalorder %v259, 0
  %v261 = vsel %vm260, %v259, 0
  %v262 = vshrl.u32 %v261, 5
  %v263 = vand.u32 %v261, 31
  %v264 = vsub.s32 32, %v263
  %v265 = vshrl.u32 683565275, %v264
  %v266 = vshll.u32 683565275, %v263
  %v267 = vshrl.u32 2475754826, %v264
  %v268 = vor.u32 %v266, %v267
  %v269 = vshll.u32 2475754826, %v263
  %v270 = vshrl.u32 2131351028, %v264
  %v271 = vor.u32 %v269, %v270
  %v272 = vshll.u32 2131351028, %v263
  %v273 = vshrl.u32 2102212464, %v264
  %v274 = vor.u32 %v272, %v273
  %v275 = vshll.u32 2102212464, %v263
  %v276 = vshrl.u32 920167782, %v264
  %v277 = vor.u32 %v275, %v276
  %v278 = vshll.u32 920167782, %v263
  %v279 = vshrl.u32 1326507024, %v264
  %v280 = vor.u32 %v278, %v279
  %vm281 = vcmp.lt.s32.totalorder %v262, 1
  %vm282 = vcmp.lt.s32.totalorder %v262, 2
  %vm283 = vcmp.lt.s32.totalorder %v262, 3
  %vm284 = vcmp.lt.s32.totalorder %v262, 4
  %v285 = vsel %vm281, %v265, %v268
  %v286 = vsel %vm284, %v274, 2102212464
  %v287 = vsel %vm283, %v271, %v286
  %v288 = vsel %vm282, %v285, %v287
  %v289 = vsel %vm281, %v268, %v271
  %v290 = vsel %vm284, %v277, 920167782
  %v291 = vsel %vm283, %v274, %v290
  %v292 = vsel %vm282, %v289, %v291
  %v293 = vsel %vm281, %v271, %v274
  %v294 = vsel %vm284, %v280, 1326507024
  %v295 = vsel %vm283, %v277, %v294
  %v296 = vsel %vm282, %v293, %v295
  %v297 = vshll.u32 %v257, 8
  %v298 = vmul.u32.u64.compose %v297, %v296
  %v299 = vextract.low.u32 %v298
  %v300 = vextract.high.u32 %v298
  %v301 = vmul.u32.u64.compose %v297, %v292
  %v302 = vextract.low.u32 %v301
  %v303 = vextract.high.u32 %v301
  %v304 = vmul.u32 %v297, %v288
  %v305 = vadd.s32 %v300, %v302
  %vm306 = vc.u32 %v300, %v302
  %v307 = vadd.s32 %v303, 1
  %v308 = vsel %vm306, %v307, %v303
  %v309 = vadd.s32 %v304, %v308
  %v310 = vadd.s32 %v309, 536870912
  %v311 = vshrl.u32 %v310, 30
  %v312 = vshll.u32 %v311, 30
  %v313 = vsub.s32 %v309, %v312
  %vm314 = vcmp.lt.s32.totalorder %v313, 0
  %v315 = vsub.s32 0, %v313
  %v316 = vsel %vm314, %v315, %v313
  %v317 = vclz %v316
  %v318 = vsub.s32 %v317, 2
  %vm319 = vcmp.gt.s32.totalorder 0, %v318
  %v320 = vsel %vm319, 0, %v318
  %v321 = vsub.s32 32, %v320
  %v322 = vshll.u32 %v313, %v320
  %v323 = vshrl.u32 %v305, %v321
  %v324 = vor.u32 %v322, %v323
  %v325 = vsub.s32 4294967266, %v320
  %v326 = vadd.s32 %v325, 127
  %v327 = vshll.u32 %v326, 23
  %v328 = vor.u32 4788187, %v327
  %v329 = vand.u32 2147483647, %v328
  %v331 = vcvt.s32.f32 %v324
  %v332 = vmul.f32 %v331, %v329
  %v333 = vxor.u32 %v332, 2147483648
  %v334 = vsel %vm251, %v333, %v332
  %v335 = vsub.s32 4, %v311
  %v336 = vsel %vm251, %v335, %v311
  %v337 = vsel %vm250, %v131, %v334
  %v338 = vsel %vm250, 0, %v336
  %v339 = vcosq.f32.pop %v337
  %v340 = vsinq.f32.pop %v337
  %vm341 = vweird.f32 %v131
  %v342 = vand.u32 %v338, 3
  %vm343 = vcmp.lt.s32.totalorder %v342, 2
  %vm344 = vcmp.eq.s32.totalorder %v342, 0
  %v345 = vxor.u32 %v340, 2147483648
  %v346 = vsel %vm344, %v339, %v345
  %vm347 = vcmp.eq.s32.totalorder %v342, 2
  %v348 = vxor.u32 %v339, 2147483648
  %v349 = vsel %vm347, %v348, %v340
  %v350 = vsel %vm343, %v346, %v349
  %v351 = vsel %vm341, nan, %v350
  %v352 = vand.u32 2147483647, %v132
  %vm353 = vcmp.le.f32.partialorder %v352, 0.7853982
  %vm354 = vcmp.lt.s32.totalorder %v132, 0
  %v355 = vand.u32 %v132, 2139095040
  %v356 = vshrl.u32 %v355, 23
  %v357 = vsub.s32 %v356, 127
  %v358 = vand.u32 2147483647, %v132
  %v359 = vand.u32 %v358, 8388607
  %v360 = vor.u32 %v359, 8388608
  %v361 = vsub.s32 0, %v360
  %v362 = vadd.s32 %v357, 1
  %vm363 = vcmp.gt.s32.totalorder %v362, 0
  %v364 = vsel %vm363, %v362, 0
  %v365 = vshrl.u32 %v364, 5
  %v366 = vand.u32 %v364, 31
  %v367 = vsub.s32 32, %v366
  %v368 = vshrl.u32 683565275, %v367
  %v369 = vshll.u32 683565275, %v366
  %v370 = vshrl.u32 2475754826, %v367
  %v371 = vor.u32 %v369, %v370
  %v372 = vshll.u32 2475754826, %v366
  %v373 = vshrl.u32 2131351028, %v367
  %v374 = vor.u32 %v372, %v373
  %v375 = vshll.u32 2131351028, %v366
  %v376 = vshrl.u32 2102212464, %v367
  %v377 = vor.u32 %v375, %v376
  %v378 = vshll.u32 2102212464, %v366
  %v379 = vshrl.u32 920167782, %v367
  %v380 = vor.u32 %v378, %v379
  %v381 = vshll.u32 920167782, %v366
  %v382 = vshrl.u32 1326507024, %v367
  %v383 = vor.u32 %v381, %v382
  %vm384 = vcmp.lt.s32.totalorder %v365, 1
  %vm385 = vcmp.lt.s32.totalorder %v365, 2
  %vm386 = vcmp.lt.s32.totalorder %v365, 3
  %vm387 = vcmp.lt.s32.totalorder %v365, 4
  %v388 = vsel %vm384, %v368, %v371
  %v389 = vsel %vm387, %v377, 2102212464
  %v390 = vsel %vm386, %v374, %v389
  %v391 = vsel %vm385, %v388, %v390
  %v392 = vsel %vm384, %v371, %v374
  %v393 = vsel %vm387, %v380, 920167782
  %v394 = vsel %vm386, %v377, %v393
  %v395 = vsel %vm385, %v392, %v394
  %v396 = vsel %vm384, %v374, %v377
  %v397 = vsel %vm387, %v383, 1326507024
  %v398 = vsel %vm386, %v380, %v397
  %v399 = vsel %vm385, %v396, %v398
  %v400 = vshll.u32 %v360, 8
  %v401 = vmul.u32.u64.compose %v400, %v399
  %v402 = vextract.low.u32 %v401
  %v403 = vextract.high.u32 %v401
  %v404 = vmul.u32.u64.compose %v400, %v395
  %v405 = vextract.low.u32 %v404
  %v406 = vextract.high.u32 %v404
  %v407 = vmul.u32 %v400, %v391
  %v408 = vadd.s32 %v403, %v405
  %vm409 = vc.u32 %v403, %v405
  %v410 = vadd.s32 %v406, 1
  %v411 = vsel %vm409, %v410, %v406
  %v412 = vadd.s32 %v407, %v411
  %v413 = vadd.s32 %v412, 536870912
  %v414 = vshrl.u32 %v413, 30
  %v415 = vshll.u32 %v414, 30
  %v416 = vsub.s32 %v412, %v415
  %vm417 = vcmp.lt.s32.totalorder %v416, 0
  %v418 = vsub.s32 0, %v416
  %v419 = vsel %vm417, %v418, %v416
  %v420 = vclz %v419
  %v421 = vsub.s32 %v420, 2
  %vm422 = vcmp.gt.s32.totalorder 0, %v421
  %v423 = vsel %vm422, 0, %v421
  %v424 = vsub.s32 32, %v423
  %v425 = vshll.u32 %v416, %v423
  %v426 = vshrl.u32 %v408, %v424
  %v427 = vor.u32 %v425, %v426
  %v428 = vsub.s32 4294967266, %v423
  %v429 = vadd.s32 %v428, 127
  %v430 = vshll.u32 %v429, 23
  %v431 = vor.u32 4788187, %v430
  %v432 = vand.u32 2147483647, %v431
  %v434 = vcvt.s32.f32 %v427
  %v435 = vmul.f32 %v434, %v432
  %v436 = vxor.u32 %v435, 2147483648
  %v437 = vsel %vm354, %v436, %v435
  %v438 = vsub.s32 4, %v414
  %v439 = vsel %vm354, %v438, %v414
  %v440 = vsel %vm353, %v132, %v437
  %v441 = vsel %vm353, 0, %v439
  %v442 = vcosq.f32.pop %v440
  %v443 = vsinq.f32.pop %v440
  %vm444 = vweird.f32 %v132
  %v445 = vand.u32 %v441, 3
  %vm446 = vcmp.lt.s32.totalorder %v445, 2
  %vm447 = vcmp.eq.s32.totalorder %v445, 0
  %v448 = vxor.u32 %v443, 2147483648
  %v449 = vsel %vm447, %v442, %v448
  %vm450 = vcmp.eq.s32.totalorder %v445, 2
  %v451 = vxor.u32 %v442, 2147483648
  %v452 = vsel %vm450, %v451, %v443
  %v453 = vsel %vm446, %v449, %v452
  %v454 = vsel %vm444, nan, %v453
  %v455 = vand.u32 2147483647, %v133
  %vm456 = vcmp.le.f32.partialorder %v455, 0.7853982
  %vm457 = vcmp.lt.s32.totalorder %v133, 0
  %v458 = vand.u32 %v133, 2139095040
  %v459 = vshrl.u32 %v458, 23
  %v460 = vsub.s32 %v459, 127
  %v461 = vand.u32 2147483647, %v133
  %v462 = vand.u32 %v461, 8388607
  %v463 = vor.u32 %v462, 8388608
  %v464 = vsub.s32 0, %v463
  %v465 = vadd.s32 %v460, 1
  %vm466 = vcmp.gt.s32.totalorder %v465, 0
  %v467 = vsel %vm466, %v465, 0
  %v468 = vshrl.u32 %v467, 5
  %v469 = vand.u32 %v467, 31
  %v470 = vsub.s32 32, %v469
  %v471 = vshrl.u32 683565275, %v470
  %v472 = vshll.u32 683565275, %v469
  %v473 = vshrl.u32 2475754826, %v470
  %v474 = vor.u32 %v472, %v473
  %v475 = vshll.u32 2475754826, %v469
  %v476 = vshrl.u32 2131351028, %v470
  %v477 = vor.u32 %v475, %v476
  %v478 = vshll.u32 2131351028, %v469
  %v479 = vshrl.u32 2102212464, %v470
  %v480 = vor.u32 %v478, %v479
  %v481 = vshll.u32 2102212464, %v469
  %v482 = vshrl.u32 920167782, %v470
  %v483 = vor.u32 %v481, %v482
  %v484 = vshll.u32 920167782, %v469
  %v485 = vshrl.u32 1326507024, %v470
  %v486 = vor.u32 %v484, %v485
  %vm487 = vcmp.lt.s32.totalorder %v468, 1
  %vm488 = vcmp.lt.s32.totalorder %v468, 2
  %vm489 = vcmp.lt.s32.totalorder %v468, 3
  %vm490 = vcmp.lt.s32.totalorder %v468, 4
  %v491 = vsel %vm487, %v471, %v474
  %v492 = vsel %vm490, %v480, 2102212464
  %v493 = vsel %vm489, %v477, %v492
  %v494 = vsel %vm488, %v491, %v493
  %v495 = vsel %vm487, %v474, %v477
  %v496 = vsel %vm490, %v483, 920167782
  %v497 = vsel %vm489, %v480, %v496
  %v498 = vsel %vm488, %v495, %v497
  %v499 = vsel %vm487, %v477, %v480
  %v500 = vsel %vm490, %v486, 1326507024
  %v501 = vsel %vm489, %v483, %v500
  %v502 = vsel %vm488, %v499, %v501
  %v503 = vshll.u32 %v463, 8
  %v504 = vmul.u32.u64.compose %v503, %v502
  %v505 = vextract.low.u32 %v504
  %v506 = vextract.high.u32 %v504
  %v507 = vmul.u32.u64.compose %v503, %v498
  %v508 = vextract.low.u32 %v507
  %v509 = vextract.high.u32 %v507
  %v510 = vmul.u32 %v503, %v494
  %v511 = vadd.s32 %v506, %v508
  %vm512 = vc.u32 %v506, %v508
  %v513 = vadd.s32 %v509, 1
  %v514 = vsel %vm512, %v513, %v509
  %v515 = vadd.s32 %v510, %v514
  %v516 = vadd.s32 %v515, 536870912
  %v517 = vshrl.u32 %v516, 30
  %v518 = vshll.u32 %v517, 30
  %v519 = vsub.s32 %v515, %v518
  %vm520 = vcmp.lt.s32.totalorder %v519, 0
  %v521 = vsub.s32 0, %v519
  %v522 = vsel %vm520, %v521, %v519
  %v523 = vclz %v522
  %v524 = vsub.s32 %v523, 2
  %vm525 = vcmp.gt.s32.totalorder 0, %v524
  %v526 = vsel %vm525, 0, %v524
  %v527 = vsub.s32 32, %v526
  %v528 = vshll.u32 %v519, %v526
  %v529 = vshrl.u32 %v511, %v527
  %v530 = vor.u32 %v528, %v529
  %v531 = vsub.s32 4294967266, %v526
  %v532 = vadd.s32 %v531, 127
  %v533 = vshll.u32 %v532, 23
  %v534 = vor.u32 4788187, %v533
  %v535 = vand.u32 2147483647, %v534
  %v537 = vcvt.s32.f32 %v530
  %v538 = vmul.f32 %v537, %v535
  %v539 = vxor.u32 %v538, 2147483648
  %v540 = vsel %vm457, %v539, %v538
  %v541 = vsub.s32 4, %v517
  %v542 = vsel %vm457, %v541, %v517
  %v543 = vsel %vm456, %v133, %v540
  %v544 = vsel %vm456, 0, %v542
  %v545 = vcosq.f32.pop %v543
  %v546 = vsinq.f32.pop %v543
  %vm547 = vweird.f32 %v133
  %v548 = vand.u32 %v544, 3
  %vm549 = vcmp.lt.s32.totalorder %v548, 2
  %vm550 = vcmp.eq.s32.totalorder %v548, 0
  %v551 = vxor.u32 %v546, 2147483648
  %v552 = vsel %vm550, %v545, %v551
  %vm553 = vcmp.eq.s32.totalorder %v548, 2
  %v554 = vxor.u32 %v545, 2147483648
  %v555 = vsel %vm553, %v554, %v546
  %v556 = vsel %vm549, %v552, %v555
  %v557 = vsel %vm547, nan, %v556
  %v558 = vand.u32 2147483647, %v134
  %vm559 = vcmp.le.f32.partialorder %v558, 0.7853982
  %vm560 = vcmp.lt.s32.totalorder %v134, 0
  %v561 = vand.u32 %v134, 2139095040
  %v562 = vshrl.u32 %v561, 23
  %v563 = vsub.s32 %v562, 127
  %v564 = vand.u32 2147483647, %v134
  %v565 = vand.u32 %v564, 8388607
  %v566 = vor.u32 %v565, 8388608
  %v567 = vsub.s32 0, %v566
  %v568 = vadd.s32 %v563, 1
  %vm569 = vcmp.gt.s32.totalorder %v568, 0
  %v570 = vsel %vm569, %v568, 0
  %v571 = vshrl.u32 %v570, 5
  %v572 = vand.u32 %v570, 31
  %v573 = vsub.s32 32, %v572
  %v574 = vshrl.u32 683565275, %v573
  %v575 = vshll.u32 683565275, %v572
  %v576 = vshrl.u32 2475754826, %v573
  %v577 = vor.u32 %v575, %v576
  %v578 = vshll.u32 2475754826, %v572
  %v579 = vshrl.u32 2131351028, %v573
  %v580 = vor.u32 %v578, %v579
  %v581 = vshll.u32 2131351028, %v572
  %v582 = vshrl.u32 2102212464, %v573
  %v583 = vor.u32 %v581, %v582
  %v584 = vshll.u32 2102212464, %v572
  %v585 = vshrl.u32 920167782, %v573
  %v586 = vor.u32 %v584, %v585
  %v587 = vshll.u32 920167782, %v572
  %v588 = vshrl.u32 1326507024, %v573
  %v589 = vor.u32 %v587, %v588
  %vm590 = vcmp.lt.s32.totalorder %v571, 1
  %vm591 = vcmp.lt.s32.totalorder %v571, 2
  %vm592 = vcmp.lt.s32.totalorder %v571, 3
  %vm593 = vcmp.lt.s32.totalorder %v571, 4
  %v594 = vsel %vm590, %v574, %v577
  %v595 = vsel %vm593, %v583, 2102212464
  %v596 = vsel %vm592, %v580, %v595
  %v597 = vsel %vm591, %v594, %v596
  %v598 = vsel %vm590, %v577, %v580
  %v599 = vsel %vm593, %v586, 920167782
  %v600 = vsel %vm592, %v583, %v599
  %v601 = vsel %vm591, %v598, %v600
  %v602 = vsel %vm590, %v580, %v583
  %v603 = vsel %vm593, %v589, 1326507024
  %v604 = vsel %vm592, %v586, %v603
  %v605 = vsel %vm591, %v602, %v604
  %v606 = vshll.u32 %v566, 8
  %v607 = vmul.u32.u64.compose %v606, %v605
  %v608 = vextract.low.u32 %v607
  %v609 = vextract.high.u32 %v607
  %v610 = vmul.u32.u64.compose %v606, %v601
  %v611 = vextract.low.u32 %v610
  %v612 = vextract.high.u32 %v610
  %v613 = vmul.u32 %v606, %v597
  %v614 = vadd.s32 %v609, %v611
  %vm615 = vc.u32 %v609, %v611
  %v616 = vadd.s32 %v612, 1
  %v617 = vsel %vm615, %v616, %v612
  %v618 = vadd.s32 %v613, %v617
  %v619 = vadd.s32 %v618, 536870912
  %v620 = vshrl.u32 %v619, 30
  %v621 = vshll.u32 %v620, 30
  %v622 = vsub.s32 %v618, %v621
  %vm623 = vcmp.lt.s32.totalorder %v622, 0
  %v624 = vsub.s32 0, %v622
  %v625 = vsel %vm623, %v624, %v622
  %v626 = vclz %v625
  %v627 = vsub.s32 %v626, 2
  %vm628 = vcmp.gt.s32.totalorder 0, %v627
  %v629 = vsel %vm628, 0, %v627
  %v630 = vsub.s32 32, %v629
  %v631 = vshll.u32 %v622, %v629
  %v632 = vshrl.u32 %v614, %v630
  %v633 = vor.u32 %v631, %v632
  %v634 = vsub.s32 4294967266, %v629
  %v635 = vadd.s32 %v634, 127
  %v636 = vshll.u32 %v635, 23
  %v637 = vor.u32 4788187, %v636
  %v638 = vand.u32 2147483647, %v637
  %v640 = vcvt.s32.f32 %v633
  %v641 = vmul.f32 %v640, %v638
  %v642 = vxor.u32 %v641, 2147483648
  %v643 = vsel %vm560, %v642, %v641
  %v644 = vsub.s32 4, %v620
  %v645 = vsel %vm560, %v644, %v620
  %v646 = vsel %vm559, %v134, %v643
  %v647 = vsel %vm559, 0, %v645
  %v648 = vcosq.f32.pop %v646
  %v649 = vsinq.f32.pop %v646
  %vm650 = vweird.f32 %v134
  %v651 = vand.u32 %v647, 3
  %vm652 = vcmp.lt.s32.totalorder %v651, 2
  %vm653 = vcmp.eq.s32.totalorder %v651, 0
  %v654 = vxor.u32 %v649, 2147483648
  %v655 = vsel %vm653, %v648, %v654
  %vm656 = vcmp.eq.s32.totalorder %v651, 2
  %v657 = vxor.u32 %v648, 2147483648
  %v658 = vsel %vm656, %v657, %v649
  %v659 = vsel %vm652, %v655, %v658
  %v660 = vsel %vm650, nan, %v659
  %v661 = vand.u32 2147483647, %v135
  %vm662 = vcmp.le.f32.partialorder %v661, 0.7853982
  %vm663 = vcmp.lt.s32.totalorder %v135, 0
  %v664 = vand.u32 %v135, 2139095040
  %v665 = vshrl.u32 %v664, 23
  %v666 = vsub.s32 %v665, 127
  %v667 = vand.u32 2147483647, %v135
  %v668 = vand.u32 %v667, 8388607
  %v669 = vor.u32 %v668, 8388608
  %v670 = vsub.s32 0, %v669
  %v671 = vadd.s32 %v666, 1
  %vm672 = vcmp.gt.s32.totalorder %v671, 0
  %v673 = vsel %vm672, %v671, 0
  %v674 = vshrl.u32 %v673, 5
  %v675 = vand.u32 %v673, 31
  %v676 = vsub.s32 32, %v675
  %v677 = vshrl.u32 683565275, %v676
  %v678 = vshll.u32 683565275, %v675
  %v679 = vshrl.u32 2475754826, %v676
  %v680 = vor.u32 %v678, %v679
  %v681 = vshll.u32 2475754826, %v675
  %v682 = vshrl.u32 2131351028, %v676
  %v683 = vor.u32 %v681, %v682
  %v684 = vshll.u32 2131351028, %v675
  %v685 = vshrl.u32 2102212464, %v676
  %v686 = vor.u32 %v684, %v685
  %v687 = vshll.u32 2102212464, %v675
  %v688 = vshrl.u32 920167782, %v676
  %v689 = vor.u32 %v687, %v688
  %v690 = vshll.u32 920167782, %v675
  %v691 = vshrl.u32 1326507024, %v676
  %v692 = vor.u32 %v690, %v691
  %vm693 = vcmp.lt.s32.totalorder %v674, 1
  %vm694 = vcmp.lt.s32.totalorder %v674, 2
  %vm695 = vcmp.lt.s32.totalorder %v674, 3
  %vm696 = vcmp.lt.s32.totalorder %v674, 4
  %v697 = vsel %vm693, %v677, %v680
  %v698 = vsel %vm696, %v686, 2102212464
  %v699 = vsel %vm695, %v683, %v698
  %v700 = vsel %vm694, %v697, %v699
  %v701 = vsel %vm693, %v680, %v683
  %v702 = vsel %vm696, %v689, 920167782
  %v703 = vsel %vm695, %v686, %v702
  %v704 = vsel %vm694, %v701, %v703
  %v705 = vsel %vm693, %v683, %v686
  %v706 = vsel %vm696, %v692, 1326507024
  %v707 = vsel %vm695, %v689, %v706
  %v708 = vsel %vm694, %v705, %v707
  %v709 = vshll.u32 %v669, 8
  %v710 = vmul.u32.u64.compose %v709, %v708
  %v711 = vextract.low.u32 %v710
  %v712 = vextract.high.u32 %v710
  %v713 = vmul.u32.u64.compose %v709, %v704
  %v714 = vextract.low.u32 %v713
  %v715 = vextract.high.u32 %v713
  %v716 = vmul.u32 %v709, %v700
  %v717 = vadd.s32 %v712, %v714
  %vm718 = vc.u32 %v712, %v714
  %v719 = vadd.s32 %v715, 1
  %v720 = vsel %vm718, %v719, %v715
  %v721 = vadd.s32 %v716, %v720
  %v722 = vadd.s32 %v721, 536870912
  %v723 = vshrl.u32 %v722, 30
  %v724 = vshll.u32 %v723, 30
  %v725 = vsub.s32 %v721, %v724
  %vm726 = vcmp.lt.s32.totalorder %v725, 0
  %v727 = vsub.s32 0, %v725
  %v728 = vsel %vm726, %v727, %v725
  %v729 = vclz %v728
  %v730 = vsub.s32 %v729, 2
  %vm731 = vcmp.gt.s32.totalorder 0, %v730
  %v732 = vsel %vm731, 0, %v730
  %v733 = vsub.s32 32, %v732
  %v734 = vshll.u32 %v725, %v732
  %v735 = vshrl.u32 %v717, %v733
  %v736 = vor.u32 %v734, %v735
  %v737 = vsub.s32 4294967266, %v732
  %v738 = vadd.s32 %v737, 127
  %v739 = vshll.u32 %v738, 23
  %v740 = vor.u32 4788187, %v739
  %v741 = vand.u32 2147483647, %v740
  %v743 = vcvt.s32.f32 %v736
  %v744 = vmul.f32 %v743, %v741
  %v745 = vxor.u32 %v744, 2147483648
  %v746 = vsel %vm663, %v745, %v744
  %v747 = vsub.s32 4, %v723
  %v748 = vsel %vm663, %v747, %v723
  %v749 = vsel %vm662, %v135, %v746
  %v750 = vsel %vm662, 0, %v748
  %v751 = vcosq.f32.pop %v749
  %v752 = vsinq.f32.pop %v749
  %vm753 = vweird.f32 %v135
  %v754 = vand.u32 %v750, 3
  %vm755 = vcmp.lt.s32.totalorder %v754, 2
  %vm756 = vcmp.eq.s32.totalorder %v754, 0
  %v757 = vxor.u32 %v752, 2147483648
  %v758 = vsel %vm756, %v751, %v757
  %vm759 = vcmp.eq.s32.totalorder %v754, 2
  %v760 = vxor.u32 %v751, 2147483648
  %v761 = vsel %vm759, %v760, %v752
  %v762 = vsel %vm755, %v758, %v761
  %v763 = vsel %vm753, nan, %v762
  %v764 = vand.u32 2147483647, %v136
  %vm765 = vcmp.le.f32.partialorder %v764, 0.7853982
  %vm766 = vcmp.lt.s32.totalorder %v136, 0
  %v767 = vand.u32 %v136, 2139095040
  %v768 = vshrl.u32 %v767, 23
  %v769 = vsub.s32 %v768, 127
  %v770 = vand.u32 2147483647, %v136
  %v771 = vand.u32 %v770, 8388607
  %v772 = vor.u32 %v771, 8388608
  %v773 = vsub.s32 0, %v772
  %v774 = vadd.s32 %v769, 1
  %vm775 = vcmp.gt.s32.totalorder %v774, 0
  %v776 = vsel %vm775, %v774, 0
  %v777 = vshrl.u32 %v776, 5
  %v778 = vand.u32 %v776, 31
  %v779 = vsub.s32 32, %v778
  %v780 = vshrl.u32 683565275, %v779
  %v781 = vshll.u32 683565275, %v778
  %v782 = vshrl.u32 2475754826, %v779
  %v783 = vor.u32 %v781, %v782
  %v784 = vshll.u32 2475754826, %v778
  %v785 = vshrl.u32 2131351028, %v779
  %v786 = vor.u32 %v784, %v785
  %v787 = vshll.u32 2131351028, %v778
  %v788 = vshrl.u32 2102212464, %v779
  %v789 = vor.u32 %v787, %v788
  %v790 = vshll.u32 2102212464, %v778
  %v791 = vshrl.u32 920167782, %v779
  %v792 = vor.u32 %v790, %v791
  %v793 = vshll.u32 920167782, %v778
  %v794 = vshrl.u32 1326507024, %v779
  %v795 = vor.u32 %v793, %v794
  %vm796 = vcmp.lt.s32.totalorder %v777, 1
  %vm797 = vcmp.lt.s32.totalorder %v777, 2
  %vm798 = vcmp.lt.s32.totalorder %v777, 3
  %vm799 = vcmp.lt.s32.totalorder %v777, 4
  %v800 = vsel %vm796, %v780, %v783
  %v801 = vsel %vm799, %v789, 2102212464
  %v802 = vsel %vm798, %v786, %v801
  %v803 = vsel %vm797, %v800, %v802
  %v804 = vsel %vm796, %v783, %v786
  %v805 = vsel %vm799, %v792, 920167782
  %v806 = vsel %vm798, %v789, %v805
  %v807 = vsel %vm797, %v804, %v806
  %v808 = vsel %vm796, %v786, %v789
  %v809 = vsel %vm799, %v795, 1326507024
  %v810 = vsel %vm798, %v792, %v809
  %v811 = vsel %vm797, %v808, %v810
  %v812 = vshll.u32 %v772, 8
  %v813 = vmul.u32.u64.compose %v812, %v811
  %v814 = vextract.low.u32 %v813
  %v815 = vextract.high.u32 %v813
  %v816 = vmul.u32.u64.compose %v812, %v807
  %v817 = vextract.low.u32 %v816
  %v818 = vextract.high.u32 %v816
  %v819 = vmul.u32 %v812, %v803
  %v820 = vadd.s32 %v815, %v817
  %vm821 = vc.u32 %v815, %v817
  %v822 = vadd.s32 %v818, 1
  %v823 = vsel %vm821, %v822, %v818
  %v824 = vadd.s32 %v819, %v823
  %v825 = vadd.s32 %v824, 536870912
  %v826 = vshrl.u32 %v825, 30
  %v827 = vshll.u32 %v826, 30
  %v828 = vsub.s32 %v824, %v827
  %vm829 = vcmp.lt.s32.totalorder %v828, 0
  %v830 = vsub.s32 0, %v828
  %v831 = vsel %vm829, %v830, %v828
  %v832 = vclz %v831
  %v833 = vsub.s32 %v832, 2
  %vm834 = vcmp.gt.s32.totalorder 0, %v833
  %v835 = vsel %vm834, 0, %v833
  %v836 = vsub.s32 32, %v835
  %v837 = vshll.u32 %v828, %v835
  %v838 = vshrl.u32 %v820, %v836
  %v839 = vor.u32 %v837, %v838
  %v840 = vsub.s32 4294967266, %v835
  %v841 = vadd.s32 %v840, 127
  %v842 = vshll.u32 %v841, 23
  %v843 = vor.u32 4788187, %v842
  %v844 = vand.u32 2147483647, %v843
  %v846 = vcvt.s32.f32 %v839
  %v847 = vmul.f32 %v846, %v844
  %v848 = vxor.u32 %v847, 2147483648
  %v849 = vsel %vm766, %v848, %v847
  %v850 = vsub.s32 4, %v826
  %v851 = vsel %vm766, %v850, %v826
  %v852 = vsel %vm765, %v136, %v849
  %v853 = vsel %vm765, 0, %v851
  %v854 = vcosq.f32.pop %v852
  %v855 = vsinq.f32.pop %v852
  %vm856 = vweird.f32 %v136
  %v857 = vand.u32 %v853, 3
  %vm858 = vcmp.lt.s32.totalorder %v857, 2
  %vm859 = vcmp.eq.s32.totalorder %v857, 0
  %v860 = vxor.u32 %v855, 2147483648
  %v861 = vsel %vm859, %v854, %v860
  %vm862 = vcmp.eq.s32.totalorder %v857, 2
  %v863 = vxor.u32 %v854, 2147483648
  %v864 = vsel %vm862, %v863, %v855
  %v865 = vsel %vm858, %v861, %v864
  %v866 = vsel %vm856, nan, %v865
  %v867 = vand.u32 2147483647, %v137
  %vm868 = vcmp.le.f32.partialorder %v867, 0.7853982
  %vm869 = vcmp.lt.s32.totalorder %v137, 0
  %v870 = vand.u32 %v137, 2139095040
  %v871 = vshrl.u32 %v870, 23
  %v872 = vsub.s32 %v871, 127
  %v873 = vand.u32 2147483647, %v137
  %v874 = vand.u32 %v873, 8388607
  %v875 = vor.u32 %v874, 8388608
  %v876 = vsub.s32 0, %v875
  %v877 = vadd.s32 %v872, 1
  %vm878 = vcmp.gt.s32.totalorder %v877, 0
  %v879 = vsel %vm878, %v877, 0
  %v880 = vshrl.u32 %v879, 5
  %v881 = vand.u32 %v879, 31
  %v882 = vsub.s32 32, %v881
  %v883 = vshrl.u32 683565275, %v882
  %v884 = vshll.u32 683565275, %v881
  %v885 = vshrl.u32 2475754826, %v882
  %v886 = vor.u32 %v884, %v885
  %v887 = vshll.u32 2475754826, %v881
  %v888 = vshrl.u32 2131351028, %v882
  %v889 = vor.u32 %v887, %v888
  %v890 = vshll.u32 2131351028, %v881
  %v891 = vshrl.u32 2102212464, %v882
  %v892 = vor.u32 %v890, %v891
  %v893 = vshll.u32 2102212464, %v881
  %v894 = vshrl.u32 920167782, %v882
  %v895 = vor.u32 %v893, %v894
  %v896 = vshll.u32 920167782, %v881
  %v897 = vshrl.u32 1326507024, %v882
  %v898 = vor.u32 %v896, %v897
  %vm899 = vcmp.lt.s32.totalorder %v880, 1
  %vm900 = vcmp.lt.s32.totalorder %v880, 2
  %vm901 = vcmp.lt.s32.totalorder %v880, 3
  %vm902 = vcmp.lt.s32.totalorder %v880, 4
  %v903 = vsel %vm899, %v883, %v886
  %v904 = vsel %vm902, %v892, 2102212464
  %v905 = vsel %vm901, %v889, %v904
  %v906 = vsel %vm900, %v903, %v905
  %v907 = vsel %vm899, %v886, %v889
  %v908 = vsel %vm902, %v895, 920167782
  %v909 = vsel %vm901, %v892, %v908
  %v910 = vsel %vm900, %v907, %v909
  %v911 = vsel %vm899, %v889, %v892
  %v912 = vsel %vm902, %v898, 1326507024
  %v913 = vsel %vm901, %v895, %v912
  %v914 = vsel %vm900, %v911, %v913
  %v915 = vshll.u32 %v875, 8
  %v916 = vmul.u32.u64.compose %v915, %v914
  %v917 = vextract.low.u32 %v916
  %v918 = vextract.high.u32 %v916
  %v919 = vmul.u32.u64.compose %v915, %v910
  %v920 = vextract.low.u32 %v919
  %v921 = vextract.high.u32 %v919
  %v922 = vmul.u32 %v915, %v906
  %v923 = vadd.s32 %v918, %v920
  %vm924 = vc.u32 %v918, %v920
  %v925 = vadd.s32 %v921, 1
  %v926 = vsel %vm924, %v925, %v921
  %v927 = vadd.s32 %v922, %v926
  %v928 = vadd.s32 %v927, 536870912
  %v929 = vshrl.u32 %v928, 30
  %v930 = vshll.u32 %v929, 30
  %v931 = vsub.s32 %v927, %v930
  %vm932 = vcmp.lt.s32.totalorder %v931, 0
  %v933 = vsub.s32 0, %v931
  %v934 = vsel %vm932, %v933, %v931
  %v935 = vclz %v934
  %v936 = vsub.s32 %v935, 2
  %vm937 = vcmp.gt.s32.totalorder 0, %v936
  %v938 = vsel %vm937, 0, %v936
  %v939 = vsub.s32 32, %v938
  %v940 = vshll.u32 %v931, %v938
  %v941 = vshrl.u32 %v923, %v939
  %v942 = vor.u32 %v940, %v941
  %v943 = vsub.s32 4294967266, %v938
  %v944 = vadd.s32 %v943, 127
  %v945 = vshll.u32 %v944, 23
  %v946 = vor.u32 4788187, %v945
  %v947 = vand.u32 2147483647, %v946
  %v949 = vcvt.s32.f32 %v942
  %v950 = vmul.f32 %v949, %v947
  %v951 = vxor.u32 %v950, 2147483648
  %v952 = vsel %vm869, %v951, %v950
  %v953 = vsub.s32 4, %v929
  %v954 = vsel %vm869, %v953, %v929
  %v955 = vsel %vm868, %v137, %v952
  %v956 = vsel %vm868, 0, %v954
  %v957 = vcosq.f32.pop %v955
  %v958 = vsinq.f32.pop %v955
  %vm959 = vweird.f32 %v137
  %v960 = vand.u32 %v956, 3
  %vm961 = vcmp.lt.s32.totalorder %v960, 2
  %vm962 = vcmp.eq.s32.totalorder %v960, 0
  %v963 = vxor.u32 %v958, 2147483648
  %v964 = vsel %vm962, %v957, %v963
  %vm965 = vcmp.eq.s32.totalorder %v960, 2
  %v966 = vxor.u32 %v957, 2147483648
  %v967 = vsel %vm965, %v966, %v958
  %v968 = vsel %vm961, %v964, %v967
  %v969 = vsel %vm959, nan, %v968
  %v970 = vand.u32 2147483647, %v138
  %vm971 = vcmp.le.f32.partialorder %v970, 0.7853982
  %vm972 = vcmp.lt.s32.totalorder %v138, 0
  %v973 = vand.u32 %v138, 2139095040
  %v974 = vshrl.u32 %v973, 23
  %v975 = vsub.s32 %v974, 127
  %v976 = vand.u32 2147483647, %v138
  %v977 = vand.u32 %v976, 8388607
  %v978 = vor.u32 %v977, 8388608
  %v979 = vsub.s32 0, %v978
  %v980 = vadd.s32 %v975, 1
  %vm981 = vcmp.gt.s32.totalorder %v980, 0
  %v982 = vsel %vm981, %v980, 0
  %v983 = vshrl.u32 %v982, 5
  %v984 = vand.u32 %v982, 31
  %v985 = vsub.s32 32, %v984
  %v986 = vshrl.u32 683565275, %v985
  %v987 = vshll.u32 683565275, %v984
  %v988 = vshrl.u32 2475754826, %v985
  %v989 = vor.u32 %v987, %v988
  %v990 = vshll.u32 2475754826, %v984
  %v991 = vshrl.u32 2131351028, %v985
  %v992 = vor.u32 %v990, %v991
  %v993 = vshll.u32 2131351028, %v984
  %v994 = vshrl.u32 2102212464, %v985
  %v995 = vor.u32 %v993, %v994
  %v996 = vshll.u32 2102212464, %v984
  %v997 = vshrl.u32 920167782, %v985
  %v998 = vor.u32 %v996, %v997
  %v999 = vshll.u32 920167782, %v984
  %v1000 = vshrl.u32 1326507024, %v985
  %v1001 = vor.u32 %v999, %v1000
  %vm1002 = vcmp.lt.s32.totalorder %v983, 1
  %vm1003 = vcmp.lt.s32.totalorder %v983, 2
  %vm1004 = vcmp.lt.s32.totalorder %v983, 3
  %vm1005 = vcmp.lt.s32.totalorder %v983, 4
  %v1006 = vsel %vm1002, %v986, %v989
  %v1007 = vsel %vm1005, %v995, 2102212464
  %v1008 = vsel %vm1004, %v992, %v1007
  %v1009 = vsel %vm1003, %v1006, %v1008
  %v1010 = vsel %vm1002, %v989, %v992
  %v1011 = vsel %vm1005, %v998, 920167782
  %v1012 = vsel %vm1004, %v995, %v1011
  %v1013 = vsel %vm1003, %v1010, %v1012
  %v1014 = vsel %vm1002, %v992, %v995
  %v1015 = vsel %vm1005, %v1001, 1326507024
  %v1016 = vsel %vm1004, %v998, %v1015
  %v1017 = vsel %vm1003, %v1014, %v1016
  %v1018 = vshll.u32 %v978, 8
  %v1019 = vmul.u32.u64.compose %v1018, %v1017
  %v1020 = vextract.low.u32 %v1019
  %v1021 = vextract.high.u32 %v1019
  %v1022 = vmul.u32.u64.compose %v1018, %v1013
  %v1023 = vextract.low.u32 %v1022
  %v1024 = vextract.high.u32 %v1022
  %v1025 = vmul.u32 %v1018, %v1009
  %v1026 = vadd.s32 %v1021, %v1023
  %vm1027 = vc.u32 %v1021, %v1023
  %v1028 = vadd.s32 %v1024, 1
  %v1029 = vsel %vm1027, %v1028, %v1024
  %v1030 = vadd.s32 %v1025, %v1029
  %v1031 = vadd.s32 %v1030, 536870912
  %v1032 = vshrl.u32 %v1031, 30
  %v1033 = vshll.u32 %v1032, 30
  %v1034 = vsub.s32 %v1030, %v1033
  %vm1035 = vcmp.lt.s32.totalorder %v1034, 0
  %v1036 = vsub.s32 0, %v1034
  %v1037 = vsel %vm1035, %v1036, %v1034
  %v1038 = vclz %v1037
  %v1039 = vsub.s32 %v1038, 2
  %vm1040 = vcmp.gt.s32.totalorder 0, %v1039
  %v1041 = vsel %vm1040, 0, %v1039
  %v1042 = vsub.s32 32, %v1041
  %v1043 = vshll.u32 %v1034, %v1041
  %v1044 = vshrl.u32 %v1026, %v1042
  %v1045 = vor.u32 %v1043, %v1044
  %v1046 = vsub.s32 4294967266, %v1041
  %v1047 = vadd.s32 %v1046, 127
  %v1048 = vshll.u32 %v1047, 23
  %v1049 = vor.u32 4788187, %v1048
  %v1050 = vand.u32 2147483647, %v1049
  %v1052 = vcvt.s32.f32 %v1045
  %v1053 = vmul.f32 %v1052, %v1050
  %v1054 = vxor.u32 %v1053, 2147483648
  %v1055 = vsel %vm972, %v1054, %v1053
  %v1056 = vsub.s32 4, %v1032
  %v1057 = vsel %vm972, %v1056, %v1032
  %v1058 = vsel %vm971, %v138, %v1055
  %v1059 = vsel %vm971, 0, %v1057
  %v1060 = vcosq.f32.pop %v1058
  %v1061 = vsinq.f32.pop %v1058
  %vm1062 = vweird.f32 %v138
  %v1063 = vand.u32 %v1059, 3
  %vm1064 = vcmp.lt.s32.totalorder %v1063, 2
  %vm1065 = vcmp.eq.s32.totalorder %v1063, 0
  %v1066 = vxor.u32 %v1061, 2147483648
  %v1067 = vsel %vm1065, %v1060, %v1066
  %vm1068 = vcmp.eq.s32.totalorder %v1063, 2
  %v1069 = vxor.u32 %v1060, 2147483648
  %v1070 = vsel %vm1068, %v1069, %v1061
  %v1071 = vsel %vm1064, %v1067, %v1070
  %v1072 = vsel %vm1062, nan, %v1071
  %v1073 = vand.u32 2147483647, %v139
  %vm1074 = vcmp.le.f32.partialorder %v1073, 0.7853982
  %vm1075 = vcmp.lt.s32.totalorder %v139, 0
  %v1076 = vand.u32 %v139, 2139095040
  %v1077 = vshrl.u32 %v1076, 23
  %v1078 = vsub.s32 %v1077, 127
  %v1079 = vand.u32 2147483647, %v139
  %v1080 = vand.u32 %v1079, 8388607
  %v1081 = vor.u32 %v1080, 8388608
  %v1082 = vsub.s32 0, %v1081
  %v1083 = vadd.s32 %v1078, 1
  %vm1084 = vcmp.gt.s32.totalorder %v1083, 0
  %v1085 = vsel %vm1084, %v1083, 0
  %v1086 = vshrl.u32 %v1085, 5
  %v1087 = vand.u32 %v1085, 31
  %v1088 = vsub.s32 32, %v1087
  %v1089 = vshrl.u32 683565275, %v1088
  %v1090 = vshll.u32 683565275, %v1087
  %v1091 = vshrl.u32 2475754826, %v1088
  %v1092 = vor.u32 %v1090, %v1091
  %v1093 = vshll.u32 2475754826, %v1087
  %v1094 = vshrl.u32 2131351028, %v1088
  %v1095 = vor.u32 %v1093, %v1094
  %v1096 = vshll.u32 2131351028, %v1087
  %v1097 = vshrl.u32 2102212464, %v1088
  %v1098 = vor.u32 %v1096, %v1097
  %v1099 = vshll.u32 2102212464, %v1087
  %v1100 = vshrl.u32 920167782, %v1088
  %v1101 = vor.u32 %v1099, %v1100
  %v1102 = vshll.u32 920167782, %v1087
  %v1103 = vshrl.u32 1326507024, %v1088
  %v1104 = vor.u32 %v1102, %v1103
  %vm1105 = vcmp.lt.s32.totalorder %v1086, 1
  %vm1106 = vcmp.lt.s32.totalorder %v1086, 2
  %vm1107 = vcmp.lt.s32.totalorder %v1086, 3
  %vm1108 = vcmp.lt.s32.totalorder %v1086, 4
  %v1109 = vsel %vm1105, %v1089, %v1092
  %v1110 = vsel %vm1108, %v1098, 2102212464
  %v1111 = vsel %vm1107, %v1095, %v1110
  %v1112 = vsel %vm1106, %v1109, %v1111
  %v1113 = vsel %vm1105, %v1092, %v1095
  %v1114 = vsel %vm1108, %v1101, 920167782
  %v1115 = vsel %vm1107, %v1098, %v1114
  %v1116 = vsel %vm1106, %v1113, %v1115
  %v1117 = vsel %vm1105, %v1095, %v1098
  %v1118 = vsel %vm1108, %v1104, 1326507024
  %v1119 = vsel %vm1107, %v1101, %v1118
  %v1120 = vsel %vm1106, %v1117, %v1119
  %v1121 = vshll.u32 %v1081, 8
  %v1122 = vmul.u32.u64.compose %v1121, %v1120
  %v1123 = vextract.low.u32 %v1122
  %v1124 = vextract.high.u32 %v1122
  %v1125 = vmul.u32.u64.compose %v1121, %v1116
  %v1126 = vextract.low.u32 %v1125
  %v1127 = vextract.high.u32 %v1125
  %v1128 = vmul.u32 %v1121, %v1112
  %v1129 = vadd.s32 %v1124, %v1126
  %vm1130 = vc.u32 %v1124, %v1126
  %v1131 = vadd.s32 %v1127, 1
  %v1132 = vsel %vm1130, %v1131, %v1127
  %v1133 = vadd.s32 %v1128, %v1132
  %v1134 = vadd.s32 %v1133, 536870912
  %v1135 = vshrl.u32 %v1134, 30
  %v1136 = vshll.u32 %v1135, 30
  %v1137 = vsub.s32 %v1133, %v1136
  %vm1138 = vcmp.lt.s32.totalorder %v1137, 0
  %v1139 = vsub.s32 0, %v1137
  %v1140 = vsel %vm1138, %v1139, %v1137
  %v1141 = vclz %v1140
  %v1142 = vsub.s32 %v1141, 2
  %vm1143 = vcmp.gt.s32.totalorder 0, %v1142
  %v1144 = vsel %vm1143, 0, %v1142
  %v1145 = vsub.s32 32, %v1144
  %v1146 = vshll.u32 %v1137, %v1144
  %v1147 = vshrl.u32 %v1129, %v1145
  %v1148 = vor.u32 %v1146, %v1147
  %v1149 = vsub.s32 4294967266, %v1144
  %v1150 = vadd.s32 %v1149, 127
  %v1151 = vshll.u32 %v1150, 23
  %v1152 = vor.u32 4788187, %v1151
  %v1153 = vand.u32 2147483647, %v1152
  %v1155 = vcvt.s32.f32 %v1148
  %v1156 = vmul.f32 %v1155, %v1153
  %v1157 = vxor.u32 %v1156, 2147483648
  %v1158 = vsel %vm1075, %v1157, %v1156
  %v1159 = vsub.s32 4, %v1135
  %v1160 = vsel %vm1075, %v1159, %v1135
  %v1161 = vsel %vm1074, %v139, %v1158
  %v1162 = vsel %vm1074, 0, %v1160
  %v1163 = vcosq.f32.pop %v1161
  %v1164 = vsinq.f32.pop %v1161
  %vm1165 = vweird.f32 %v139
  %v1166 = vand.u32 %v1162, 3
  %vm1167 = vcmp.lt.s32.totalorder %v1166, 2
  %vm1168 = vcmp.eq.s32.totalorder %v1166, 0
  %v1169 = vxor.u32 %v1164, 2147483648
  %v1170 = vsel %vm1168, %v1163, %v1169
  %vm1171 = vcmp.eq.s32.totalorder %v1166, 2
  %v1172 = vxor.u32 %v1163, 2147483648
  %v1173 = vsel %vm1171, %v1172, %v1164
  %v1174 = vsel %vm1167, %v1170, %v1173
  %v1175 = vsel %vm1165, nan, %v1174
  %v1176 = vand.u32 2147483647, %v140
  %vm1177 = vcmp.le.f32.partialorder %v1176, 0.7853982
  %vm1178 = vcmp.lt.s32.totalorder %v140, 0
  %v1179 = vand.u32 %v140, 2139095040
  %v1180 = vshrl.u32 %v1179, 23
  %v1181 = vsub.s32 %v1180, 127
  %v1182 = vand.u32 2147483647, %v140
  %v1183 = vand.u32 %v1182, 8388607
  %v1184 = vor.u32 %v1183, 8388608
  %v1185 = vsub.s32 0, %v1184
  %v1186 = vadd.s32 %v1181, 1
  %vm1187 = vcmp.gt.s32.totalorder %v1186, 0
  %v1188 = vsel %vm1187, %v1186, 0
  %v1189 = vshrl.u32 %v1188, 5
  %v1190 = vand.u32 %v1188, 31
  %v1191 = vsub.s32 32, %v1190
  %v1192 = vshrl.u32 683565275, %v1191
  %v1193 = vshll.u32 683565275, %v1190
  %v1194 = vshrl.u32 2475754826, %v1191
  %v1195 = vor.u32 %v1193, %v1194
  %v1196 = vshll.u32 2475754826, %v1190
  %v1197 = vshrl.u32 2131351028, %v1191
  %v1198 = vor.u32 %v1196, %v1197
  %v1199 = vshll.u32 2131351028, %v1190
  %v1200 = vshrl.u32 2102212464, %v1191
  %v1201 = vor.u32 %v1199, %v1200
  %v1202 = vshll.u32 2102212464, %v1190
  %v1203 = vshrl.u32 920167782, %v1191
  %v1204 = vor.u32 %v1202, %v1203
  %v1205 = vshll.u32 920167782, %v1190
  %v1206 = vshrl.u32 1326507024, %v1191
  %v1207 = vor.u32 %v1205, %v1206
  %vm1208 = vcmp.lt.s32.totalorder %v1189, 1
  %vm1209 = vcmp.lt.s32.totalorder %v1189, 2
  %vm1210 = vcmp.lt.s32.totalorder %v1189, 3
  %vm1211 = vcmp.lt.s32.totalorder %v1189, 4
  %v1212 = vsel %vm1208, %v1192, %v1195
  %v1213 = vsel %vm1211, %v1201, 2102212464
  %v1214 = vsel %vm1210, %v1198, %v1213
  %v1215 = vsel %vm1209, %v1212, %v1214
  %v1216 = vsel %vm1208, %v1195, %v1198
  %v1217 = vsel %vm1211, %v1204, 920167782
  %v1218 = vsel %vm1210, %v1201, %v1217
  %v1219 = vsel %vm1209, %v1216, %v1218
  %v1220 = vsel %vm1208, %v1198, %v1201
  %v1221 = vsel %vm1211, %v1207, 1326507024
  %v1222 = vsel %vm1210, %v1204, %v1221
  %v1223 = vsel %vm1209, %v1220, %v1222
  %v1224 = vshll.u32 %v1184, 8
  %v1225 = vmul.u32.u64.compose %v1224, %v1223
  %v1226 = vextract.low.u32 %v1225
  %v1227 = vextract.high.u32 %v1225
  %v1228 = vmul.u32.u64.compose %v1224, %v1219
  %v1229 = vextract.low.u32 %v1228
  %v1230 = vextract.high.u32 %v1228
  %v1231 = vmul.u32 %v1224, %v1215
  %v1232 = vadd.s32 %v1227, %v1229
  %vm1233 = vc.u32 %v1227, %v1229
  %v1234 = vadd.s32 %v1230, 1
  %v1235 = vsel %vm1233, %v1234, %v1230
  %v1236 = vadd.s32 %v1231, %v1235
  %v1237 = vadd.s32 %v1236, 536870912
  %v1238 = vshrl.u32 %v1237, 30
  %v1239 = vshll.u32 %v1238, 30
  %v1240 = vsub.s32 %v1236, %v1239
  %vm1241 = vcmp.lt.s32.totalorder %v1240, 0
  %v1242 = vsub.s32 0, %v1240
  %v1243 = vsel %vm1241, %v1242, %v1240
  %v1244 = vclz %v1243
  %v1245 = vsub.s32 %v1244, 2
  %vm1246 = vcmp.gt.s32.totalorder 0, %v1245
  %v1247 = vsel %vm1246, 0, %v1245
  %v1248 = vsub.s32 32, %v1247
  %v1249 = vshll.u32 %v1240, %v1247
  %v1250 = vshrl.u32 %v1232, %v1248
  %v1251 = vor.u32 %v1249, %v1250
  %v1252 = vsub.s32 4294967266, %v1247
  %v1253 = vadd.s32 %v1252, 127
  %v1254 = vshll.u32 %v1253, 23
  %v1255 = vor.u32 4788187, %v1254
  %v1256 = vand.u32 2147483647, %v1255
  %v1258 = vcvt.s32.f32 %v1251
  %v1259 = vmul.f32 %v1258, %v1256
  %v1260 = vxor.u32 %v1259, 2147483648
  %v1261 = vsel %vm1178, %v1260, %v1259
  %v1262 = vsub.s32 4, %v1238
  %v1263 = vsel %vm1178, %v1262, %v1238
  %v1264 = vsel %vm1177, %v140, %v1261
  %v1265 = vsel %vm1177, 0, %v1263
  %v1266 = vcosq.f32.pop %v1264
  %v1267 = vsinq.f32.pop %v1264
  %vm1268 = vweird.f32 %v140
  %v1269 = vand.u32 %v1265, 3
  %vm1270 = vcmp.lt.s32.totalorder %v1269, 2
  %vm1271 = vcmp.eq.s32.totalorder %v1269, 0
  %v1272 = vxor.u32 %v1267, 2147483648
  %v1273 = vsel %vm1271, %v1266, %v1272
  %vm1274 = vcmp.eq.s32.totalorder %v1269, 2
  %v1275 = vxor.u32 %v1266, 2147483648
  %v1276 = vsel %vm1274, %v1275, %v1267
  %v1277 = vsel %vm1270, %v1273, %v1276
  %v1278 = vsel %vm1268, nan, %v1277
  %v1279 = vand.u32 2147483647, %v141
  %vm1280 = vcmp.le.f32.partialorder %v1279, 0.7853982
  %vm1281 = vcmp.lt.s32.totalorder %v141, 0
  %v1282 = vand.u32 %v141, 2139095040
  %v1283 = vshrl.u32 %v1282, 23
  %v1284 = vsub.s32 %v1283, 127
  %v1285 = vand.u32 2147483647, %v141
  %v1286 = vand.u32 %v1285, 8388607
  %v1287 = vor.u32 %v1286, 8388608
  %v1288 = vsub.s32 0, %v1287
  %v1289 = vadd.s32 %v1284, 1
  %vm1290 = vcmp.gt.s32.totalorder %v1289, 0
  %v1291 = vsel %vm1290, %v1289, 0
  %v1292 = vshrl.u32 %v1291, 5
  %v1293 = vand.u32 %v1291, 31
  %v1294 = vsub.s32 32, %v1293
  %v1295 = vshrl.u32 683565275, %v1294
  %v1296 = vshll.u32 683565275, %v1293
  %v1297 = vshrl.u32 2475754826, %v1294
  %v1298 = vor.u32 %v1296, %v1297
  %v1299 = vshll.u32 2475754826, %v1293
  %v1300 = vshrl.u32 2131351028, %v1294
  %v1301 = vor.u32 %v1299, %v1300
  %v1302 = vshll.u32 2131351028, %v1293
  %v1303 = vshrl.u32 2102212464, %v1294
  %v1304 = vor.u32 %v1302, %v1303
  %v1305 = vshll.u32 2102212464, %v1293
  %v1306 = vshrl.u32 920167782, %v1294
  %v1307 = vor.u32 %v1305, %v1306
  %v1308 = vshll.u32 920167782, %v1293
  %v1309 = vshrl.u32 1326507024, %v1294
  %v1310 = vor.u32 %v1308, %v1309
  %vm1311 = vcmp.lt.s32.totalorder %v1292, 1
  %vm1312 = vcmp.lt.s32.totalorder %v1292, 2
  %vm1313 = vcmp.lt.s32.totalorder %v1292, 3
  %vm1314 = vcmp.lt.s32.totalorder %v1292, 4
  %v1315 = vsel %vm1311, %v1295, %v1298
  %v1316 = vsel %vm1314, %v1304, 2102212464
  %v1317 = vsel %vm1313, %v1301, %v1316
  %v1318 = vsel %vm1312, %v1315, %v1317
  %v1319 = vsel %vm1311, %v1298, %v1301
  %v1320 = vsel %vm1314, %v1307, 920167782
  %v1321 = vsel %vm1313, %v1304, %v1320
  %v1322 = vsel %vm1312, %v1319, %v1321
  %v1323 = vsel %vm1311, %v1301, %v1304
  %v1324 = vsel %vm1314, %v1310, 1326507024
  %v1325 = vsel %vm1313, %v1307, %v1324
  %v1326 = vsel %vm1312, %v1323, %v1325
  %v1327 = vshll.u32 %v1287, 8
  %v1328 = vmul.u32.u64.compose %v1327, %v1326
  %v1329 = vextract.low.u32 %v1328
  %v1330 = vextract.high.u32 %v1328
  %v1331 = vmul.u32.u64.compose %v1327, %v1322
  %v1332 = vextract.low.u32 %v1331
  %v1333 = vextract.high.u32 %v1331
  %v1334 = vmul.u32 %v1327, %v1318
  %v1335 = vadd.s32 %v1330, %v1332
  %vm1336 = vc.u32 %v1330, %v1332
  %v1337 = vadd.s32 %v1333, 1
  %v1338 = vsel %vm1336, %v1337, %v1333
  %v1339 = vadd.s32 %v1334, %v1338
  %v1340 = vadd.s32 %v1339, 536870912
  %v1341 = vshrl.u32 %v1340, 30
  %v1342 = vshll.u32 %v1341, 30
  %v1343 = vsub.s32 %v1339, %v1342
  %vm1344 = vcmp.lt.s32.totalorder %v1343, 0
  %v1345 = vsub.s32 0, %v1343
  %v1346 = vsel %vm1344, %v1345, %v1343
  %v1347 = vclz %v1346
  %v1348 = vsub.s32 %v1347, 2
  %vm1349 = vcmp.gt.s32.totalorder 0, %v1348
  %v1350 = vsel %vm1349, 0, %v1348
  %v1351 = vsub.s32 32, %v1350
  %v1352 = vshll.u32 %v1343, %v1350
  %v1353 = vshrl.u32 %v1335, %v1351
  %v1354 = vor.u32 %v1352, %v1353
  %v1355 = vsub.s32 4294967266, %v1350
  %v1356 = vadd.s32 %v1355, 127
  %v1357 = vshll.u32 %v1356, 23
  %v1358 = vor.u32 4788187, %v1357
  %v1359 = vand.u32 2147483647, %v1358
  %v1361 = vcvt.s32.f32 %v1354
  %v1362 = vmul.f32 %v1361, %v1359
  %v1363 = vxor.u32 %v1362, 2147483648
  %v1364 = vsel %vm1281, %v1363, %v1362
  %v1365 = vsub.s32 4, %v1341
  %v1366 = vsel %vm1281, %v1365, %v1341
  %v1367 = vsel %vm1280, %v141, %v1364
  %v1368 = vsel %vm1280, 0, %v1366
  %v1369 = vcosq.f32.pop %v1367
  %v1370 = vsinq.f32.pop %v1367
  %vm1371 = vweird.f32 %v141
  %v1372 = vand.u32 %v1368, 3
  %vm1373 = vcmp.lt.s32.totalorder %v1372, 2
  %vm1374 = vcmp.eq.s32.totalorder %v1372, 0
  %v1375 = vxor.u32 %v1370, 2147483648
  %v1376 = vsel %vm1374, %v1369, %v1375
  %vm1377 = vcmp.eq.s32.totalorder %v1372, 2
  %v1378 = vxor.u32 %v1369, 2147483648
  %v1379 = vsel %vm1377, %v1378, %v1370
  %v1380 = vsel %vm1373, %v1376, %v1379
  %v1381 = vsel %vm1371, nan, %v1380
  %v1382 = vand.u32 2147483647, %v142
  %vm1383 = vcmp.le.f32.partialorder %v1382, 0.7853982
  %vm1384 = vcmp.lt.s32.totalorder %v142, 0
  %v1385 = vand.u32 %v142, 2139095040
  %v1386 = vshrl.u32 %v1385, 23
  %v1387 = vsub.s32 %v1386, 127
  %v1388 = vand.u32 2147483647, %v142
  %v1389 = vand.u32 %v1388, 8388607
  %v1390 = vor.u32 %v1389, 8388608
  %v1391 = vsub.s32 0, %v1390
  %v1392 = vadd.s32 %v1387, 1
  %vm1393 = vcmp.gt.s32.totalorder %v1392, 0
  %v1394 = vsel %vm1393, %v1392, 0
  %v1395 = vshrl.u32 %v1394, 5
  %v1396 = vand.u32 %v1394, 31
  %v1397 = vsub.s32 32, %v1396
  %v1398 = vshrl.u32 683565275, %v1397
  %v1399 = vshll.u32 683565275, %v1396
  %v1400 = vshrl.u32 2475754826, %v1397
  %v1401 = vor.u32 %v1399, %v1400
  %v1402 = vshll.u32 2475754826, %v1396
  %v1403 = vshrl.u32 2131351028, %v1397
  %v1404 = vor.u32 %v1402, %v1403
  %v1405 = vshll.u32 2131351028, %v1396
  %v1406 = vshrl.u32 2102212464, %v1397
  %v1407 = vor.u32 %v1405, %v1406
  %v1408 = vshll.u32 2102212464, %v1396
  %v1409 = vshrl.u32 920167782, %v1397
  %v1410 = vor.u32 %v1408, %v1409
  %v1411 = vshll.u32 920167782, %v1396
  %v1412 = vshrl.u32 1326507024, %v1397
  %v1413 = vor.u32 %v1411, %v1412
  %vm1414 = vcmp.lt.s32.totalorder %v1395, 1
  %vm1415 = vcmp.lt.s32.totalorder %v1395, 2
  %vm1416 = vcmp.lt.s32.totalorder %v1395, 3
  %vm1417 = vcmp.lt.s32.totalorder %v1395, 4
  %v1418 = vsel %vm1414, %v1398, %v1401
  %v1419 = vsel %vm1417, %v1407, 2102212464
  %v1420 = vsel %vm1416, %v1404, %v1419
  %v1421 = vsel %vm1415, %v1418, %v1420
  %v1422 = vsel %vm1414, %v1401, %v1404
  %v1423 = vsel %vm1417, %v1410, 920167782
  %v1424 = vsel %vm1416, %v1407, %v1423
  %v1425 = vsel %vm1415, %v1422, %v1424
  %v1426 = vsel %vm1414, %v1404, %v1407
  %v1427 = vsel %vm1417, %v1413, 1326507024
  %v1428 = vsel %vm1416, %v1410, %v1427
  %v1429 = vsel %vm1415, %v1426, %v1428
  %v1430 = vshll.u32 %v1390, 8
  %v1431 = vmul.u32.u64.compose %v1430, %v1429
  %v1432 = vextract.low.u32 %v1431
  %v1433 = vextract.high.u32 %v1431
  %v1434 = vmul.u32.u64.compose %v1430, %v1425
  %v1435 = vextract.low.u32 %v1434
  %v1436 = vextract.high.u32 %v1434
  %v1437 = vmul.u32 %v1430, %v1421
  %v1438 = vadd.s32 %v1433, %v1435
  %vm1439 = vc.u32 %v1433, %v1435
  %v1440 = vadd.s32 %v1436, 1
  %v1441 = vsel %vm1439, %v1440, %v1436
  %v1442 = vadd.s32 %v1437, %v1441
  %v1443 = vadd.s32 %v1442, 536870912
  %v1444 = vshrl.u32 %v1443, 30
  %v1445 = vshll.u32 %v1444, 30
  %v1446 = vsub.s32 %v1442, %v1445
  %vm1447 = vcmp.lt.s32.totalorder %v1446, 0
  %v1448 = vsub.s32 0, %v1446
  %v1449 = vsel %vm1447, %v1448, %v1446
  %v1450 = vclz %v1449
  %v1451 = vsub.s32 %v1450, 2
  %vm1452 = vcmp.gt.s32.totalorder 0, %v1451
  %v1453 = vsel %vm1452, 0, %v1451
  %v1454 = vsub.s32 32, %v1453
  %v1455 = vshll.u32 %v1446, %v1453
  %v1456 = vshrl.u32 %v1438, %v1454
  %v1457 = vor.u32 %v1455, %v1456
  %v1458 = vsub.s32 4294967266, %v1453
  %v1459 = vadd.s32 %v1458, 127
  %v1460 = vshll.u32 %v1459, 23
  %v1461 = vor.u32 4788187, %v1460
  %v1462 = vand.u32 2147483647, %v1461
  %v1464 = vcvt.s32.f32 %v1457
  %v1465 = vmul.f32 %v1464, %v1462
  %v1466 = vxor.u32 %v1465, 2147483648
  %v1467 = vsel %vm1384, %v1466, %v1465
  %v1468 = vsub.s32 4, %v1444
  %v1469 = vsel %vm1384, %v1468, %v1444
  %v1470 = vsel %vm1383, %v142, %v1467
  %v1471 = vsel %vm1383, 0, %v1469
  %v1472 = vcosq.f32.pop %v1470
  %v1473 = vsinq.f32.pop %v1470
  %vm1474 = vweird.f32 %v142
  %v1475 = vand.u32 %v1471, 3
  %vm1476 = vcmp.lt.s32.totalorder %v1475, 2
  %vm1477 = vcmp.eq.s32.totalorder %v1475, 0
  %v1478 = vxor.u32 %v1473, 2147483648
  %v1479 = vsel %vm1477, %v1472, %v1478
  %vm1480 = vcmp.eq.s32.totalorder %v1475, 2
  %v1481 = vxor.u32 %v1472, 2147483648
  %v1482 = vsel %vm1480, %v1481, %v1473
  %v1483 = vsel %vm1476, %v1479, %v1482
  %v1484 = vsel %vm1474, nan, %v1483
  %v1485 = vand.u32 2147483647, %v143
  %vm1486 = vcmp.le.f32.partialorder %v1485, 0.7853982
  %vm1487 = vcmp.lt.s32.totalorder %v143, 0
  %v1488 = vand.u32 %v143, 2139095040
  %v1489 = vshrl.u32 %v1488, 23
  %v1490 = vsub.s32 %v1489, 127
  %v1491 = vand.u32 2147483647, %v143
  %v1492 = vand.u32 %v1491, 8388607
  %v1493 = vor.u32 %v1492, 8388608
  %v1494 = vsub.s32 0, %v1493
  %v1495 = vadd.s32 %v1490, 1
  %vm1496 = vcmp.gt.s32.totalorder %v1495, 0
  %v1497 = vsel %vm1496, %v1495, 0
  %v1498 = vshrl.u32 %v1497, 5
  %v1499 = vand.u32 %v1497, 31
  %v1500 = vsub.s32 32, %v1499
  %v1501 = vshrl.u32 683565275, %v1500
  %v1502 = vshll.u32 683565275, %v1499
  %v1503 = vshrl.u32 2475754826, %v1500
  %v1504 = vor.u32 %v1502, %v1503
  %v1505 = vshll.u32 2475754826, %v1499
  %v1506 = vshrl.u32 2131351028, %v1500
  %v1507 = vor.u32 %v1505, %v1506
  %v1508 = vshll.u32 2131351028, %v1499
  %v1509 = vshrl.u32 2102212464, %v1500
  %v1510 = vor.u32 %v1508, %v1509
  %v1511 = vshll.u32 2102212464, %v1499
  %v1512 = vshrl.u32 920167782, %v1500
  %v1513 = vor.u32 %v1511, %v1512
  %v1514 = vshll.u32 920167782, %v1499
  %v1515 = vshrl.u32 1326507024, %v1500
  %v1516 = vor.u32 %v1514, %v1515
  %vm1517 = vcmp.lt.s32.totalorder %v1498, 1
  %vm1518 = vcmp.lt.s32.totalorder %v1498, 2
  %vm1519 = vcmp.lt.s32.totalorder %v1498, 3
  %vm1520 = vcmp.lt.s32.totalorder %v1498, 4
  %v1521 = vsel %vm1517, %v1501, %v1504
  %v1522 = vsel %vm1520, %v1510, 2102212464
  %v1523 = vsel %vm1519, %v1507, %v1522
  %v1524 = vsel %vm1518, %v1521, %v1523
  %v1525 = vsel %vm1517, %v1504, %v1507
  %v1526 = vsel %vm1520, %v1513, 920167782
  %v1527 = vsel %vm1519, %v1510, %v1526
  %v1528 = vsel %vm1518, %v1525, %v1527
  %v1529 = vsel %vm1517, %v1507, %v1510
  %v1530 = vsel %vm1520, %v1516, 1326507024
  %v1531 = vsel %vm1519, %v1513, %v1530
  %v1532 = vsel %vm1518, %v1529, %v1531
  %v1533 = vshll.u32 %v1493, 8
  %v1534 = vmul.u32.u64.compose %v1533, %v1532
  %v1535 = vextract.low.u32 %v1534
  %v1536 = vextract.high.u32 %v1534
  %v1537 = vmul.u32.u64.compose %v1533, %v1528
  %v1538 = vextract.low.u32 %v1537
  %v1539 = vextract.high.u32 %v1537
  %v1540 = vmul.u32 %v1533, %v1524
  %v1541 = vadd.s32 %v1536, %v1538
  %vm1542 = vc.u32 %v1536, %v1538
  %v1543 = vadd.s32 %v1539, 1
  %v1544 = vsel %vm1542, %v1543, %v1539
  %v1545 = vadd.s32 %v1540, %v1544
  %v1546 = vadd.s32 %v1545, 536870912
  %v1547 = vshrl.u32 %v1546, 30
  %v1548 = vshll.u32 %v1547, 30
  %v1549 = vsub.s32 %v1545, %v1548
  %vm1550 = vcmp.lt.s32.totalorder %v1549, 0
  %v1551 = vsub.s32 0, %v1549
  %v1552 = vsel %vm1550, %v1551, %v1549
  %v1553 = vclz %v1552
  %v1554 = vsub.s32 %v1553, 2
  %vm1555 = vcmp.gt.s32.totalorder 0, %v1554
  %v1556 = vsel %vm1555, 0, %v1554
  %v1557 = vsub.s32 32, %v1556
  %v1558 = vshll.u32 %v1549, %v1556
  %v1559 = vshrl.u32 %v1541, %v1557
  %v1560 = vor.u32 %v1558, %v1559
  %v1561 = vsub.s32 4294967266, %v1556
  %v1562 = vadd.s32 %v1561, 127
  %v1563 = vshll.u32 %v1562, 23
  %v1564 = vor.u32 4788187, %v1563
  %v1565 = vand.u32 2147483647, %v1564
  %v1567 = vcvt.s32.f32 %v1560
  %v1568 = vmul.f32 %v1567, %v1565
  %v1569 = vxor.u32 %v1568, 2147483648
  %v1570 = vsel %vm1487, %v1569, %v1568
  %v1571 = vsub.s32 4, %v1547
  %v1572 = vsel %vm1487, %v1571, %v1547
  %v1573 = vsel %vm1486, %v143, %v1570
  %v1574 = vsel %vm1486, 0, %v1572
  %v1575 = vcosq.f32.pop %v1573
  %v1576 = vsinq.f32.pop %v1573
  %vm1577 = vweird.f32 %v143
  %v1578 = vand.u32 %v1574, 3
  %vm1579 = vcmp.lt.s32.totalorder %v1578, 2
  %vm1580 = vcmp.eq.s32.totalorder %v1578, 0
  %v1581 = vxor.u32 %v1576, 2147483648
  %v1582 = vsel %vm1580, %v1575, %v1581
  %vm1583 = vcmp.eq.s32.totalorder %v1578, 2
  %v1584 = vxor.u32 %v1575, 2147483648
  %v1585 = vsel %vm1583, %v1584, %v1576
  %v1586 = vsel %vm1579, %v1582, %v1585
  %v1587 = vsel %vm1577, nan, %v1586
  %v1588 = vand.u32 2147483647, %v144
  %vm1589 = vcmp.le.f32.partialorder %v1588, 0.7853982
  %vm1590 = vcmp.lt.s32.totalorder %v144, 0
  %v1591 = vand.u32 %v144, 2139095040
  %v1592 = vshrl.u32 %v1591, 23
  %v1593 = vsub.s32 %v1592, 127
  %v1594 = vand.u32 2147483647, %v144
  %v1595 = vand.u32 %v1594, 8388607
  %v1596 = vor.u32 %v1595, 8388608
  %v1597 = vsub.s32 0, %v1596
  %v1598 = vadd.s32 %v1593, 1
  %vm1599 = vcmp.gt.s32.totalorder %v1598, 0
  %v1600 = vsel %vm1599, %v1598, 0
  %v1601 = vshrl.u32 %v1600, 5
  %v1602 = vand.u32 %v1600, 31
  %v1603 = vsub.s32 32, %v1602
  %v1604 = vshrl.u32 683565275, %v1603
  %v1605 = vshll.u32 683565275, %v1602
  %v1606 = vshrl.u32 2475754826, %v1603
  %v1607 = vor.u32 %v1605, %v1606
  %v1608 = vshll.u32 2475754826, %v1602
  %v1609 = vshrl.u32 2131351028, %v1603
  %v1610 = vor.u32 %v1608, %v1609
  %v1611 = vshll.u32 2131351028, %v1602
  %v1612 = vshrl.u32 2102212464, %v1603
  %v1613 = vor.u32 %v1611, %v1612
  %v1614 = vshll.u32 2102212464, %v1602
  %v1615 = vshrl.u32 920167782, %v1603
  %v1616 = vor.u32 %v1614, %v1615
  %v1617 = vshll.u32 920167782, %v1602
  %v1618 = vshrl.u32 1326507024, %v1603
  %v1619 = vor.u32 %v1617, %v1618
  %vm1620 = vcmp.lt.s32.totalorder %v1601, 1
  %vm1621 = vcmp.lt.s32.totalorder %v1601, 2
  %vm1622 = vcmp.lt.s32.totalorder %v1601, 3
  %vm1623 = vcmp.lt.s32.totalorder %v1601, 4
  %v1624 = vsel %vm1620, %v1604, %v1607
  %v1625 = vsel %vm1623, %v1613, 2102212464
  %v1626 = vsel %vm1622, %v1610, %v1625
  %v1627 = vsel %vm1621, %v1624, %v1626
  %v1628 = vsel %vm1620, %v1607, %v1610
  %v1629 = vsel %vm1623, %v1616, 920167782
  %v1630 = vsel %vm1622, %v1613, %v1629
  %v1631 = vsel %vm1621, %v1628, %v1630
  %v1632 = vsel %vm1620, %v1610, %v1613
  %v1633 = vsel %vm1623, %v1619, 1326507024
  %v1634 = vsel %vm1622, %v1616, %v1633
  %v1635 = vsel %vm1621, %v1632, %v1634
  %v1636 = vshll.u32 %v1596, 8
  %v1637 = vmul.u32.u64.compose %v1636, %v1635
  %v1638 = vextract.low.u32 %v1637
  %v1639 = vextract.high.u32 %v1637
  %v1640 = vmul.u32.u64.compose %v1636, %v1631
  %v1641 = vextract.low.u32 %v1640
  %v1642 = vextract.high.u32 %v1640
  %v1643 = vmul.u32 %v1636, %v1627
  %v1644 = vadd.s32 %v1639, %v1641
  %vm1645 = vc.u32 %v1639, %v1641
  %v1646 = vadd.s32 %v1642, 1
  %v1647 = vsel %vm1645, %v1646, %v1642
  %v1648 = vadd.s32 %v1643, %v1647
  %v1649 = vadd.s32 %v1648, 536870912
  %v1650 = vshrl.u32 %v1649, 30
  %v1651 = vshll.u32 %v1650, 30
  %v1652 = vsub.s32 %v1648, %v1651
  %vm1653 = vcmp.lt.s32.totalorder %v1652, 0
  %v1654 = vsub.s32 0, %v1652
  %v1655 = vsel %vm1653, %v1654, %v1652
  %v1656 = vclz %v1655
  %v1657 = vsub.s32 %v1656, 2
  %vm1658 = vcmp.gt.s32.totalorder 0, %v1657
  %v1659 = vsel %vm1658, 0, %v1657
  %v1660 = vsub.s32 32, %v1659
  %v1661 = vshll.u32 %v1652, %v1659
  %v1662 = vshrl.u32 %v1644, %v1660
  %v1663 = vor.u32 %v1661, %v1662
  %v1664 = vsub.s32 4294967266, %v1659
  %v1665 = vadd.s32 %v1664, 127
  %v1666 = vshll.u32 %v1665, 23
  %v1667 = vor.u32 4788187, %v1666
  %v1668 = vand.u32 2147483647, %v1667
  %v1670 = vcvt.s32.f32 %v1663
  %v1671 = vmul.f32 %v1670, %v1668
  %v1672 = vxor.u32 %v1671, 2147483648
  %v1673 = vsel %vm1590, %v1672, %v1671
  %v1674 = vsub.s32 4, %v1650
  %v1675 = vsel %vm1590, %v1674, %v1650
  %v1676 = vsel %vm1589, %v144, %v1673
  %v1677 = vsel %vm1589, 0, %v1675
  %v1678 = vcosq.f32.pop %v1676
  %v1679 = vsinq.f32.pop %v1676
  %vm1680 = vweird.f32 %v144
  %v1681 = vand.u32 %v1677, 3
  %vm1682 = vcmp.lt.s32.totalorder %v1681, 2
  %vm1683 = vcmp.eq.s32.totalorder %v1681, 0
  %v1684 = vxor.u32 %v1679, 2147483648
  %v1685 = vsel %vm1683, %v1678, %v1684
  %vm1686 = vcmp.eq.s32.totalorder %v1681, 2
  %v1687 = vxor.u32 %v1678, 2147483648
  %v1688 = vsel %vm1686, %v1687, %v1679
  %v1689 = vsel %vm1682, %v1685, %v1688
  %v1690 = vsel %vm1680, nan, %v1689
  %v1691 = vand.u32 2147483647, %v145
  %vm1692 = vcmp.le.f32.partialorder %v1691, 0.7853982
  %vm1693 = vcmp.lt.s32.totalorder %v145, 0
  %v1694 = vand.u32 %v145, 2139095040
  %v1695 = vshrl.u32 %v1694, 23
  %v1696 = vsub.s32 %v1695, 127
  %v1697 = vand.u32 2147483647, %v145
  %v1698 = vand.u32 %v1697, 8388607
  %v1699 = vor.u32 %v1698, 8388608
  %v1700 = vsub.s32 0, %v1699
  %v1701 = vadd.s32 %v1696, 1
  %vm1702 = vcmp.gt.s32.totalorder %v1701, 0
  %v1703 = vsel %vm1702, %v1701, 0
  %v1704 = vshrl.u32 %v1703, 5
  %v1705 = vand.u32 %v1703, 31
  %v1706 = vsub.s32 32, %v1705
  %v1707 = vshrl.u32 683565275, %v1706
  %v1708 = vshll.u32 683565275, %v1705
  %v1709 = vshrl.u32 2475754826, %v1706
  %v1710 = vor.u32 %v1708, %v1709
  %v1711 = vshll.u32 2475754826, %v1705
  %v1712 = vshrl.u32 2131351028, %v1706
  %v1713 = vor.u32 %v1711, %v1712
  %v1714 = vshll.u32 2131351028, %v1705
  %v1715 = vshrl.u32 2102212464, %v1706
  %v1716 = vor.u32 %v1714, %v1715
  %v1717 = vshll.u32 2102212464, %v1705
  %v1718 = vshrl.u32 920167782, %v1706
  %v1719 = vor.u32 %v1717, %v1718
  %v1720 = vshll.u32 920167782, %v1705
  %v1721 = vshrl.u32 1326507024, %v1706
  %v1722 = vor.u32 %v1720, %v1721
  %vm1723 = vcmp.lt.s32.totalorder %v1704, 1
  %vm1724 = vcmp.lt.s32.totalorder %v1704, 2
  %vm1725 = vcmp.lt.s32.totalorder %v1704, 3
  %vm1726 = vcmp.lt.s32.totalorder %v1704, 4
  %v1727 = vsel %vm1723, %v1707, %v1710
  %v1728 = vsel %vm1726, %v1716, 2102212464
  %v1729 = vsel %vm1725, %v1713, %v1728
  %v1730 = vsel %vm1724, %v1727, %v1729
  %v1731 = vsel %vm1723, %v1710, %v1713
  %v1732 = vsel %vm1726, %v1719, 920167782
  %v1733 = vsel %vm1725, %v1716, %v1732
  %v1734 = vsel %vm1724, %v1731, %v1733
  %v1735 = vsel %vm1723, %v1713, %v1716
  %v1736 = vsel %vm1726, %v1722, 1326507024
  %v1737 = vsel %vm1725, %v1719, %v1736
  %v1738 = vsel %vm1724, %v1735, %v1737
  %v1739 = vshll.u32 %v1699, 8
  %v1740 = vmul.u32.u64.compose %v1739, %v1738
  %v1741 = vextract.low.u32 %v1740
  %v1742 = vextract.high.u32 %v1740
  %v1743 = vmul.u32.u64.compose %v1739, %v1734
  %v1744 = vextract.low.u32 %v1743
  %v1745 = vextract.high.u32 %v1743
  %v1746 = vmul.u32 %v1739, %v1730
  %v1747 = vadd.s32 %v1742, %v1744
  %vm1748 = vc.u32 %v1742, %v1744
  %v1749 = vadd.s32 %v1745, 1
  %v1750 = vsel %vm1748, %v1749, %v1745
  %v1751 = vadd.s32 %v1746, %v1750
  %v1752 = vadd.s32 %v1751, 536870912
  %v1753 = vshrl.u32 %v1752, 30
  %v1754 = vshll.u32 %v1753, 30
  %v1755 = vsub.s32 %v1751, %v1754
  %vm1756 = vcmp.lt.s32.totalorder %v1755, 0
  %v1757 = vsub.s32 0, %v1755
  %v1758 = vsel %vm1756, %v1757, %v1755
  %v1759 = vclz %v1758
  %v1760 = vsub.s32 %v1759, 2
  %vm1761 = vcmp.gt.s32.totalorder 0, %v1760
  %v1762 = vsel %vm1761, 0, %v1760
  %v1763 = vsub.s32 32, %v1762
  %v1764 = vshll.u32 %v1755, %v1762
  %v1765 = vshrl.u32 %v1747, %v1763
  %v1766 = vor.u32 %v1764, %v1765
  %v1767 = vsub.s32 4294967266, %v1762
  %v1768 = vadd.s32 %v1767, 127
  %v1769 = vshll.u32 %v1768, 23
  %v1770 = vor.u32 4788187, %v1769
  %v1771 = vand.u32 2147483647, %v1770
  %v1773 = vcvt.s32.f32 %v1766
  %v1774 = vmul.f32 %v1773, %v1771
  %v1775 = vxor.u32 %v1774, 2147483648
  %v1776 = vsel %vm1693, %v1775, %v1774
  %v1777 = vsub.s32 4, %v1753
  %v1778 = vsel %vm1693, %v1777, %v1753
  %v1779 = vsel %vm1692, %v145, %v1776
  %v1780 = vsel %vm1692, 0, %v1778
  %v1781 = vcosq.f32.pop %v1779
  %v1782 = vsinq.f32.pop %v1779
  %vm1783 = vweird.f32 %v145
  %v1784 = vand.u32 %v1780, 3
  %vm1785 = vcmp.lt.s32.totalorder %v1784, 2
  %vm1786 = vcmp.eq.s32.totalorder %v1784, 0
  %v1787 = vxor.u32 %v1782, 2147483648
  %v1788 = vsel %vm1786, %v1781, %v1787
  %vm1789 = vcmp.eq.s32.totalorder %v1784, 2
  %v1790 = vxor.u32 %v1781, 2147483648
  %v1791 = vsel %vm1789, %v1790, %v1782
  %v1792 = vsel %vm1785, %v1788, %v1791
  %v1793 = vsel %vm1783, nan, %v1792
  %1794 = vset.pattern.permute.xlu0 1
  %1795 = vperm.xlu0 %1794, %v27
  %v1796 = vpop.permute.xlu0 %1795
  %1798 = vset.pattern.permute.xlu0 1
  %1799 = vperm.xlu0 %1798, %v28
  %v1800 = vpop.permute.xlu0 %1799
  %1802 = vset.pattern.permute.xlu0 1
  %1803 = vperm.xlu0 %1802, %v29
  %v1804 = vpop.permute.xlu0 %1803
  %1806 = vset.pattern.permute.xlu0 1
  %1807 = vperm.xlu0 %1806, %v30
  %v1808 = vpop.permute.xlu0 %1807
  %1810 = vset.pattern.permute.xlu0 1
  %1811 = vperm.xlu0 %1810, %v31
  %v1812 = vpop.permute.xlu0 %1811
  %1814 = vset.pattern.permute.xlu0 1
  %1815 = vperm.xlu0 %1814, %v32
  %v1816 = vpop.permute.xlu0 %1815
  %1818 = vset.pattern.permute.xlu0 1
  %1819 = vperm.xlu0 %1818, %v33
  %v1820 = vpop.permute.xlu0 %1819
  %1822 = vset.pattern.permute.xlu0 1
  %1823 = vperm.xlu0 %1822, %v34
  %v1824 = vpop.permute.xlu0 %1823
  %1826 = vset.pattern.permute.xlu0 1
  %1827 = vperm.xlu0 %1826, %v35
  %v1828 = vpop.permute.xlu0 %1827
  %1830 = vset.pattern.permute.xlu0 1
  %1831 = vperm.xlu0 %1830, %v36
  %v1832 = vpop.permute.xlu0 %1831
  %1834 = vset.pattern.permute.xlu0 1
  %1835 = vperm.xlu0 %1834, %v37
  %v1836 = vpop.permute.xlu0 %1835
  %1838 = vset.pattern.permute.xlu0 1
  %1839 = vperm.xlu0 %1838, %v38
  %v1840 = vpop.permute.xlu0 %1839
  %1842 = vset.pattern.permute.xlu0 1
  %1843 = vperm.xlu0 %1842, %v39
  %v1844 = vpop.permute.xlu0 %1843
  %1846 = vset.pattern.permute.xlu0 1
  %1847 = vperm.xlu0 %1846, %v40
  %v1848 = vpop.permute.xlu0 %1847
  %1850 = vset.pattern.permute.xlu0 1
  %1851 = vperm.xlu0 %1850, %v41
  %v1852 = vpop.permute.xlu0 %1851
  %1854 = vset.pattern.permute.xlu0 1
  %1855 = vperm.xlu0 %1854, %v42
  %v1856 = vpop.permute.xlu0 %1855
  %v1858 = vmul.f32 %v1796, %v128
  %v1859 = vmul.f32 %v1800, %v128
  %v1860 = vmul.f32 %v1804, %v128
  %v1861 = vmul.f32 %v1808, %v128
  %v1862 = vmul.f32 %v1812, %v128
  %v1863 = vmul.f32 %v1816, %v128
  %v1864 = vmul.f32 %v1820, %v128
  %v1865 = vmul.f32 %v1824, %v128
  %v1866 = vmul.f32 %v1828, %v128
  %v1867 = vmul.f32 %v1832, %v128
  %v1868 = vmul.f32 %v1836, %v128
  %v1869 = vmul.f32 %v1840, %v128
  %v1870 = vmul.f32 %v1844, %v128
  %v1871 = vmul.f32 %v1848, %v128
  %v1872 = vmul.f32 %v1852, %v128
  %v1873 = vmul.f32 %v1856, %v128
  %v1874 = vand.u32 2147483647, %v1858
  %vm1875 = vcmp.le.f32.partialorder %v1874, 0.7853982
  %vm1876 = vcmp.lt.s32.totalorder %v1858, 0
  %v1877 = vand.u32 %v1858, 2139095040
  %v1878 = vshrl.u32 %v1877, 23
  %v1879 = vsub.s32 %v1878, 127
  %v1880 = vand.u32 2147483647, %v1858
  %v1881 = vand.u32 %v1880, 8388607
  %v1882 = vor.u32 %v1881, 8388608
  %v1883 = vsub.s32 0, %v1882
  %v1884 = vadd.s32 %v1879, 1
  %vm1885 = vcmp.gt.s32.totalorder %v1884, 0
  %v1886 = vsel %vm1885, %v1884, 0
  %v1887 = vshrl.u32 %v1886, 5
  %v1888 = vand.u32 %v1886, 31
  %v1889 = vsub.s32 32, %v1888
  %v1890 = vshrl.u32 683565275, %v1889
  %v1891 = vshll.u32 683565275, %v1888
  %v1892 = vshrl.u32 2475754826, %v1889
  %v1893 = vor.u32 %v1891, %v1892
  %v1894 = vshll.u32 2475754826, %v1888
  %v1895 = vshrl.u32 2131351028, %v1889
  %v1896 = vor.u32 %v1894, %v1895
  %v1897 = vshll.u32 2131351028, %v1888
  %v1898 = vshrl.u32 2102212464, %v1889
  %v1899 = vor.u32 %v1897, %v1898
  %v1900 = vshll.u32 2102212464, %v1888
  %v1901 = vshrl.u32 920167782, %v1889
  %v1902 = vor.u32 %v1900, %v1901
  %v1903 = vshll.u32 920167782, %v1888
  %v1904 = vshrl.u32 1326507024, %v1889
  %v1905 = vor.u32 %v1903, %v1904
  %vm1906 = vcmp.lt.s32.totalorder %v1887, 1
  %vm1907 = vcmp.lt.s32.totalorder %v1887, 2
  %vm1908 = vcmp.lt.s32.totalorder %v1887, 3
  %vm1909 = vcmp.lt.s32.totalorder %v1887, 4
  %v1910 = vsel %vm1906, %v1890, %v1893
  %v1911 = vsel %vm1909, %v1899, 2102212464
  %v1912 = vsel %vm1908, %v1896, %v1911
  %v1913 = vsel %vm1907, %v1910, %v1912
  %v1914 = vsel %vm1906, %v1893, %v1896
  %v1915 = vsel %vm1909, %v1902, 920167782
  %v1916 = vsel %vm1908, %v1899, %v1915
  %v1917 = vsel %vm1907, %v1914, %v1916
  %v1918 = vsel %vm1906, %v1896, %v1899
  %v1919 = vsel %vm1909, %v1905, 1326507024
  %v1920 = vsel %vm1908, %v1902, %v1919
  %v1921 = vsel %vm1907, %v1918, %v1920
  %v1922 = vshll.u32 %v1882, 8
  %v1923 = vmul.u32.u64.compose %v1922, %v1921
  %v1924 = vextract.low.u32 %v1923
  %v1925 = vextract.high.u32 %v1923
  %v1926 = vmul.u32.u64.compose %v1922, %v1917
  %v1927 = vextract.low.u32 %v1926
  %v1928 = vextract.high.u32 %v1926
  %v1929 = vmul.u32 %v1922, %v1913
  %v1930 = vadd.s32 %v1925, %v1927
  %vm1931 = vc.u32 %v1925, %v1927
  %v1932 = vadd.s32 %v1928, 1
  %v1933 = vsel %vm1931, %v1932, %v1928
  %v1934 = vadd.s32 %v1929, %v1933
  %v1935 = vadd.s32 %v1934, 536870912
  %v1936 = vshrl.u32 %v1935, 30
  %v1937 = vshll.u32 %v1936, 30
  %v1938 = vsub.s32 %v1934, %v1937
  %vm1939 = vcmp.lt.s32.totalorder %v1938, 0
  %v1940 = vsub.s32 0, %v1938
  %v1941 = vsel %vm1939, %v1940, %v1938
  %v1942 = vclz %v1941
  %v1943 = vsub.s32 %v1942, 2
  %vm1944 = vcmp.gt.s32.totalorder 0, %v1943
  %v1945 = vsel %vm1944, 0, %v1943
  %v1946 = vsub.s32 32, %v1945
  %v1947 = vshll.u32 %v1938, %v1945
  %v1948 = vshrl.u32 %v1930, %v1946
  %v1949 = vor.u32 %v1947, %v1948
  %v1950 = vsub.s32 4294967266, %v1945
  %v1951 = vadd.s32 %v1950, 127
  %v1952 = vshll.u32 %v1951, 23
  %v1953 = vor.u32 4788187, %v1952
  %v1954 = vand.u32 2147483647, %v1953
  %v1956 = vcvt.s32.f32 %v1949
  %v1957 = vmul.f32 %v1956, %v1954
  %v1958 = vxor.u32 %v1957, 2147483648
  %v1959 = vsel %vm1876, %v1958, %v1957
  %v1960 = vsub.s32 4, %v1936
  %v1961 = vsel %vm1876, %v1960, %v1936
  %v1962 = vsel %vm1875, %v1858, %v1959
  %v1963 = vsel %vm1875, 0, %v1961
  %v1964 = vcosq.f32.pop %v1962
  %v1965 = vsinq.f32.pop %v1962
  %vm1966 = vweird.f32 %v1858
  %v1967 = vand.u32 %v1963, 3
  %vm1968 = vcmp.lt.s32.totalorder %v1967, 2
  %vm1969 = vcmp.eq.s32.totalorder %v1967, 0
  %v1970 = vxor.u32 %v1965, 2147483648
  %v1971 = vsel %vm1969, %v1964, %v1970
  %vm1972 = vcmp.eq.s32.totalorder %v1967, 2
  %v1973 = vxor.u32 %v1964, 2147483648
  %v1974 = vsel %vm1972, %v1973, %v1965
  %v1975 = vsel %vm1968, %v1971, %v1974
  %v1976 = vsel %vm1966, nan, %v1975
  %v1977 = vand.u32 2147483647, %v1859
  %vm1978 = vcmp.le.f32.partialorder %v1977, 0.7853982
  %vm1979 = vcmp.lt.s32.totalorder %v1859, 0
  %v1980 = vand.u32 %v1859, 2139095040
  %v1981 = vshrl.u32 %v1980, 23
  %v1982 = vsub.s32 %v1981, 127
  %v1983 = vand.u32 2147483647, %v1859
  %v1984 = vand.u32 %v1983, 8388607
  %v1985 = vor.u32 %v1984, 8388608
  %v1986 = vsub.s32 0, %v1985
  %v1987 = vadd.s32 %v1982, 1
  %vm1988 = vcmp.gt.s32.totalorder %v1987, 0
  %v1989 = vsel %vm1988, %v1987, 0
  %v1990 = vshrl.u32 %v1989, 5
  %v1991 = vand.u32 %v1989, 31
  %v1992 = vsub.s32 32, %v1991
  %v1993 = vshrl.u32 683565275, %v1992
  %v1994 = vshll.u32 683565275, %v1991
  %v1995 = vshrl.u32 2475754826, %v1992
  %v1996 = vor.u32 %v1994, %v1995
  %v1997 = vshll.u32 2475754826, %v1991
  %v1998 = vshrl.u32 2131351028, %v1992
  %v1999 = vor.u32 %v1997, %v1998
  %v2000 = vshll.u32 2131351028, %v1991
  %v2001 = vshrl.u32 2102212464, %v1992
  %v2002 = vor.u32 %v2000, %v2001
  %v2003 = vshll.u32 2102212464, %v1991
  %v2004 = vshrl.u32 920167782, %v1992
  %v2005 = vor.u32 %v2003, %v2004
  %v2006 = vshll.u32 920167782, %v1991
  %v2007 = vshrl.u32 1326507024, %v1992
  %v2008 = vor.u32 %v2006, %v2007
  %vm2009 = vcmp.lt.s32.totalorder %v1990, 1
  %vm2010 = vcmp.lt.s32.totalorder %v1990, 2
  %vm2011 = vcmp.lt.s32.totalorder %v1990, 3
  %vm2012 = vcmp.lt.s32.totalorder %v1990, 4
  %v2013 = vsel %vm2009, %v1993, %v1996
  %v2014 = vsel %vm2012, %v2002, 2102212464
  %v2015 = vsel %vm2011, %v1999, %v2014
  %v2016 = vsel %vm2010, %v2013, %v2015
  %v2017 = vsel %vm2009, %v1996, %v1999
  %v2018 = vsel %vm2012, %v2005, 920167782
  %v2019 = vsel %vm2011, %v2002, %v2018
  %v2020 = vsel %vm2010, %v2017, %v2019
  %v2021 = vsel %vm2009, %v1999, %v2002
  %v2022 = vsel %vm2012, %v2008, 1326507024
  %v2023 = vsel %vm2011, %v2005, %v2022
  %v2024 = vsel %vm2010, %v2021, %v2023
  %v2025 = vshll.u32 %v1985, 8
  %v2026 = vmul.u32.u64.compose %v2025, %v2024
  %v2027 = vextract.low.u32 %v2026
  %v2028 = vextract.high.u32 %v2026
  %v2029 = vmul.u32.u64.compose %v2025, %v2020
  %v2030 = vextract.low.u32 %v2029
  %v2031 = vextract.high.u32 %v2029
  %v2032 = vmul.u32 %v2025, %v2016
  %v2033 = vadd.s32 %v2028, %v2030
  %vm2034 = vc.u32 %v2028, %v2030
  %v2035 = vadd.s32 %v2031, 1
  %v2036 = vsel %vm2034, %v2035, %v2031
  %v2037 = vadd.s32 %v2032, %v2036
  %v2038 = vadd.s32 %v2037, 536870912
  %v2039 = vshrl.u32 %v2038, 30
  %v2040 = vshll.u32 %v2039, 30
  %v2041 = vsub.s32 %v2037, %v2040
  %vm2042 = vcmp.lt.s32.totalorder %v2041, 0
  %v2043 = vsub.s32 0, %v2041
  %v2044 = vsel %vm2042, %v2043, %v2041
  %v2045 = vclz %v2044
  %v2046 = vsub.s32 %v2045, 2
  %vm2047 = vcmp.gt.s32.totalorder 0, %v2046
  %v2048 = vsel %vm2047, 0, %v2046
  %v2049 = vsub.s32 32, %v2048
  %v2050 = vshll.u32 %v2041, %v2048
  %v2051 = vshrl.u32 %v2033, %v2049
  %v2052 = vor.u32 %v2050, %v2051
  %v2053 = vsub.s32 4294967266, %v2048
  %v2054 = vadd.s32 %v2053, 127
  %v2055 = vshll.u32 %v2054, 23
  %v2056 = vor.u32 4788187, %v2055
  %v2057 = vand.u32 2147483647, %v2056
  %v2059 = vcvt.s32.f32 %v2052
  %v2060 = vmul.f32 %v2059, %v2057
  %v2061 = vxor.u32 %v2060, 2147483648
  %v2062 = vsel %vm1979, %v2061, %v2060
  %v2063 = vsub.s32 4, %v2039
  %v2064 = vsel %vm1979, %v2063, %v2039
  %v2065 = vsel %vm1978, %v1859, %v2062
  %v2066 = vsel %vm1978, 0, %v2064
  %v2067 = vcosq.f32.pop %v2065
  %v2068 = vsinq.f32.pop %v2065
  %vm2069 = vweird.f32 %v1859
  %v2070 = vand.u32 %v2066, 3
  %vm2071 = vcmp.lt.s32.totalorder %v2070, 2
  %vm2072 = vcmp.eq.s32.totalorder %v2070, 0
  %v2073 = vxor.u32 %v2068, 2147483648
  %v2074 = vsel %vm2072, %v2067, %v2073
  %vm2075 = vcmp.eq.s32.totalorder %v2070, 2
  %v2076 = vxor.u32 %v2067, 2147483648
  %v2077 = vsel %vm2075, %v2076, %v2068
  %v2078 = vsel %vm2071, %v2074, %v2077
  %v2079 = vsel %vm2069, nan, %v2078
  %v2080 = vand.u32 2147483647, %v1860
  %vm2081 = vcmp.le.f32.partialorder %v2080, 0.7853982
  %vm2082 = vcmp.lt.s32.totalorder %v1860, 0
  %v2083 = vand.u32 %v1860, 2139095040
  %v2084 = vshrl.u32 %v2083, 23
  %v2085 = vsub.s32 %v2084, 127
  %v2086 = vand.u32 2147483647, %v1860
  %v2087 = vand.u32 %v2086, 8388607
  %v2088 = vor.u32 %v2087, 8388608
  %v2089 = vsub.s32 0, %v2088
  %v2090 = vadd.s32 %v2085, 1
  %vm2091 = vcmp.gt.s32.totalorder %v2090, 0
  %v2092 = vsel %vm2091, %v2090, 0
  %v2093 = vshrl.u32 %v2092, 5
  %v2094 = vand.u32 %v2092, 31
  %v2095 = vsub.s32 32, %v2094
  %v2096 = vshrl.u32 683565275, %v2095
  %v2097 = vshll.u32 683565275, %v2094
  %v2098 = vshrl.u32 2475754826, %v2095
  %v2099 = vor.u32 %v2097, %v2098
  %v2100 = vshll.u32 2475754826, %v2094
  %v2101 = vshrl.u32 2131351028, %v2095
  %v2102 = vor.u32 %v2100, %v2101
  %v2103 = vshll.u32 2131351028, %v2094
  %v2104 = vshrl.u32 2102212464, %v2095
  %v2105 = vor.u32 %v2103, %v2104
  %v2106 = vshll.u32 2102212464, %v2094
  %v2107 = vshrl.u32 920167782, %v2095
  %v2108 = vor.u32 %v2106, %v2107
  %v2109 = vshll.u32 920167782, %v2094
  %v2110 = vshrl.u32 1326507024, %v2095
  %v2111 = vor.u32 %v2109, %v2110
  %vm2112 = vcmp.lt.s32.totalorder %v2093, 1
  %vm2113 = vcmp.lt.s32.totalorder %v2093, 2
  %vm2114 = vcmp.lt.s32.totalorder %v2093, 3
  %vm2115 = vcmp.lt.s32.totalorder %v2093, 4
  %v2116 = vsel %vm2112, %v2096, %v2099
  %v2117 = vsel %vm2115, %v2105, 2102212464
  %v2118 = vsel %vm2114, %v2102, %v2117
  %v2119 = vsel %vm2113, %v2116, %v2118
  %v2120 = vsel %vm2112, %v2099, %v2102
  %v2121 = vsel %vm2115, %v2108, 920167782
  %v2122 = vsel %vm2114, %v2105, %v2121
  %v2123 = vsel %vm2113, %v2120, %v2122
  %v2124 = vsel %vm2112, %v2102, %v2105
  %v2125 = vsel %vm2115, %v2111, 1326507024
  %v2126 = vsel %vm2114, %v2108, %v2125
  %v2127 = vsel %vm2113, %v2124, %v2126
  %v2128 = vshll.u32 %v2088, 8
  %v2129 = vmul.u32.u64.compose %v2128, %v2127
  %v2130 = vextract.low.u32 %v2129
  %v2131 = vextract.high.u32 %v2129
  %v2132 = vmul.u32.u64.compose %v2128, %v2123
  %v2133 = vextract.low.u32 %v2132
  %v2134 = vextract.high.u32 %v2132
  %v2135 = vmul.u32 %v2128, %v2119
  %v2136 = vadd.s32 %v2131, %v2133
  %vm2137 = vc.u32 %v2131, %v2133
  %v2138 = vadd.s32 %v2134, 1
  %v2139 = vsel %vm2137, %v2138, %v2134
  %v2140 = vadd.s32 %v2135, %v2139
  %v2141 = vadd.s32 %v2140, 536870912
  %v2142 = vshrl.u32 %v2141, 30
  %v2143 = vshll.u32 %v2142, 30
  %v2144 = vsub.s32 %v2140, %v2143
  %vm2145 = vcmp.lt.s32.totalorder %v2144, 0
  %v2146 = vsub.s32 0, %v2144
  %v2147 = vsel %vm2145, %v2146, %v2144
  %v2148 = vclz %v2147
  %v2149 = vsub.s32 %v2148, 2
  %vm2150 = vcmp.gt.s32.totalorder 0, %v2149
  %v2151 = vsel %vm2150, 0, %v2149
  %v2152 = vsub.s32 32, %v2151
  %v2153 = vshll.u32 %v2144, %v2151
  %v2154 = vshrl.u32 %v2136, %v2152
  %v2155 = vor.u32 %v2153, %v2154
  %v2156 = vsub.s32 4294967266, %v2151
  %v2157 = vadd.s32 %v2156, 127
  %v2158 = vshll.u32 %v2157, 23
  %v2159 = vor.u32 4788187, %v2158
  %v2160 = vand.u32 2147483647, %v2159
  %v2162 = vcvt.s32.f32 %v2155
  %v2163 = vmul.f32 %v2162, %v2160
  %v2164 = vxor.u32 %v2163, 2147483648
  %v2165 = vsel %vm2082, %v2164, %v2163
  %v2166 = vsub.s32 4, %v2142
  %v2167 = vsel %vm2082, %v2166, %v2142
  %v2168 = vsel %vm2081, %v1860, %v2165
  %v2169 = vsel %vm2081, 0, %v2167
  %v2170 = vcosq.f32.pop %v2168
  %v2171 = vsinq.f32.pop %v2168
  %vm2172 = vweird.f32 %v1860
  %v2173 = vand.u32 %v2169, 3
  %vm2174 = vcmp.lt.s32.totalorder %v2173, 2
  %vm2175 = vcmp.eq.s32.totalorder %v2173, 0
  %v2176 = vxor.u32 %v2171, 2147483648
  %v2177 = vsel %vm2175, %v2170, %v2176
  %vm2178 = vcmp.eq.s32.totalorder %v2173, 2
  %v2179 = vxor.u32 %v2170, 2147483648
  %v2180 = vsel %vm2178, %v2179, %v2171
  %v2181 = vsel %vm2174, %v2177, %v2180
  %v2182 = vsel %vm2172, nan, %v2181
  %v2183 = vand.u32 2147483647, %v1861
  %vm2184 = vcmp.le.f32.partialorder %v2183, 0.7853982
  %vm2185 = vcmp.lt.s32.totalorder %v1861, 0
  %v2186 = vand.u32 %v1861, 2139095040
  %v2187 = vshrl.u32 %v2186, 23
  %v2188 = vsub.s32 %v2187, 127
  %v2189 = vand.u32 2147483647, %v1861
  %v2190 = vand.u32 %v2189, 8388607
  %v2191 = vor.u32 %v2190, 8388608
  %v2192 = vsub.s32 0, %v2191
  %v2193 = vadd.s32 %v2188, 1
  %vm2194 = vcmp.gt.s32.totalorder %v2193, 0
  %v2195 = vsel %vm2194, %v2193, 0
  %v2196 = vshrl.u32 %v2195, 5
  %v2197 = vand.u32 %v2195, 31
  %v2198 = vsub.s32 32, %v2197
  %v2199 = vshrl.u32 683565275, %v2198
  %v2200 = vshll.u32 683565275, %v2197
  %v2201 = vshrl.u32 2475754826, %v2198
  %v2202 = vor.u32 %v2200, %v2201
  %v2203 = vshll.u32 2475754826, %v2197
  %v2204 = vshrl.u32 2131351028, %v2198
  %v2205 = vor.u32 %v2203, %v2204
  %v2206 = vshll.u32 2131351028, %v2197
  %v2207 = vshrl.u32 2102212464, %v2198
  %v2208 = vor.u32 %v2206, %v2207
  %v2209 = vshll.u32 2102212464, %v2197
  %v2210 = vshrl.u32 920167782, %v2198
  %v2211 = vor.u32 %v2209, %v2210
  %v2212 = vshll.u32 920167782, %v2197
  %v2213 = vshrl.u32 1326507024, %v2198
  %v2214 = vor.u32 %v2212, %v2213
  %vm2215 = vcmp.lt.s32.totalorder %v2196, 1
  %vm2216 = vcmp.lt.s32.totalorder %v2196, 2
  %vm2217 = vcmp.lt.s32.totalorder %v2196, 3
  %vm2218 = vcmp.lt.s32.totalorder %v2196, 4
  %v2219 = vsel %vm2215, %v2199, %v2202
  %v2220 = vsel %vm2218, %v2208, 2102212464
  %v2221 = vsel %vm2217, %v2205, %v2220
  %v2222 = vsel %vm2216, %v2219, %v2221
  %v2223 = vsel %vm2215, %v2202, %v2205
  %v2224 = vsel %vm2218, %v2211, 920167782
  %v2225 = vsel %vm2217, %v2208, %v2224
  %v2226 = vsel %vm2216, %v2223, %v2225
  %v2227 = vsel %vm2215, %v2205, %v2208
  %v2228 = vsel %vm2218, %v2214, 1326507024
  %v2229 = vsel %vm2217, %v2211, %v2228
  %v2230 = vsel %vm2216, %v2227, %v2229
  %v2231 = vshll.u32 %v2191, 8
  %v2232 = vmul.u32.u64.compose %v2231, %v2230
  %v2233 = vextract.low.u32 %v2232
  %v2234 = vextract.high.u32 %v2232
  %v2235 = vmul.u32.u64.compose %v2231, %v2226
  %v2236 = vextract.low.u32 %v2235
  %v2237 = vextract.high.u32 %v2235
  %v2238 = vmul.u32 %v2231, %v2222
  %v2239 = vadd.s32 %v2234, %v2236
  %vm2240 = vc.u32 %v2234, %v2236
  %v2241 = vadd.s32 %v2237, 1
  %v2242 = vsel %vm2240, %v2241, %v2237
  %v2243 = vadd.s32 %v2238, %v2242
  %v2244 = vadd.s32 %v2243, 536870912
  %v2245 = vshrl.u32 %v2244, 30
  %v2246 = vshll.u32 %v2245, 30
  %v2247 = vsub.s32 %v2243, %v2246
  %vm2248 = vcmp.lt.s32.totalorder %v2247, 0
  %v2249 = vsub.s32 0, %v2247
  %v2250 = vsel %vm2248, %v2249, %v2247
  %v2251 = vclz %v2250
  %v2252 = vsub.s32 %v2251, 2
  %vm2253 = vcmp.gt.s32.totalorder 0, %v2252
  %v2254 = vsel %vm2253, 0, %v2252
  %v2255 = vsub.s32 32, %v2254
  %v2256 = vshll.u32 %v2247, %v2254
  %v2257 = vshrl.u32 %v2239, %v2255
  %v2258 = vor.u32 %v2256, %v2257
  %v2259 = vsub.s32 4294967266, %v2254
  %v2260 = vadd.s32 %v2259, 127
  %v2261 = vshll.u32 %v2260, 23
  %v2262 = vor.u32 4788187, %v2261
  %v2263 = vand.u32 2147483647, %v2262
  %v2265 = vcvt.s32.f32 %v2258
  %v2266 = vmul.f32 %v2265, %v2263
  %v2267 = vxor.u32 %v2266, 2147483648
  %v2268 = vsel %vm2185, %v2267, %v2266
  %v2269 = vsub.s32 4, %v2245
  %v2270 = vsel %vm2185, %v2269, %v2245
  %v2271 = vsel %vm2184, %v1861, %v2268
  %v2272 = vsel %vm2184, 0, %v2270
  %v2273 = vcosq.f32.pop %v2271
  %v2274 = vsinq.f32.pop %v2271
  %vm2275 = vweird.f32 %v1861
  %v2276 = vand.u32 %v2272, 3
  %vm2277 = vcmp.lt.s32.totalorder %v2276, 2
  %vm2278 = vcmp.eq.s32.totalorder %v2276, 0
  %v2279 = vxor.u32 %v2274, 2147483648
  %v2280 = vsel %vm2278, %v2273, %v2279
  %vm2281 = vcmp.eq.s32.totalorder %v2276, 2
  %v2282 = vxor.u32 %v2273, 2147483648
  %v2283 = vsel %vm2281, %v2282, %v2274
  %v2284 = vsel %vm2277, %v2280, %v2283
  %v2285 = vsel %vm2275, nan, %v2284
  %v2286 = vand.u32 2147483647, %v1862
  %vm2287 = vcmp.le.f32.partialorder %v2286, 0.7853982
  %vm2288 = vcmp.lt.s32.totalorder %v1862, 0
  %v2289 = vand.u32 %v1862, 2139095040
  %v2290 = vshrl.u32 %v2289, 23
  %v2291 = vsub.s32 %v2290, 127
  %v2292 = vand.u32 2147483647, %v1862
  %v2293 = vand.u32 %v2292, 8388607
  %v2294 = vor.u32 %v2293, 8388608
  %v2295 = vsub.s32 0, %v2294
  %v2296 = vadd.s32 %v2291, 1
  %vm2297 = vcmp.gt.s32.totalorder %v2296, 0
  %v2298 = vsel %vm2297, %v2296, 0
  %v2299 = vshrl.u32 %v2298, 5
  %v2300 = vand.u32 %v2298, 31
  %v2301 = vsub.s32 32, %v2300
  %v2302 = vshrl.u32 683565275, %v2301
  %v2303 = vshll.u32 683565275, %v2300
  %v2304 = vshrl.u32 2475754826, %v2301
  %v2305 = vor.u32 %v2303, %v2304
  %v2306 = vshll.u32 2475754826, %v2300
  %v2307 = vshrl.u32 2131351028, %v2301
  %v2308 = vor.u32 %v2306, %v2307
  %v2309 = vshll.u32 2131351028, %v2300
  %v2310 = vshrl.u32 2102212464, %v2301
  %v2311 = vor.u32 %v2309, %v2310
  %v2312 = vshll.u32 2102212464, %v2300
  %v2313 = vshrl.u32 920167782, %v2301
  %v2314 = vor.u32 %v2312, %v2313
  %v2315 = vshll.u32 920167782, %v2300
  %v2316 = vshrl.u32 1326507024, %v2301
  %v2317 = vor.u32 %v2315, %v2316
  %vm2318 = vcmp.lt.s32.totalorder %v2299, 1
  %vm2319 = vcmp.lt.s32.totalorder %v2299, 2
  %vm2320 = vcmp.lt.s32.totalorder %v2299, 3
  %vm2321 = vcmp.lt.s32.totalorder %v2299, 4
  %v2322 = vsel %vm2318, %v2302, %v2305
  %v2323 = vsel %vm2321, %v2311, 2102212464
  %v2324 = vsel %vm2320, %v2308, %v2323
  %v2325 = vsel %vm2319, %v2322, %v2324
  %v2326 = vsel %vm2318, %v2305, %v2308
  %v2327 = vsel %vm2321, %v2314, 920167782
  %v2328 = vsel %vm2320, %v2311, %v2327
  %v2329 = vsel %vm2319, %v2326, %v2328
  %v2330 = vsel %vm2318, %v2308, %v2311
  %v2331 = vsel %vm2321, %v2317, 1326507024
  %v2332 = vsel %vm2320, %v2314, %v2331
  %v2333 = vsel %vm2319, %v2330, %v2332
  %v2334 = vshll.u32 %v2294, 8
  %v2335 = vmul.u32.u64.compose %v2334, %v2333
  %v2336 = vextract.low.u32 %v2335
  %v2337 = vextract.high.u32 %v2335
  %v2338 = vmul.u32.u64.compose %v2334, %v2329
  %v2339 = vextract.low.u32 %v2338
  %v2340 = vextract.high.u32 %v2338
  %v2341 = vmul.u32 %v2334, %v2325
  %v2342 = vadd.s32 %v2337, %v2339
  %vm2343 = vc.u32 %v2337, %v2339
  %v2344 = vadd.s32 %v2340, 1
  %v2345 = vsel %vm2343, %v2344, %v2340
  %v2346 = vadd.s32 %v2341, %v2345
  %v2347 = vadd.s32 %v2346, 536870912
  %v2348 = vshrl.u32 %v2347, 30
  %v2349 = vshll.u32 %v2348, 30
  %v2350 = vsub.s32 %v2346, %v2349
  %vm2351 = vcmp.lt.s32.totalorder %v2350, 0
  %v2352 = vsub.s32 0, %v2350
  %v2353 = vsel %vm2351, %v2352, %v2350
  %v2354 = vclz %v2353
  %v2355 = vsub.s32 %v2354, 2
  %vm2356 = vcmp.gt.s32.totalorder 0, %v2355
  %v2357 = vsel %vm2356, 0, %v2355
  %v2358 = vsub.s32 32, %v2357
  %v2359 = vshll.u32 %v2350, %v2357
  %v2360 = vshrl.u32 %v2342, %v2358
  %v2361 = vor.u32 %v2359, %v2360
  %v2362 = vsub.s32 4294967266, %v2357
  %v2363 = vadd.s32 %v2362, 127
  %v2364 = vshll.u32 %v2363, 23
  %v2365 = vor.u32 4788187, %v2364
  %v2366 = vand.u32 2147483647, %v2365
  %v2368 = vcvt.s32.f32 %v2361
  %v2369 = vmul.f32 %v2368, %v2366
  %v2370 = vxor.u32 %v2369, 2147483648
  %v2371 = vsel %vm2288, %v2370, %v2369
  %v2372 = vsub.s32 4, %v2348
  %v2373 = vsel %vm2288, %v2372, %v2348
  %v2374 = vsel %vm2287, %v1862, %v2371
  %v2375 = vsel %vm2287, 0, %v2373
  %v2376 = vcosq.f32.pop %v2374
  %v2377 = vsinq.f32.pop %v2374
  %vm2378 = vweird.f32 %v1862
  %v2379 = vand.u32 %v2375, 3
  %vm2380 = vcmp.lt.s32.totalorder %v2379, 2
  %vm2381 = vcmp.eq.s32.totalorder %v2379, 0
  %v2382 = vxor.u32 %v2377, 2147483648
  %v2383 = vsel %vm2381, %v2376, %v2382
  %vm2384 = vcmp.eq.s32.totalorder %v2379, 2
  %v2385 = vxor.u32 %v2376, 2147483648
  %v2386 = vsel %vm2384, %v2385, %v2377
  %v2387 = vsel %vm2380, %v2383, %v2386
  %v2388 = vsel %vm2378, nan, %v2387
  %v2389 = vand.u32 2147483647, %v1863
  %vm2390 = vcmp.le.f32.partialorder %v2389, 0.7853982
  %vm2391 = vcmp.lt.s32.totalorder %v1863, 0
  %v2392 = vand.u32 %v1863, 2139095040
  %v2393 = vshrl.u32 %v2392, 23
  %v2394 = vsub.s32 %v2393, 127
  %v2395 = vand.u32 2147483647, %v1863
  %v2396 = vand.u32 %v2395, 8388607
  %v2397 = vor.u32 %v2396, 8388608
  %v2398 = vsub.s32 0, %v2397
  %v2399 = vadd.s32 %v2394, 1
  %vm2400 = vcmp.gt.s32.totalorder %v2399, 0
  %v2401 = vsel %vm2400, %v2399, 0
  %v2402 = vshrl.u32 %v2401, 5
  %v2403 = vand.u32 %v2401, 31
  %v2404 = vsub.s32 32, %v2403
  %v2405 = vshrl.u32 683565275, %v2404
  %v2406 = vshll.u32 683565275, %v2403
  %v2407 = vshrl.u32 2475754826, %v2404
  %v2408 = vor.u32 %v2406, %v2407
  %v2409 = vshll.u32 2475754826, %v2403
  %v2410 = vshrl.u32 2131351028, %v2404
  %v2411 = vor.u32 %v2409, %v2410
  %v2412 = vshll.u32 2131351028, %v2403
  %v2413 = vshrl.u32 2102212464, %v2404
  %v2414 = vor.u32 %v2412, %v2413
  %v2415 = vshll.u32 2102212464, %v2403
  %v2416 = vshrl.u32 920167782, %v2404
  %v2417 = vor.u32 %v2415, %v2416
  %v2418 = vshll.u32 920167782, %v2403
  %v2419 = vshrl.u32 1326507024, %v2404
  %v2420 = vor.u32 %v2418, %v2419
  %vm2421 = vcmp.lt.s32.totalorder %v2402, 1
  %vm2422 = vcmp.lt.s32.totalorder %v2402, 2
  %vm2423 = vcmp.lt.s32.totalorder %v2402, 3
  %vm2424 = vcmp.lt.s32.totalorder %v2402, 4
  %v2425 = vsel %vm2421, %v2405, %v2408
  %v2426 = vsel %vm2424, %v2414, 2102212464
  %v2427 = vsel %vm2423, %v2411, %v2426
  %v2428 = vsel %vm2422, %v2425, %v2427
  %v2429 = vsel %vm2421, %v2408, %v2411
  %v2430 = vsel %vm2424, %v2417, 920167782
  %v2431 = vsel %vm2423, %v2414, %v2430
  %v2432 = vsel %vm2422, %v2429, %v2431
  %v2433 = vsel %vm2421, %v2411, %v2414
  %v2434 = vsel %vm2424, %v2420, 1326507024
  %v2435 = vsel %vm2423, %v2417, %v2434
  %v2436 = vsel %vm2422, %v2433, %v2435
  %v2437 = vshll.u32 %v2397, 8
  %v2438 = vmul.u32.u64.compose %v2437, %v2436
  %v2439 = vextract.low.u32 %v2438
  %v2440 = vextract.high.u32 %v2438
  %v2441 = vmul.u32.u64.compose %v2437, %v2432
  %v2442 = vextract.low.u32 %v2441
  %v2443 = vextract.high.u32 %v2441
  %v2444 = vmul.u32 %v2437, %v2428
  %v2445 = vadd.s32 %v2440, %v2442
  %vm2446 = vc.u32 %v2440, %v2442
  %v2447 = vadd.s32 %v2443, 1
  %v2448 = vsel %vm2446, %v2447, %v2443
  %v2449 = vadd.s32 %v2444, %v2448
  %v2450 = vadd.s32 %v2449, 536870912
  %v2451 = vshrl.u32 %v2450, 30
  %v2452 = vshll.u32 %v2451, 30
  %v2453 = vsub.s32 %v2449, %v2452
  %vm2454 = vcmp.lt.s32.totalorder %v2453, 0
  %v2455 = vsub.s32 0, %v2453
  %v2456 = vsel %vm2454, %v2455, %v2453
  %v2457 = vclz %v2456
  %v2458 = vsub.s32 %v2457, 2
  %vm2459 = vcmp.gt.s32.totalorder 0, %v2458
  %v2460 = vsel %vm2459, 0, %v2458
  %v2461 = vsub.s32 32, %v2460
  %v2462 = vshll.u32 %v2453, %v2460
  %v2463 = vshrl.u32 %v2445, %v2461
  %v2464 = vor.u32 %v2462, %v2463
  %v2465 = vsub.s32 4294967266, %v2460
  %v2466 = vadd.s32 %v2465, 127
  %v2467 = vshll.u32 %v2466, 23
  %v2468 = vor.u32 4788187, %v2467
  %v2469 = vand.u32 2147483647, %v2468
  %v2471 = vcvt.s32.f32 %v2464
  %v2472 = vmul.f32 %v2471, %v2469
  %v2473 = vxor.u32 %v2472, 2147483648
  %v2474 = vsel %vm2391, %v2473, %v2472
  %v2475 = vsub.s32 4, %v2451
  %v2476 = vsel %vm2391, %v2475, %v2451
  %v2477 = vsel %vm2390, %v1863, %v2474
  %v2478 = vsel %vm2390, 0, %v2476
  %v2479 = vcosq.f32.pop %v2477
  %v2480 = vsinq.f32.pop %v2477
  %vm2481 = vweird.f32 %v1863
  %v2482 = vand.u32 %v2478, 3
  %vm2483 = vcmp.lt.s32.totalorder %v2482, 2
  %vm2484 = vcmp.eq.s32.totalorder %v2482, 0
  %v2485 = vxor.u32 %v2480, 2147483648
  %v2486 = vsel %vm2484, %v2479, %v2485
  %vm2487 = vcmp.eq.s32.totalorder %v2482, 2
  %v2488 = vxor.u32 %v2479, 2147483648
  %v2489 = vsel %vm2487, %v2488, %v2480
  %v2490 = vsel %vm2483, %v2486, %v2489
  %v2491 = vsel %vm2481, nan, %v2490
  %v2492 = vand.u32 2147483647, %v1864
  %vm2493 = vcmp.le.f32.partialorder %v2492, 0.7853982
  %vm2494 = vcmp.lt.s32.totalorder %v1864, 0
  %v2495 = vand.u32 %v1864, 2139095040
  %v2496 = vshrl.u32 %v2495, 23
  %v2497 = vsub.s32 %v2496, 127
  %v2498 = vand.u32 2147483647, %v1864
  %v2499 = vand.u32 %v2498, 8388607
  %v2500 = vor.u32 %v2499, 8388608
  %v2501 = vsub.s32 0, %v2500
  %v2502 = vadd.s32 %v2497, 1
  %vm2503 = vcmp.gt.s32.totalorder %v2502, 0
  %v2504 = vsel %vm2503, %v2502, 0
  %v2505 = vshrl.u32 %v2504, 5
  %v2506 = vand.u32 %v2504, 31
  %v2507 = vsub.s32 32, %v2506
  %v2508 = vshrl.u32 683565275, %v2507
  %v2509 = vshll.u32 683565275, %v2506
  %v2510 = vshrl.u32 2475754826, %v2507
  %v2511 = vor.u32 %v2509, %v2510
  %v2512 = vshll.u32 2475754826, %v2506
  %v2513 = vshrl.u32 2131351028, %v2507
  %v2514 = vor.u32 %v2512, %v2513
  %v2515 = vshll.u32 2131351028, %v2506
  %v2516 = vshrl.u32 2102212464, %v2507
  %v2517 = vor.u32 %v2515, %v2516
  %v2518 = vshll.u32 2102212464, %v2506
  %v2519 = vshrl.u32 920167782, %v2507
  %v2520 = vor.u32 %v2518, %v2519
  %v2521 = vshll.u32 920167782, %v2506
  %v2522 = vshrl.u32 1326507024, %v2507
  %v2523 = vor.u32 %v2521, %v2522
  %vm2524 = vcmp.lt.s32.totalorder %v2505, 1
  %vm2525 = vcmp.lt.s32.totalorder %v2505, 2
  %vm2526 = vcmp.lt.s32.totalorder %v2505, 3
  %vm2527 = vcmp.lt.s32.totalorder %v2505, 4
  %v2528 = vsel %vm2524, %v2508, %v2511
  %v2529 = vsel %vm2527, %v2517, 2102212464
  %v2530 = vsel %vm2526, %v2514, %v2529
  %v2531 = vsel %vm2525, %v2528, %v2530
  %v2532 = vsel %vm2524, %v2511, %v2514
  %v2533 = vsel %vm2527, %v2520, 920167782
  %v2534 = vsel %vm2526, %v2517, %v2533
  %v2535 = vsel %vm2525, %v2532, %v2534
  %v2536 = vsel %vm2524, %v2514, %v2517
  %v2537 = vsel %vm2527, %v2523, 1326507024
  %v2538 = vsel %vm2526, %v2520, %v2537
  %v2539 = vsel %vm2525, %v2536, %v2538
  %v2540 = vshll.u32 %v2500, 8
  %v2541 = vmul.u32.u64.compose %v2540, %v2539
  %v2542 = vextract.low.u32 %v2541
  %v2543 = vextract.high.u32 %v2541
  %v2544 = vmul.u32.u64.compose %v2540, %v2535
  %v2545 = vextract.low.u32 %v2544
  %v2546 = vextract.high.u32 %v2544
  %v2547 = vmul.u32 %v2540, %v2531
  %v2548 = vadd.s32 %v2543, %v2545
  %vm2549 = vc.u32 %v2543, %v2545
  %v2550 = vadd.s32 %v2546, 1
  %v2551 = vsel %vm2549, %v2550, %v2546
  %v2552 = vadd.s32 %v2547, %v2551
  %v2553 = vadd.s32 %v2552, 536870912
  %v2554 = vshrl.u32 %v2553, 30
  %v2555 = vshll.u32 %v2554, 30
  %v2556 = vsub.s32 %v2552, %v2555
  %vm2557 = vcmp.lt.s32.totalorder %v2556, 0
  %v2558 = vsub.s32 0, %v2556
  %v2559 = vsel %vm2557, %v2558, %v2556
  %v2560 = vclz %v2559
  %v2561 = vsub.s32 %v2560, 2
  %vm2562 = vcmp.gt.s32.totalorder 0, %v2561
  %v2563 = vsel %vm2562, 0, %v2561
  %v2564 = vsub.s32 32, %v2563
  %v2565 = vshll.u32 %v2556, %v2563
  %v2566 = vshrl.u32 %v2548, %v2564
  %v2567 = vor.u32 %v2565, %v2566
  %v2568 = vsub.s32 4294967266, %v2563
  %v2569 = vadd.s32 %v2568, 127
  %v2570 = vshll.u32 %v2569, 23
  %v2571 = vor.u32 4788187, %v2570
  %v2572 = vand.u32 2147483647, %v2571
  %v2574 = vcvt.s32.f32 %v2567
  %v2575 = vmul.f32 %v2574, %v2572
  %v2576 = vxor.u32 %v2575, 2147483648
  %v2577 = vsel %vm2494, %v2576, %v2575
  %v2578 = vsub.s32 4, %v2554
  %v2579 = vsel %vm2494, %v2578, %v2554
  %v2580 = vsel %vm2493, %v1864, %v2577
  %v2581 = vsel %vm2493, 0, %v2579
  %v2582 = vcosq.f32.pop %v2580
  %v2583 = vsinq.f32.pop %v2580
  %vm2584 = vweird.f32 %v1864
  %v2585 = vand.u32 %v2581, 3
  %vm2586 = vcmp.lt.s32.totalorder %v2585, 2
  %vm2587 = vcmp.eq.s32.totalorder %v2585, 0
  %v2588 = vxor.u32 %v2583, 2147483648
  %v2589 = vsel %vm2587, %v2582, %v2588
  %vm2590 = vcmp.eq.s32.totalorder %v2585, 2
  %v2591 = vxor.u32 %v2582, 2147483648
  %v2592 = vsel %vm2590, %v2591, %v2583
  %v2593 = vsel %vm2586, %v2589, %v2592
  %v2594 = vsel %vm2584, nan, %v2593
  %v2595 = vand.u32 2147483647, %v1865
  %vm2596 = vcmp.le.f32.partialorder %v2595, 0.7853982
  %vm2597 = vcmp.lt.s32.totalorder %v1865, 0
  %v2598 = vand.u32 %v1865, 2139095040
  %v2599 = vshrl.u32 %v2598, 23
  %v2600 = vsub.s32 %v2599, 127
  %v2601 = vand.u32 2147483647, %v1865
  %v2602 = vand.u32 %v2601, 8388607
  %v2603 = vor.u32 %v2602, 8388608
  %v2604 = vsub.s32 0, %v2603
  %v2605 = vadd.s32 %v2600, 1
  %vm2606 = vcmp.gt.s32.totalorder %v2605, 0
  %v2607 = vsel %vm2606, %v2605, 0
  %v2608 = vshrl.u32 %v2607, 5
  %v2609 = vand.u32 %v2607, 31
  %v2610 = vsub.s32 32, %v2609
  %v2611 = vshrl.u32 683565275, %v2610
  %v2612 = vshll.u32 683565275, %v2609
  %v2613 = vshrl.u32 2475754826, %v2610
  %v2614 = vor.u32 %v2612, %v2613
  %v2615 = vshll.u32 2475754826, %v2609
  %v2616 = vshrl.u32 2131351028, %v2610
  %v2617 = vor.u32 %v2615, %v2616
  %v2618 = vshll.u32 2131351028, %v2609
  %v2619 = vshrl.u32 2102212464, %v2610
  %v2620 = vor.u32 %v2618, %v2619
  %v2621 = vshll.u32 2102212464, %v2609
  %v2622 = vshrl.u32 920167782, %v2610
  %v2623 = vor.u32 %v2621, %v2622
  %v2624 = vshll.u32 920167782, %v2609
  %v2625 = vshrl.u32 1326507024, %v2610
  %v2626 = vor.u32 %v2624, %v2625
  %vm2627 = vcmp.lt.s32.totalorder %v2608, 1
  %vm2628 = vcmp.lt.s32.totalorder %v2608, 2
  %vm2629 = vcmp.lt.s32.totalorder %v2608, 3
  %vm2630 = vcmp.lt.s32.totalorder %v2608, 4
  %v2631 = vsel %vm2627, %v2611, %v2614
  %v2632 = vsel %vm2630, %v2620, 2102212464
  %v2633 = vsel %vm2629, %v2617, %v2632
  %v2634 = vsel %vm2628, %v2631, %v2633
  %v2635 = vsel %vm2627, %v2614, %v2617
  %v2636 = vsel %vm2630, %v2623, 920167782
  %v2637 = vsel %vm2629, %v2620, %v2636
  %v2638 = vsel %vm2628, %v2635, %v2637
  %v2639 = vsel %vm2627, %v2617, %v2620
  %v2640 = vsel %vm2630, %v2626, 1326507024
  %v2641 = vsel %vm2629, %v2623, %v2640
  %v2642 = vsel %vm2628, %v2639, %v2641
  %v2643 = vshll.u32 %v2603, 8
  %v2644 = vmul.u32.u64.compose %v2643, %v2642
  %v2645 = vextract.low.u32 %v2644
  %v2646 = vextract.high.u32 %v2644
  %v2647 = vmul.u32.u64.compose %v2643, %v2638
  %v2648 = vextract.low.u32 %v2647
  %v2649 = vextract.high.u32 %v2647
  %v2650 = vmul.u32 %v2643, %v2634
  %v2651 = vadd.s32 %v2646, %v2648
  %vm2652 = vc.u32 %v2646, %v2648
  %v2653 = vadd.s32 %v2649, 1
  %v2654 = vsel %vm2652, %v2653, %v2649
  %v2655 = vadd.s32 %v2650, %v2654
  %v2656 = vadd.s32 %v2655, 536870912
  %v2657 = vshrl.u32 %v2656, 30
  %v2658 = vshll.u32 %v2657, 30
  %v2659 = vsub.s32 %v2655, %v2658
  %vm2660 = vcmp.lt.s32.totalorder %v2659, 0
  %v2661 = vsub.s32 0, %v2659
  %v2662 = vsel %vm2660, %v2661, %v2659
  %v2663 = vclz %v2662
  %v2664 = vsub.s32 %v2663, 2
  %vm2665 = vcmp.gt.s32.totalorder 0, %v2664
  %v2666 = vsel %vm2665, 0, %v2664
  %v2667 = vsub.s32 32, %v2666
  %v2668 = vshll.u32 %v2659, %v2666
  %v2669 = vshrl.u32 %v2651, %v2667
  %v2670 = vor.u32 %v2668, %v2669
  %v2671 = vsub.s32 4294967266, %v2666
  %v2672 = vadd.s32 %v2671, 127
  %v2673 = vshll.u32 %v2672, 23
  %v2674 = vor.u32 4788187, %v2673
  %v2675 = vand.u32 2147483647, %v2674
  %v2677 = vcvt.s32.f32 %v2670
  %v2678 = vmul.f32 %v2677, %v2675
  %v2679 = vxor.u32 %v2678, 2147483648
  %v2680 = vsel %vm2597, %v2679, %v2678
  %v2681 = vsub.s32 4, %v2657
  %v2682 = vsel %vm2597, %v2681, %v2657
  %v2683 = vsel %vm2596, %v1865, %v2680
  %v2684 = vsel %vm2596, 0, %v2682
  %v2685 = vcosq.f32.pop %v2683
  %v2686 = vsinq.f32.pop %v2683
  %vm2687 = vweird.f32 %v1865
  %v2688 = vand.u32 %v2684, 3
  %vm2689 = vcmp.lt.s32.totalorder %v2688, 2
  %vm2690 = vcmp.eq.s32.totalorder %v2688, 0
  %v2691 = vxor.u32 %v2686, 2147483648
  %v2692 = vsel %vm2690, %v2685, %v2691
  %vm2693 = vcmp.eq.s32.totalorder %v2688, 2
  %v2694 = vxor.u32 %v2685, 2147483648
  %v2695 = vsel %vm2693, %v2694, %v2686
  %v2696 = vsel %vm2689, %v2692, %v2695
  %v2697 = vsel %vm2687, nan, %v2696
  %v2698 = vand.u32 2147483647, %v1866
  %vm2699 = vcmp.le.f32.partialorder %v2698, 0.7853982
  %vm2700 = vcmp.lt.s32.totalorder %v1866, 0
  %v2701 = vand.u32 %v1866, 2139095040
  %v2702 = vshrl.u32 %v2701, 23
  %v2703 = vsub.s32 %v2702, 127
  %v2704 = vand.u32 2147483647, %v1866
  %v2705 = vand.u32 %v2704, 8388607
  %v2706 = vor.u32 %v2705, 8388608
  %v2707 = vsub.s32 0, %v2706
  %v2708 = vadd.s32 %v2703, 1
  %vm2709 = vcmp.gt.s32.totalorder %v2708, 0
  %v2710 = vsel %vm2709, %v2708, 0
  %v2711 = vshrl.u32 %v2710, 5
  %v2712 = vand.u32 %v2710, 31
  %v2713 = vsub.s32 32, %v2712
  %v2714 = vshrl.u32 683565275, %v2713
  %v2715 = vshll.u32 683565275, %v2712
  %v2716 = vshrl.u32 2475754826, %v2713
  %v2717 = vor.u32 %v2715, %v2716
  %v2718 = vshll.u32 2475754826, %v2712
  %v2719 = vshrl.u32 2131351028, %v2713
  %v2720 = vor.u32 %v2718, %v2719
  %v2721 = vshll.u32 2131351028, %v2712
  %v2722 = vshrl.u32 2102212464, %v2713
  %v2723 = vor.u32 %v2721, %v2722
  %v2724 = vshll.u32 2102212464, %v2712
  %v2725 = vshrl.u32 920167782, %v2713
  %v2726 = vor.u32 %v2724, %v2725
  %v2727 = vshll.u32 920167782, %v2712
  %v2728 = vshrl.u32 1326507024, %v2713
  %v2729 = vor.u32 %v2727, %v2728
  %vm2730 = vcmp.lt.s32.totalorder %v2711, 1
  %vm2731 = vcmp.lt.s32.totalorder %v2711, 2
  %vm2732 = vcmp.lt.s32.totalorder %v2711, 3
  %vm2733 = vcmp.lt.s32.totalorder %v2711, 4
  %v2734 = vsel %vm2730, %v2714, %v2717
  %v2735 = vsel %vm2733, %v2723, 2102212464
  %v2736 = vsel %vm2732, %v2720, %v2735
  %v2737 = vsel %vm2731, %v2734, %v2736
  %v2738 = vsel %vm2730, %v2717, %v2720
  %v2739 = vsel %vm2733, %v2726, 920167782
  %v2740 = vsel %vm2732, %v2723, %v2739
  %v2741 = vsel %vm2731, %v2738, %v2740
  %v2742 = vsel %vm2730, %v2720, %v2723
  %v2743 = vsel %vm2733, %v2729, 1326507024
  %v2744 = vsel %vm2732, %v2726, %v2743
  %v2745 = vsel %vm2731, %v2742, %v2744
  %v2746 = vshll.u32 %v2706, 8
  %v2747 = vmul.u32.u64.compose %v2746, %v2745
  %v2748 = vextract.low.u32 %v2747
  %v2749 = vextract.high.u32 %v2747
  %v2750 = vmul.u32.u64.compose %v2746, %v2741
  %v2751 = vextract.low.u32 %v2750
  %v2752 = vextract.high.u32 %v2750
  %v2753 = vmul.u32 %v2746, %v2737
  %v2754 = vadd.s32 %v2749, %v2751
  %vm2755 = vc.u32 %v2749, %v2751
  %v2756 = vadd.s32 %v2752, 1
  %v2757 = vsel %vm2755, %v2756, %v2752
  %v2758 = vadd.s32 %v2753, %v2757
  %v2759 = vadd.s32 %v2758, 536870912
  %v2760 = vshrl.u32 %v2759, 30
  %v2761 = vshll.u32 %v2760, 30
  %v2762 = vsub.s32 %v2758, %v2761
  %vm2763 = vcmp.lt.s32.totalorder %v2762, 0
  %v2764 = vsub.s32 0, %v2762
  %v2765 = vsel %vm2763, %v2764, %v2762
  %v2766 = vclz %v2765
  %v2767 = vsub.s32 %v2766, 2
  %vm2768 = vcmp.gt.s32.totalorder 0, %v2767
  %v2769 = vsel %vm2768, 0, %v2767
  %v2770 = vsub.s32 32, %v2769
  %v2771 = vshll.u32 %v2762, %v2769
  %v2772 = vshrl.u32 %v2754, %v2770
  %v2773 = vor.u32 %v2771, %v2772
  %v2774 = vsub.s32 4294967266, %v2769
  %v2775 = vadd.s32 %v2774, 127
  %v2776 = vshll.u32 %v2775, 23
  %v2777 = vor.u32 4788187, %v2776
  %v2778 = vand.u32 2147483647, %v2777
  %v2780 = vcvt.s32.f32 %v2773
  %v2781 = vmul.f32 %v2780, %v2778
  %v2782 = vxor.u32 %v2781, 2147483648
  %v2783 = vsel %vm2700, %v2782, %v2781
  %v2784 = vsub.s32 4, %v2760
  %v2785 = vsel %vm2700, %v2784, %v2760
  %v2786 = vsel %vm2699, %v1866, %v2783
  %v2787 = vsel %vm2699, 0, %v2785
  %v2788 = vcosq.f32.pop %v2786
  %v2789 = vsinq.f32.pop %v2786
  %vm2790 = vweird.f32 %v1866
  %v2791 = vand.u32 %v2787, 3
  %vm2792 = vcmp.lt.s32.totalorder %v2791, 2
  %vm2793 = vcmp.eq.s32.totalorder %v2791, 0
  %v2794 = vxor.u32 %v2789, 2147483648
  %v2795 = vsel %vm2793, %v2788, %v2794
  %vm2796 = vcmp.eq.s32.totalorder %v2791, 2
  %v2797 = vxor.u32 %v2788, 2147483648
  %v2798 = vsel %vm2796, %v2797, %v2789
  %v2799 = vsel %vm2792, %v2795, %v2798
  %v2800 = vsel %vm2790, nan, %v2799
  %v2801 = vand.u32 2147483647, %v1867
  %vm2802 = vcmp.le.f32.partialorder %v2801, 0.7853982
  %vm2803 = vcmp.lt.s32.totalorder %v1867, 0
  %v2804 = vand.u32 %v1867, 2139095040
  %v2805 = vshrl.u32 %v2804, 23
  %v2806 = vsub.s32 %v2805, 127
  %v2807 = vand.u32 2147483647, %v1867
  %v2808 = vand.u32 %v2807, 8388607
  %v2809 = vor.u32 %v2808, 8388608
  %v2810 = vsub.s32 0, %v2809
  %v2811 = vadd.s32 %v2806, 1
  %vm2812 = vcmp.gt.s32.totalorder %v2811, 0
  %v2813 = vsel %vm2812, %v2811, 0
  %v2814 = vshrl.u32 %v2813, 5
  %v2815 = vand.u32 %v2813, 31
  %v2816 = vsub.s32 32, %v2815
  %v2817 = vshrl.u32 683565275, %v2816
  %v2818 = vshll.u32 683565275, %v2815
  %v2819 = vshrl.u32 2475754826, %v2816
  %v2820 = vor.u32 %v2818, %v2819
  %v2821 = vshll.u32 2475754826, %v2815
  %v2822 = vshrl.u32 2131351028, %v2816
  %v2823 = vor.u32 %v2821, %v2822
  %v2824 = vshll.u32 2131351028, %v2815
  %v2825 = vshrl.u32 2102212464, %v2816
  %v2826 = vor.u32 %v2824, %v2825
  %v2827 = vshll.u32 2102212464, %v2815
  %v2828 = vshrl.u32 920167782, %v2816
  %v2829 = vor.u32 %v2827, %v2828
  %v2830 = vshll.u32 920167782, %v2815
  %v2831 = vshrl.u32 1326507024, %v2816
  %v2832 = vor.u32 %v2830, %v2831
  %vm2833 = vcmp.lt.s32.totalorder %v2814, 1
  %vm2834 = vcmp.lt.s32.totalorder %v2814, 2
  %vm2835 = vcmp.lt.s32.totalorder %v2814, 3
  %vm2836 = vcmp.lt.s32.totalorder %v2814, 4
  %v2837 = vsel %vm2833, %v2817, %v2820
  %v2838 = vsel %vm2836, %v2826, 2102212464
  %v2839 = vsel %vm2835, %v2823, %v2838
  %v2840 = vsel %vm2834, %v2837, %v2839
  %v2841 = vsel %vm2833, %v2820, %v2823
  %v2842 = vsel %vm2836, %v2829, 920167782
  %v2843 = vsel %vm2835, %v2826, %v2842
  %v2844 = vsel %vm2834, %v2841, %v2843
  %v2845 = vsel %vm2833, %v2823, %v2826
  %v2846 = vsel %vm2836, %v2832, 1326507024
  %v2847 = vsel %vm2835, %v2829, %v2846
  %v2848 = vsel %vm2834, %v2845, %v2847
  %v2849 = vshll.u32 %v2809, 8
  %v2850 = vmul.u32.u64.compose %v2849, %v2848
  %v2851 = vextract.low.u32 %v2850
  %v2852 = vextract.high.u32 %v2850
  %v2853 = vmul.u32.u64.compose %v2849, %v2844
  %v2854 = vextract.low.u32 %v2853
  %v2855 = vextract.high.u32 %v2853
  %v2856 = vmul.u32 %v2849, %v2840
  %v2857 = vadd.s32 %v2852, %v2854
  %vm2858 = vc.u32 %v2852, %v2854
  %v2859 = vadd.s32 %v2855, 1
  %v2860 = vsel %vm2858, %v2859, %v2855
  %v2861 = vadd.s32 %v2856, %v2860
  %v2862 = vadd.s32 %v2861, 536870912
  %v2863 = vshrl.u32 %v2862, 30
  %v2864 = vshll.u32 %v2863, 30
  %v2865 = vsub.s32 %v2861, %v2864
  %vm2866 = vcmp.lt.s32.totalorder %v2865, 0
  %v2867 = vsub.s32 0, %v2865
  %v2868 = vsel %vm2866, %v2867, %v2865
  %v2869 = vclz %v2868
  %v2870 = vsub.s32 %v2869, 2
  %vm2871 = vcmp.gt.s32.totalorder 0, %v2870
  %v2872 = vsel %vm2871, 0, %v2870
  %v2873 = vsub.s32 32, %v2872
  %v2874 = vshll.u32 %v2865, %v2872
  %v2875 = vshrl.u32 %v2857, %v2873
  %v2876 = vor.u32 %v2874, %v2875
  %v2877 = vsub.s32 4294967266, %v2872
  %v2878 = vadd.s32 %v2877, 127
  %v2879 = vshll.u32 %v2878, 23
  %v2880 = vor.u32 4788187, %v2879
  %v2881 = vand.u32 2147483647, %v2880
  %v2883 = vcvt.s32.f32 %v2876
  %v2884 = vmul.f32 %v2883, %v2881
  %v2885 = vxor.u32 %v2884, 2147483648
  %v2886 = vsel %vm2803, %v2885, %v2884
  %v2887 = vsub.s32 4, %v2863
  %v2888 = vsel %vm2803, %v2887, %v2863
  %v2889 = vsel %vm2802, %v1867, %v2886
  %v2890 = vsel %vm2802, 0, %v2888
  %v2891 = vcosq.f32.pop %v2889
  %v2892 = vsinq.f32.pop %v2889
  %vm2893 = vweird.f32 %v1867
  %v2894 = vand.u32 %v2890, 3
  %vm2895 = vcmp.lt.s32.totalorder %v2894, 2
  %vm2896 = vcmp.eq.s32.totalorder %v2894, 0
  %v2897 = vxor.u32 %v2892, 2147483648
  %v2898 = vsel %vm2896, %v2891, %v2897
  %vm2899 = vcmp.eq.s32.totalorder %v2894, 2
  %v2900 = vxor.u32 %v2891, 2147483648
  %v2901 = vsel %vm2899, %v2900, %v2892
  %v2902 = vsel %vm2895, %v2898, %v2901
  %v2903 = vsel %vm2893, nan, %v2902
  %v2904 = vand.u32 2147483647, %v1868
  %vm2905 = vcmp.le.f32.partialorder %v2904, 0.7853982
  %vm2906 = vcmp.lt.s32.totalorder %v1868, 0
  %v2907 = vand.u32 %v1868, 2139095040
  %v2908 = vshrl.u32 %v2907, 23
  %v2909 = vsub.s32 %v2908, 127
  %v2910 = vand.u32 2147483647, %v1868
  %v2911 = vand.u32 %v2910, 8388607
  %v2912 = vor.u32 %v2911, 8388608
  %v2913 = vsub.s32 0, %v2912
  %v2914 = vadd.s32 %v2909, 1
  %vm2915 = vcmp.gt.s32.totalorder %v2914, 0
  %v2916 = vsel %vm2915, %v2914, 0
  %v2917 = vshrl.u32 %v2916, 5
  %v2918 = vand.u32 %v2916, 31
  %v2919 = vsub.s32 32, %v2918
  %v2920 = vshrl.u32 683565275, %v2919
  %v2921 = vshll.u32 683565275, %v2918
  %v2922 = vshrl.u32 2475754826, %v2919
  %v2923 = vor.u32 %v2921, %v2922
  %v2924 = vshll.u32 2475754826, %v2918
  %v2925 = vshrl.u32 2131351028, %v2919
  %v2926 = vor.u32 %v2924, %v2925
  %v2927 = vshll.u32 2131351028, %v2918
  %v2928 = vshrl.u32 2102212464, %v2919
  %v2929 = vor.u32 %v2927, %v2928
  %v2930 = vshll.u32 2102212464, %v2918
  %v2931 = vshrl.u32 920167782, %v2919
  %v2932 = vor.u32 %v2930, %v2931
  %v2933 = vshll.u32 920167782, %v2918
  %v2934 = vshrl.u32 1326507024, %v2919
  %v2935 = vor.u32 %v2933, %v2934
  %vm2936 = vcmp.lt.s32.totalorder %v2917, 1
  %vm2937 = vcmp.lt.s32.totalorder %v2917, 2
  %vm2938 = vcmp.lt.s32.totalorder %v2917, 3
  %vm2939 = vcmp.lt.s32.totalorder %v2917, 4
  %v2940 = vsel %vm2936, %v2920, %v2923
  %v2941 = vsel %vm2939, %v2929, 2102212464
  %v2942 = vsel %vm2938, %v2926, %v2941
  %v2943 = vsel %vm2937, %v2940, %v2942
  %v2944 = vsel %vm2936, %v2923, %v2926
  %v2945 = vsel %vm2939, %v2932, 920167782
  %v2946 = vsel %vm2938, %v2929, %v2945
  %v2947 = vsel %vm2937, %v2944, %v2946
  %v2948 = vsel %vm2936, %v2926, %v2929
  %v2949 = vsel %vm2939, %v2935, 1326507024
  %v2950 = vsel %vm2938, %v2932, %v2949
  %v2951 = vsel %vm2937, %v2948, %v2950
  %v2952 = vshll.u32 %v2912, 8
  %v2953 = vmul.u32.u64.compose %v2952, %v2951
  %v2954 = vextract.low.u32 %v2953
  %v2955 = vextract.high.u32 %v2953
  %v2956 = vmul.u32.u64.compose %v2952, %v2947
  %v2957 = vextract.low.u32 %v2956
  %v2958 = vextract.high.u32 %v2956
  %v2959 = vmul.u32 %v2952, %v2943
  %v2960 = vadd.s32 %v2955, %v2957
  %vm2961 = vc.u32 %v2955, %v2957
  %v2962 = vadd.s32 %v2958, 1
  %v2963 = vsel %vm2961, %v2962, %v2958
  %v2964 = vadd.s32 %v2959, %v2963
  %v2965 = vadd.s32 %v2964, 536870912
  %v2966 = vshrl.u32 %v2965, 30
  %v2967 = vshll.u32 %v2966, 30
  %v2968 = vsub.s32 %v2964, %v2967
  %vm2969 = vcmp.lt.s32.totalorder %v2968, 0
  %v2970 = vsub.s32 0, %v2968
  %v2971 = vsel %vm2969, %v2970, %v2968
  %v2972 = vclz %v2971
  %v2973 = vsub.s32 %v2972, 2
  %vm2974 = vcmp.gt.s32.totalorder 0, %v2973
  %v2975 = vsel %vm2974, 0, %v2973
  %v2976 = vsub.s32 32, %v2975
  %v2977 = vshll.u32 %v2968, %v2975
  %v2978 = vshrl.u32 %v2960, %v2976
  %v2979 = vor.u32 %v2977, %v2978
  %v2980 = vsub.s32 4294967266, %v2975
  %v2981 = vadd.s32 %v2980, 127
  %v2982 = vshll.u32 %v2981, 23
  %v2983 = vor.u32 4788187, %v2982
  %v2984 = vand.u32 2147483647, %v2983
  %v2986 = vcvt.s32.f32 %v2979
  %v2987 = vmul.f32 %v2986, %v2984
  %v2988 = vxor.u32 %v2987, 2147483648
  %v2989 = vsel %vm2906, %v2988, %v2987
  %v2990 = vsub.s32 4, %v2966
  %v2991 = vsel %vm2906, %v2990, %v2966
  %v2992 = vsel %vm2905, %v1868, %v2989
  %v2993 = vsel %vm2905, 0, %v2991
  %v2994 = vcosq.f32.pop %v2992
  %v2995 = vsinq.f32.pop %v2992
  %vm2996 = vweird.f32 %v1868
  %v2997 = vand.u32 %v2993, 3
  %vm2998 = vcmp.lt.s32.totalorder %v2997, 2
  %vm2999 = vcmp.eq.s32.totalorder %v2997, 0
  %v3000 = vxor.u32 %v2995, 2147483648
  %v3001 = vsel %vm2999, %v2994, %v3000
  %vm3002 = vcmp.eq.s32.totalorder %v2997, 2
  %v3003 = vxor.u32 %v2994, 2147483648
  %v3004 = vsel %vm3002, %v3003, %v2995
  %v3005 = vsel %vm2998, %v3001, %v3004
  %v3006 = vsel %vm2996, nan, %v3005
  %v3007 = vand.u32 2147483647, %v1869
  %vm3008 = vcmp.le.f32.partialorder %v3007, 0.7853982
  %vm3009 = vcmp.lt.s32.totalorder %v1869, 0
  %v3010 = vand.u32 %v1869, 2139095040
  %v3011 = vshrl.u32 %v3010, 23
  %v3012 = vsub.s32 %v3011, 127
  %v3013 = vand.u32 2147483647, %v1869
  %v3014 = vand.u32 %v3013, 8388607
  %v3015 = vor.u32 %v3014, 8388608
  %v3016 = vsub.s32 0, %v3015
  %v3017 = vadd.s32 %v3012, 1
  %vm3018 = vcmp.gt.s32.totalorder %v3017, 0
  %v3019 = vsel %vm3018, %v3017, 0
  %v3020 = vshrl.u32 %v3019, 5
  %v3021 = vand.u32 %v3019, 31
  %v3022 = vsub.s32 32, %v3021
  %v3023 = vshrl.u32 683565275, %v3022
  %v3024 = vshll.u32 683565275, %v3021
  %v3025 = vshrl.u32 2475754826, %v3022
  %v3026 = vor.u32 %v3024, %v3025
  %v3027 = vshll.u32 2475754826, %v3021
  %v3028 = vshrl.u32 2131351028, %v3022
  %v3029 = vor.u32 %v3027, %v3028
  %v3030 = vshll.u32 2131351028, %v3021
  %v3031 = vshrl.u32 2102212464, %v3022
  %v3032 = vor.u32 %v3030, %v3031
  %v3033 = vshll.u32 2102212464, %v3021
  %v3034 = vshrl.u32 920167782, %v3022
  %v3035 = vor.u32 %v3033, %v3034
  %v3036 = vshll.u32 920167782, %v3021
  %v3037 = vshrl.u32 1326507024, %v3022
  %v3038 = vor.u32 %v3036, %v3037
  %vm3039 = vcmp.lt.s32.totalorder %v3020, 1
  %vm3040 = vcmp.lt.s32.totalorder %v3020, 2
  %vm3041 = vcmp.lt.s32.totalorder %v3020, 3
  %vm3042 = vcmp.lt.s32.totalorder %v3020, 4
  %v3043 = vsel %vm3039, %v3023, %v3026
  %v3044 = vsel %vm3042, %v3032, 2102212464
  %v3045 = vsel %vm3041, %v3029, %v3044
  %v3046 = vsel %vm3040, %v3043, %v3045
  %v3047 = vsel %vm3039, %v3026, %v3029
  %v3048 = vsel %vm3042, %v3035, 920167782
  %v3049 = vsel %vm3041, %v3032, %v3048
  %v3050 = vsel %vm3040, %v3047, %v3049
  %v3051 = vsel %vm3039, %v3029, %v3032
  %v3052 = vsel %vm3042, %v3038, 1326507024
  %v3053 = vsel %vm3041, %v3035, %v3052
  %v3054 = vsel %vm3040, %v3051, %v3053
  %v3055 = vshll.u32 %v3015, 8
  %v3056 = vmul.u32.u64.compose %v3055, %v3054
  %v3057 = vextract.low.u32 %v3056
  %v3058 = vextract.high.u32 %v3056
  %v3059 = vmul.u32.u64.compose %v3055, %v3050
  %v3060 = vextract.low.u32 %v3059
  %v3061 = vextract.high.u32 %v3059
  %v3062 = vmul.u32 %v3055, %v3046
  %v3063 = vadd.s32 %v3058, %v3060
  %vm3064 = vc.u32 %v3058, %v3060
  %v3065 = vadd.s32 %v3061, 1
  %v3066 = vsel %vm3064, %v3065, %v3061
  %v3067 = vadd.s32 %v3062, %v3066
  %v3068 = vadd.s32 %v3067, 536870912
  %v3069 = vshrl.u32 %v3068, 30
  %v3070 = vshll.u32 %v3069, 30
  %v3071 = vsub.s32 %v3067, %v3070
  %vm3072 = vcmp.lt.s32.totalorder %v3071, 0
  %v3073 = vsub.s32 0, %v3071
  %v3074 = vsel %vm3072, %v3073, %v3071
  %v3075 = vclz %v3074
  %v3076 = vsub.s32 %v3075, 2
  %vm3077 = vcmp.gt.s32.totalorder 0, %v3076
  %v3078 = vsel %vm3077, 0, %v3076
  %v3079 = vsub.s32 32, %v3078
  %v3080 = vshll.u32 %v3071, %v3078
  %v3081 = vshrl.u32 %v3063, %v3079
  %v3082 = vor.u32 %v3080, %v3081
  %v3083 = vsub.s32 4294967266, %v3078
  %v3084 = vadd.s32 %v3083, 127
  %v3085 = vshll.u32 %v3084, 23
  %v3086 = vor.u32 4788187, %v3085
  %v3087 = vand.u32 2147483647, %v3086
  %v3089 = vcvt.s32.f32 %v3082
  %v3090 = vmul.f32 %v3089, %v3087
  %v3091 = vxor.u32 %v3090, 2147483648
  %v3092 = vsel %vm3009, %v3091, %v3090
  %v3093 = vsub.s32 4, %v3069
  %v3094 = vsel %vm3009, %v3093, %v3069
  %v3095 = vsel %vm3008, %v1869, %v3092
  %v3096 = vsel %vm3008, 0, %v3094
  %v3097 = vcosq.f32.pop %v3095
  %v3098 = vsinq.f32.pop %v3095
  %vm3099 = vweird.f32 %v1869
  %v3100 = vand.u32 %v3096, 3
  %vm3101 = vcmp.lt.s32.totalorder %v3100, 2
  %vm3102 = vcmp.eq.s32.totalorder %v3100, 0
  %v3103 = vxor.u32 %v3098, 2147483648
  %v3104 = vsel %vm3102, %v3097, %v3103
  %vm3105 = vcmp.eq.s32.totalorder %v3100, 2
  %v3106 = vxor.u32 %v3097, 2147483648
  %v3107 = vsel %vm3105, %v3106, %v3098
  %v3108 = vsel %vm3101, %v3104, %v3107
  %v3109 = vsel %vm3099, nan, %v3108
  %v3110 = vand.u32 2147483647, %v1870
  %vm3111 = vcmp.le.f32.partialorder %v3110, 0.7853982
  %vm3112 = vcmp.lt.s32.totalorder %v1870, 0
  %v3113 = vand.u32 %v1870, 2139095040
  %v3114 = vshrl.u32 %v3113, 23
  %v3115 = vsub.s32 %v3114, 127
  %v3116 = vand.u32 2147483647, %v1870
  %v3117 = vand.u32 %v3116, 8388607
  %v3118 = vor.u32 %v3117, 8388608
  %v3119 = vsub.s32 0, %v3118
  %v3120 = vadd.s32 %v3115, 1
  %vm3121 = vcmp.gt.s32.totalorder %v3120, 0
  %v3122 = vsel %vm3121, %v3120, 0
  %v3123 = vshrl.u32 %v3122, 5
  %v3124 = vand.u32 %v3122, 31
  %v3125 = vsub.s32 32, %v3124
  %v3126 = vshrl.u32 683565275, %v3125
  %v3127 = vshll.u32 683565275, %v3124
  %v3128 = vshrl.u32 2475754826, %v3125
  %v3129 = vor.u32 %v3127, %v3128
  %v3130 = vshll.u32 2475754826, %v3124
  %v3131 = vshrl.u32 2131351028, %v3125
  %v3132 = vor.u32 %v3130, %v3131
  %v3133 = vshll.u32 2131351028, %v3124
  %v3134 = vshrl.u32 2102212464, %v3125
  %v3135 = vor.u32 %v3133, %v3134
  %v3136 = vshll.u32 2102212464, %v3124
  %v3137 = vshrl.u32 920167782, %v3125
  %v3138 = vor.u32 %v3136, %v3137
  %v3139 = vshll.u32 920167782, %v3124
  %v3140 = vshrl.u32 1326507024, %v3125
  %v3141 = vor.u32 %v3139, %v3140
  %vm3142 = vcmp.lt.s32.totalorder %v3123, 1
  %vm3143 = vcmp.lt.s32.totalorder %v3123, 2
  %vm3144 = vcmp.lt.s32.totalorder %v3123, 3
  %vm3145 = vcmp.lt.s32.totalorder %v3123, 4
  %v3146 = vsel %vm3142, %v3126, %v3129
  %v3147 = vsel %vm3145, %v3135, 2102212464
  %v3148 = vsel %vm3144, %v3132, %v3147
  %v3149 = vsel %vm3143, %v3146, %v3148
  %v3150 = vsel %vm3142, %v3129, %v3132
  %v3151 = vsel %vm3145, %v3138, 920167782
  %v3152 = vsel %vm3144, %v3135, %v3151
  %v3153 = vsel %vm3143, %v3150, %v3152
  %v3154 = vsel %vm3142, %v3132, %v3135
  %v3155 = vsel %vm3145, %v3141, 1326507024
  %v3156 = vsel %vm3144, %v3138, %v3155
  %v3157 = vsel %vm3143, %v3154, %v3156
  %v3158 = vshll.u32 %v3118, 8
  %v3159 = vmul.u32.u64.compose %v3158, %v3157
  %v3160 = vextract.low.u32 %v3159
  %v3161 = vextract.high.u32 %v3159
  %v3162 = vmul.u32.u64.compose %v3158, %v3153
  %v3163 = vextract.low.u32 %v3162
  %v3164 = vextract.high.u32 %v3162
  %v3165 = vmul.u32 %v3158, %v3149
  %v3166 = vadd.s32 %v3161, %v3163
  %vm3167 = vc.u32 %v3161, %v3163
  %v3168 = vadd.s32 %v3164, 1
  %v3169 = vsel %vm3167, %v3168, %v3164
  %v3170 = vadd.s32 %v3165, %v3169
  %v3171 = vadd.s32 %v3170, 536870912
  %v3172 = vshrl.u32 %v3171, 30
  %v3173 = vshll.u32 %v3172, 30
  %v3174 = vsub.s32 %v3170, %v3173
  %vm3175 = vcmp.lt.s32.totalorder %v3174, 0
  %v3176 = vsub.s32 0, %v3174
  %v3177 = vsel %vm3175, %v3176, %v3174
  %v3178 = vclz %v3177
  %v3179 = vsub.s32 %v3178, 2
  %vm3180 = vcmp.gt.s32.totalorder 0, %v3179
  %v3181 = vsel %vm3180, 0, %v3179
  %v3182 = vsub.s32 32, %v3181
  %v3183 = vshll.u32 %v3174, %v3181
  %v3184 = vshrl.u32 %v3166, %v3182
  %v3185 = vor.u32 %v3183, %v3184
  %v3186 = vsub.s32 4294967266, %v3181
  %v3187 = vadd.s32 %v3186, 127
  %v3188 = vshll.u32 %v3187, 23
  %v3189 = vor.u32 4788187, %v3188
  %v3190 = vand.u32 2147483647, %v3189
  %v3192 = vcvt.s32.f32 %v3185
  %v3193 = vmul.f32 %v3192, %v3190
  %v3194 = vxor.u32 %v3193, 2147483648
  %v3195 = vsel %vm3112, %v3194, %v3193
  %v3196 = vsub.s32 4, %v3172
  %v3197 = vsel %vm3112, %v3196, %v3172
  %v3198 = vsel %vm3111, %v1870, %v3195
  %v3199 = vsel %vm3111, 0, %v3197
  %v3200 = vcosq.f32.pop %v3198
  %v3201 = vsinq.f32.pop %v3198
  %vm3202 = vweird.f32 %v1870
  %v3203 = vand.u32 %v3199, 3
  %vm3204 = vcmp.lt.s32.totalorder %v3203, 2
  %vm3205 = vcmp.eq.s32.totalorder %v3203, 0
  %v3206 = vxor.u32 %v3201, 2147483648
  %v3207 = vsel %vm3205, %v3200, %v3206
  %vm3208 = vcmp.eq.s32.totalorder %v3203, 2
  %v3209 = vxor.u32 %v3200, 2147483648
  %v3210 = vsel %vm3208, %v3209, %v3201
  %v3211 = vsel %vm3204, %v3207, %v3210
  %v3212 = vsel %vm3202, nan, %v3211
  %v3213 = vand.u32 2147483647, %v1871
  %vm3214 = vcmp.le.f32.partialorder %v3213, 0.7853982
  %vm3215 = vcmp.lt.s32.totalorder %v1871, 0
  %v3216 = vand.u32 %v1871, 2139095040
  %v3217 = vshrl.u32 %v3216, 23
  %v3218 = vsub.s32 %v3217, 127
  %v3219 = vand.u32 2147483647, %v1871
  %v3220 = vand.u32 %v3219, 8388607
  %v3221 = vor.u32 %v3220, 8388608
  %v3222 = vsub.s32 0, %v3221
  %v3223 = vadd.s32 %v3218, 1
  %vm3224 = vcmp.gt.s32.totalorder %v3223, 0
  %v3225 = vsel %vm3224, %v3223, 0
  %v3226 = vshrl.u32 %v3225, 5
  %v3227 = vand.u32 %v3225, 31
  %v3228 = vsub.s32 32, %v3227
  %v3229 = vshrl.u32 683565275, %v3228
  %v3230 = vshll.u32 683565275, %v3227
  %v3231 = vshrl.u32 2475754826, %v3228
  %v3232 = vor.u32 %v3230, %v3231
  %v3233 = vshll.u32 2475754826, %v3227
  %v3234 = vshrl.u32 2131351028, %v3228
  %v3235 = vor.u32 %v3233, %v3234
  %v3236 = vshll.u32 2131351028, %v3227
  %v3237 = vshrl.u32 2102212464, %v3228
  %v3238 = vor.u32 %v3236, %v3237
  %v3239 = vshll.u32 2102212464, %v3227
  %v3240 = vshrl.u32 920167782, %v3228
  %v3241 = vor.u32 %v3239, %v3240
  %v3242 = vshll.u32 920167782, %v3227
  %v3243 = vshrl.u32 1326507024, %v3228
  %v3244 = vor.u32 %v3242, %v3243
  %vm3245 = vcmp.lt.s32.totalorder %v3226, 1
  %vm3246 = vcmp.lt.s32.totalorder %v3226, 2
  %vm3247 = vcmp.lt.s32.totalorder %v3226, 3
  %vm3248 = vcmp.lt.s32.totalorder %v3226, 4
  %v3249 = vsel %vm3245, %v3229, %v3232
  %v3250 = vsel %vm3248, %v3238, 2102212464
  %v3251 = vsel %vm3247, %v3235, %v3250
  %v3252 = vsel %vm3246, %v3249, %v3251
  %v3253 = vsel %vm3245, %v3232, %v3235
  %v3254 = vsel %vm3248, %v3241, 920167782
  %v3255 = vsel %vm3247, %v3238, %v3254
  %v3256 = vsel %vm3246, %v3253, %v3255
  %v3257 = vsel %vm3245, %v3235, %v3238
  %v3258 = vsel %vm3248, %v3244, 1326507024
  %v3259 = vsel %vm3247, %v3241, %v3258
  %v3260 = vsel %vm3246, %v3257, %v3259
  %v3261 = vshll.u32 %v3221, 8
  %v3262 = vmul.u32.u64.compose %v3261, %v3260
  %v3263 = vextract.low.u32 %v3262
  %v3264 = vextract.high.u32 %v3262
  %v3265 = vmul.u32.u64.compose %v3261, %v3256
  %v3266 = vextract.low.u32 %v3265
  %v3267 = vextract.high.u32 %v3265
  %v3268 = vmul.u32 %v3261, %v3252
  %v3269 = vadd.s32 %v3264, %v3266
  %vm3270 = vc.u32 %v3264, %v3266
  %v3271 = vadd.s32 %v3267, 1
  %v3272 = vsel %vm3270, %v3271, %v3267
  %v3273 = vadd.s32 %v3268, %v3272
  %v3274 = vadd.s32 %v3273, 536870912
  %v3275 = vshrl.u32 %v3274, 30
  %v3276 = vshll.u32 %v3275, 30
  %v3277 = vsub.s32 %v3273, %v3276
  %vm3278 = vcmp.lt.s32.totalorder %v3277, 0
  %v3279 = vsub.s32 0, %v3277
  %v3280 = vsel %vm3278, %v3279, %v3277
  %v3281 = vclz %v3280
  %v3282 = vsub.s32 %v3281, 2
  %vm3283 = vcmp.gt.s32.totalorder 0, %v3282
  %v3284 = vsel %vm3283, 0, %v3282
  %v3285 = vsub.s32 32, %v3284
  %v3286 = vshll.u32 %v3277, %v3284
  %v3287 = vshrl.u32 %v3269, %v3285
  %v3288 = vor.u32 %v3286, %v3287
  %v3289 = vsub.s32 4294967266, %v3284
  %v3290 = vadd.s32 %v3289, 127
  %v3291 = vshll.u32 %v3290, 23
  %v3292 = vor.u32 4788187, %v3291
  %v3293 = vand.u32 2147483647, %v3292
  %v3295 = vcvt.s32.f32 %v3288
  %v3296 = vmul.f32 %v3295, %v3293
  %v3297 = vxor.u32 %v3296, 2147483648
  %v3298 = vsel %vm3215, %v3297, %v3296
  %v3299 = vsub.s32 4, %v3275
  %v3300 = vsel %vm3215, %v3299, %v3275
  %v3301 = vsel %vm3214, %v1871, %v3298
  %v3302 = vsel %vm3214, 0, %v3300
  %v3303 = vcosq.f32.pop %v3301
  %v3304 = vsinq.f32.pop %v3301
  %vm3305 = vweird.f32 %v1871
  %v3306 = vand.u32 %v3302, 3
  %vm3307 = vcmp.lt.s32.totalorder %v3306, 2
  %vm3308 = vcmp.eq.s32.totalorder %v3306, 0
  %v3309 = vxor.u32 %v3304, 2147483648
  %v3310 = vsel %vm3308, %v3303, %v3309
  %vm3311 = vcmp.eq.s32.totalorder %v3306, 2
  %v3312 = vxor.u32 %v3303, 2147483648
  %v3313 = vsel %vm3311, %v3312, %v3304
  %v3314 = vsel %vm3307, %v3310, %v3313
  %v3315 = vsel %vm3305, nan, %v3314
  %v3316 = vand.u32 2147483647, %v1872
  %vm3317 = vcmp.le.f32.partialorder %v3316, 0.7853982
  %vm3318 = vcmp.lt.s32.totalorder %v1872, 0
  %v3319 = vand.u32 %v1872, 2139095040
  %v3320 = vshrl.u32 %v3319, 23
  %v3321 = vsub.s32 %v3320, 127
  %v3322 = vand.u32 2147483647, %v1872
  %v3323 = vand.u32 %v3322, 8388607
  %v3324 = vor.u32 %v3323, 8388608
  %v3325 = vsub.s32 0, %v3324
  %v3326 = vadd.s32 %v3321, 1
  %vm3327 = vcmp.gt.s32.totalorder %v3326, 0
  %v3328 = vsel %vm3327, %v3326, 0
  %v3329 = vshrl.u32 %v3328, 5
  %v3330 = vand.u32 %v3328, 31
  %v3331 = vsub.s32 32, %v3330
  %v3332 = vshrl.u32 683565275, %v3331
  %v3333 = vshll.u32 683565275, %v3330
  %v3334 = vshrl.u32 2475754826, %v3331
  %v3335 = vor.u32 %v3333, %v3334
  %v3336 = vshll.u32 2475754826, %v3330
  %v3337 = vshrl.u32 2131351028, %v3331
  %v3338 = vor.u32 %v3336, %v3337
  %v3339 = vshll.u32 2131351028, %v3330
  %v3340 = vshrl.u32 2102212464, %v3331
  %v3341 = vor.u32 %v3339, %v3340
  %v3342 = vshll.u32 2102212464, %v3330
  %v3343 = vshrl.u32 920167782, %v3331
  %v3344 = vor.u32 %v3342, %v3343
  %v3345 = vshll.u32 920167782, %v3330
  %v3346 = vshrl.u32 1326507024, %v3331
  %v3347 = vor.u32 %v3345, %v3346
  %vm3348 = vcmp.lt.s32.totalorder %v3329, 1
  %vm3349 = vcmp.lt.s32.totalorder %v3329, 2
  %vm3350 = vcmp.lt.s32.totalorder %v3329, 3
  %vm3351 = vcmp.lt.s32.totalorder %v3329, 4
  %v3352 = vsel %vm3348, %v3332, %v3335
  %v3353 = vsel %vm3351, %v3341, 2102212464
  %v3354 = vsel %vm3350, %v3338, %v3353
  %v3355 = vsel %vm3349, %v3352, %v3354
  %v3356 = vsel %vm3348, %v3335, %v3338
  %v3357 = vsel %vm3351, %v3344, 920167782
  %v3358 = vsel %vm3350, %v3341, %v3357
  %v3359 = vsel %vm3349, %v3356, %v3358
  %v3360 = vsel %vm3348, %v3338, %v3341
  %v3361 = vsel %vm3351, %v3347, 1326507024
  %v3362 = vsel %vm3350, %v3344, %v3361
  %v3363 = vsel %vm3349, %v3360, %v3362
  %v3364 = vshll.u32 %v3324, 8
  %v3365 = vmul.u32.u64.compose %v3364, %v3363
  %v3366 = vextract.low.u32 %v3365
  %v3367 = vextract.high.u32 %v3365
  %v3368 = vmul.u32.u64.compose %v3364, %v3359
  %v3369 = vextract.low.u32 %v3368
  %v3370 = vextract.high.u32 %v3368
  %v3371 = vmul.u32 %v3364, %v3355
  %v3372 = vadd.s32 %v3367, %v3369
  %vm3373 = vc.u32 %v3367, %v3369
  %v3374 = vadd.s32 %v3370, 1
  %v3375 = vsel %vm3373, %v3374, %v3370
  %v3376 = vadd.s32 %v3371, %v3375
  %v3377 = vadd.s32 %v3376, 536870912
  %v3378 = vshrl.u32 %v3377, 30
  %v3379 = vshll.u32 %v3378, 30
  %v3380 = vsub.s32 %v3376, %v3379
  %vm3381 = vcmp.lt.s32.totalorder %v3380, 0
  %v3382 = vsub.s32 0, %v3380
  %v3383 = vsel %vm3381, %v3382, %v3380
  %v3384 = vclz %v3383
  %v3385 = vsub.s32 %v3384, 2
  %vm3386 = vcmp.gt.s32.totalorder 0, %v3385
  %v3387 = vsel %vm3386, 0, %v3385
  %v3388 = vsub.s32 32, %v3387
  %v3389 = vshll.u32 %v3380, %v3387
  %v3390 = vshrl.u32 %v3372, %v3388
  %v3391 = vor.u32 %v3389, %v3390
  %v3392 = vsub.s32 4294967266, %v3387
  %v3393 = vadd.s32 %v3392, 127
  %v3394 = vshll.u32 %v3393, 23
  %v3395 = vor.u32 4788187, %v3394
  %v3396 = vand.u32 2147483647, %v3395
  %v3398 = vcvt.s32.f32 %v3391
  %v3399 = vmul.f32 %v3398, %v3396
  %v3400 = vxor.u32 %v3399, 2147483648
  %v3401 = vsel %vm3318, %v3400, %v3399
  %v3402 = vsub.s32 4, %v3378
  %v3403 = vsel %vm3318, %v3402, %v3378
  %v3404 = vsel %vm3317, %v1872, %v3401
  %v3405 = vsel %vm3317, 0, %v3403
  %v3406 = vcosq.f32.pop %v3404
  %v3407 = vsinq.f32.pop %v3404
  %vm3408 = vweird.f32 %v1872
  %v3409 = vand.u32 %v3405, 3
  %vm3410 = vcmp.lt.s32.totalorder %v3409, 2
  %vm3411 = vcmp.eq.s32.totalorder %v3409, 0
  %v3412 = vxor.u32 %v3407, 2147483648
  %v3413 = vsel %vm3411, %v3406, %v3412
  %vm3414 = vcmp.eq.s32.totalorder %v3409, 2
  %v3415 = vxor.u32 %v3406, 2147483648
  %v3416 = vsel %vm3414, %v3415, %v3407
  %v3417 = vsel %vm3410, %v3413, %v3416
  %v3418 = vsel %vm3408, nan, %v3417
  %v3419 = vand.u32 2147483647, %v1873
  %vm3420 = vcmp.le.f32.partialorder %v3419, 0.7853982
  %vm3421 = vcmp.lt.s32.totalorder %v1873, 0
  %v3422 = vand.u32 %v1873, 2139095040
  %v3423 = vshrl.u32 %v3422, 23
  %v3424 = vsub.s32 %v3423, 127
  %v3425 = vand.u32 2147483647, %v1873
  %v3426 = vand.u32 %v3425, 8388607
  %v3427 = vor.u32 %v3426, 8388608
  %v3428 = vsub.s32 0, %v3427
  %v3429 = vadd.s32 %v3424, 1
  %vm3430 = vcmp.gt.s32.totalorder %v3429, 0
  %v3431 = vsel %vm3430, %v3429, 0
  %v3432 = vshrl.u32 %v3431, 5
  %v3433 = vand.u32 %v3431, 31
  %v3434 = vsub.s32 32, %v3433
  %v3435 = vshrl.u32 683565275, %v3434
  %v3436 = vshll.u32 683565275, %v3433
  %v3437 = vshrl.u32 2475754826, %v3434
  %v3438 = vor.u32 %v3436, %v3437
  %v3439 = vshll.u32 2475754826, %v3433
  %v3440 = vshrl.u32 2131351028, %v3434
  %v3441 = vor.u32 %v3439, %v3440
  %v3442 = vshll.u32 2131351028, %v3433
  %v3443 = vshrl.u32 2102212464, %v3434
  %v3444 = vor.u32 %v3442, %v3443
  %v3445 = vshll.u32 2102212464, %v3433
  %v3446 = vshrl.u32 920167782, %v3434
  %v3447 = vor.u32 %v3445, %v3446
  %v3448 = vshll.u32 920167782, %v3433
  %v3449 = vshrl.u32 1326507024, %v3434
  %v3450 = vor.u32 %v3448, %v3449
  %vm3451 = vcmp.lt.s32.totalorder %v3432, 1
  %vm3452 = vcmp.lt.s32.totalorder %v3432, 2
  %vm3453 = vcmp.lt.s32.totalorder %v3432, 3
  %vm3454 = vcmp.lt.s32.totalorder %v3432, 4
  %v3455 = vsel %vm3451, %v3435, %v3438
  %v3456 = vsel %vm3454, %v3444, 2102212464
  %v3457 = vsel %vm3453, %v3441, %v3456
  %v3458 = vsel %vm3452, %v3455, %v3457
  %v3459 = vsel %vm3451, %v3438, %v3441
  %v3460 = vsel %vm3454, %v3447, 920167782
  %v3461 = vsel %vm3453, %v3444, %v3460
  %v3462 = vsel %vm3452, %v3459, %v3461
  %v3463 = vsel %vm3451, %v3441, %v3444
  %v3464 = vsel %vm3454, %v3450, 1326507024
  %v3465 = vsel %vm3453, %v3447, %v3464
  %v3466 = vsel %vm3452, %v3463, %v3465
  %v3467 = vshll.u32 %v3427, 8
  %v3468 = vmul.u32.u64.compose %v3467, %v3466
  %v3469 = vextract.low.u32 %v3468
  %v3470 = vextract.high.u32 %v3468
  %v3471 = vmul.u32.u64.compose %v3467, %v3462
  %v3472 = vextract.low.u32 %v3471
  %v3473 = vextract.high.u32 %v3471
  %v3474 = vmul.u32 %v3467, %v3458
  %v3475 = vadd.s32 %v3470, %v3472
  %vm3476 = vc.u32 %v3470, %v3472
  %v3477 = vadd.s32 %v3473, 1
  %v3478 = vsel %vm3476, %v3477, %v3473
  %v3479 = vadd.s32 %v3474, %v3478
  %v3480 = vadd.s32 %v3479, 536870912
  %v3481 = vshrl.u32 %v3480, 30
  %v3482 = vshll.u32 %v3481, 30
  %v3483 = vsub.s32 %v3479, %v3482
  %vm3484 = vcmp.lt.s32.totalorder %v3483, 0
  %v3485 = vsub.s32 0, %v3483
  %v3486 = vsel %vm3484, %v3485, %v3483
  %v3487 = vclz %v3486
  %v3488 = vsub.s32 %v3487, 2
  %vm3489 = vcmp.gt.s32.totalorder 0, %v3488
  %v3490 = vsel %vm3489, 0, %v3488
  %v3491 = vsub.s32 32, %v3490
  %v3492 = vshll.u32 %v3483, %v3490
  %v3493 = vshrl.u32 %v3475, %v3491
  %v3494 = vor.u32 %v3492, %v3493
  %v3495 = vsub.s32 4294967266, %v3490
  %v3496 = vadd.s32 %v3495, 127
  %v3497 = vshll.u32 %v3496, 23
  %v3498 = vor.u32 4788187, %v3497
  %v3499 = vand.u32 2147483647, %v3498
  %v3501 = vcvt.s32.f32 %v3494
  %v3502 = vmul.f32 %v3501, %v3499
  %v3503 = vxor.u32 %v3502, 2147483648
  %v3504 = vsel %vm3421, %v3503, %v3502
  %v3505 = vsub.s32 4, %v3481
  %v3506 = vsel %vm3421, %v3505, %v3481
  %v3507 = vsel %vm3420, %v1873, %v3504
  %v3508 = vsel %vm3420, 0, %v3506
  %v3509 = vcosq.f32.pop %v3507
  %v3510 = vsinq.f32.pop %v3507
  %vm3511 = vweird.f32 %v1873
  %v3512 = vand.u32 %v3508, 3
  %vm3513 = vcmp.lt.s32.totalorder %v3512, 2
  %vm3514 = vcmp.eq.s32.totalorder %v3512, 0
  %v3515 = vxor.u32 %v3510, 2147483648
  %v3516 = vsel %vm3514, %v3509, %v3515
  %vm3517 = vcmp.eq.s32.totalorder %v3512, 2
  %v3518 = vxor.u32 %v3509, 2147483648
  %v3519 = vsel %vm3517, %v3518, %v3510
  %v3520 = vsel %vm3513, %v3516, %v3519
  %v3521 = vsel %vm3511, nan, %v3520
  %v3522 = vld [vmem:[%s0] sm:$0xff]
  %v3523 = vld [vmem:[%s0 + $0x8] sm:$0xff]
  %v3524 = vld [vmem:[%s0 + $0x10] sm:$0xff]
  %v3525 = vld [vmem:[%s0 + $0x18] sm:$0xff]
  %v3526 = vld [vmem:[%s0 + $0x20] sm:$0xff]
  %v3527 = vld [vmem:[%s0 + $0x28] sm:$0xff]
  %v3528 = vld [vmem:[%s0 + $0x30] sm:$0xff]
  %v3529 = vld [vmem:[%s0 + $0x38] sm:$0xff]
  %v3530 = vld [vmem:[%s0 + $0x40] sm:$0xff]
  %v3531 = vld [vmem:[%s0 + $0x48] sm:$0xff]
  %v3532 = vld [vmem:[%s0 + $0x50] sm:$0xff]
  %v3533 = vld [vmem:[%s0 + $0x58] sm:$0xff]
  %v3534 = vld [vmem:[%s0 + $0x60] sm:$0xff]
  %v3535 = vld [vmem:[%s0 + $0x68] sm:$0xff]
  %v3536 = vld [vmem:[%s0 + $0x70] sm:$0xff]
  %v3537 = vld [vmem:[%s0 + $0x78] sm:$0xff]
  %v3538 = vpack.c.bf16 %v3523, %v3522
  %v3539 = vpack.c.bf16 %v3525, %v3524
  %v3540 = vpack.c.bf16 %v3527, %v3526
  %v3541 = vpack.c.bf16 %v3529, %v3528
  %v3542 = vpack.c.bf16 %v3531, %v3530
  %v3543 = vpack.c.bf16 %v3533, %v3532
  %v3544 = vpack.c.bf16 %v3535, %v3534
  %v3545 = vpack.c.bf16 %v3537, %v3536
  %v3546 = vld [vmem:[%s3] sm:$0xf]
  %v3547 = vld [vmem:[%s3 + $0x4] sm:$0xf]
  %v3548 = vld [vmem:[%s3 + $0x8] sm:$0xf]
  %v3549 = vld [vmem:[%s3 + $0xc] sm:$0xf]
  %v3550 = vld [vmem:[%s3 + $0x10] sm:$0xf]
  %v3551 = vld [vmem:[%s3 + $0x14] sm:$0xf]
  %v3552 = vld [vmem:[%s3 + $0x18] sm:$0xf]
  %v3553 = vld [vmem:[%s3 + $0x1c] sm:$0xf]
  %v3554 = vld [vmem:[%s3 + $0x20] sm:$0xf]
  %v3555 = vld [vmem:[%s3 + $0x24] sm:$0xf]
  %v3556 = vld [vmem:[%s3 + $0x28] sm:$0xf]
  %v3557 = vld [vmem:[%s3 + $0x2c] sm:$0xf]
  %v3558 = vpack.c.bf16 %v351, %v248
  %v3559 = vpack.c.bf16 %v557, %v454
  %v3560 = vpack.c.bf16 %v763, %v660
  %v3561 = vpack.c.bf16 %v969, %v866
  %v3562 = vpack.c.bf16 %v1175, %v1072
  %v3563 = vpack.c.bf16 %v1381, %v1278
  %v3564 = vpack.c.bf16 %v1587, %v1484
  %v3565 = vpack.c.bf16 %v1793, %v1690
  %v3566 = vld [vmem:[%s4] sm:$0xf]
  %v3567 = vld [vmem:[%s4 + $0x4] sm:$0xf]
  %v3568 = vld [vmem:[%s4 + $0x8] sm:$0xf]
  %v3569 = vld [vmem:[%s4 + $0xc] sm:$0xf]
  %v3574 = vunpack.c.l.b16 %v3566
  %v3575 = vunpack.c.l.b16 %v3567
  %v3576 = vunpack.c.l.b16 %v3568
  %v3577 = vunpack.c.l.b16 %v3569
  %v3578 = vpack.c.b16 %v3575, %v3574
  %v3579 = vpack.c.b16 %v3577, %v3576
  %vm3582 = vcmask 261120
  %v3584 = vsel %vm3582, %v3558, 0
  %v3587 = vsel %vm3582, %v3559, 0
  %v3590 = vsel %vm3582, %v3560, 0
  %v3593 = vsel %vm3582, %v3561, 0
  %v3596 = vsel %vm3582, %v3562, 0
  %v3599 = vsel %vm3582, %v3563, 0
  %v3602 = vsel %vm3582, %v3564, 0
  %v3605 = vsel %vm3582, %v3565, 0
  %3607 = vmatprep.subr.bf16.mxu0 0
  %3608 = vmatpush1.bf16.msra.mxu0 0
  %3609 = vmatprep.subr.bf16.mxu0 0
  %3610 = vmatpush1.bf16.msra.mxu0 0
  %3611 = vmatprep.subr.bf16.mxu0 0
  %3612 = vmatpush1.bf16.msra.mxu0 0
  %3613 = vmatprep.subr.bf16.mxu0 0
  %3614 = vmatpush1.bf16.msra.mxu0 0
  %3615 = vmatprep.subr.bf16.mxu0 0
  %3616 = vmatpush1.bf16.msra.mxu0 0
  %3617 = vmatprep.subr.bf16.mxu0 0
  %3618 = vmatpush1.bf16.msra.mxu0 0
  %3619 = vmatprep.subr.bf16.mxu0 0
  %3620 = vmatpush1.bf16.msra.mxu0 %v3579
  %3621 = vmatprep.subr.bf16.mxu0 0
  %3622 = vmatpush1.bf16.msra.mxu0 %v3578
  %3623 = vmatprep.subr.bf16.mxu0 0
  %3624 = vmatpush2.bf16.msra.mxu0 0
  %3625 = vmatprep.subr.bf16.mxu0 0
  %3626 = vmatpush2.bf16.msra.mxu0 0
  %3627 = vmatprep.subr.bf16.mxu0 0
  %3628 = vmatpush2.bf16.msra.mxu0 0
  %3629 = vmatprep.subr.bf16.mxu0 0
  %3630 = vmatpush2.bf16.msra.mxu0 0
  %3631 = vmatprep.subr.bf16.mxu0 0
  %3632 = vmatpush2.bf16.msra.mxu0 0
  %3633 = vmatprep.subr.bf16.mxu0 0
  %3634 = vmatpush2.bf16.msra.mxu0 0
  %3635 = vmatprep.subr.bf16.mxu0 0
  %3636 = vmatpush2.bf16.msra.mxu0 0
  %3637 = vmatprep.subr.bf16.mxu0 0
  %3638 = vmatpush2.bf16.msra.mxu0 0
  %3639 = vmatprep.mubr.bf16.mxu0 0
  %3640 = vmatmul.mubr.bf16.gmra.mxu0 %v3584
  %v3641 = vpop.f32.mrf.mxu0
  %v3642 = vadd.f32 0.0, %v3641
  %v3643 = vpop.f32.mrf.mxu0
  %v3644 = vpop.f32.mrf.mxu0
  %v3645 = vadd.f32 0.0, %v3644
  %v3646 = vpop.f32.mrf.mxu0
  %3647 = vmatprep.mubr.bf16.mxu0 0
  %3648 = vmatmul.mubr.bf16.gmra.mxu0 %v3587
  %v3649 = vpop.f32.mrf.mxu0
  %v3650 = vadd.f32 0.0, %v3649
  %v3651 = vpop.f32.mrf.mxu0
  %v3652 = vpop.f32.mrf.mxu0
  %v3653 = vadd.f32 0.0, %v3652
  %v3654 = vpop.f32.mrf.mxu0
  %3655 = vmatprep.mubr.bf16.mxu0 0
  %3656 = vmatmul.mubr.bf16.gmra.mxu0 %v3590
  %v3657 = vpop.f32.mrf.mxu0
  %v3658 = vadd.f32 0.0, %v3657
  %v3659 = vpop.f32.mrf.mxu0
  %v3660 = vpop.f32.mrf.mxu0
  %v3661 = vadd.f32 0.0, %v3660
  %v3662 = vpop.f32.mrf.mxu0
  %3663 = vmatprep.mubr.bf16.mxu0 0
  %3664 = vmatmul.mubr.bf16.gmra.mxu0 %v3593
  %v3665 = vpop.f32.mrf.mxu0
  %v3666 = vadd.f32 0.0, %v3665
  %v3667 = vpop.f32.mrf.mxu0
  %v3668 = vpop.f32.mrf.mxu0
  %v3669 = vadd.f32 0.0, %v3668
  %v3670 = vpop.f32.mrf.mxu0
  %3671 = vmatprep.mubr.bf16.mxu0 0
  %3672 = vmatmul.mubr.bf16.gmra.mxu0 %v3596
  %v3673 = vpop.f32.mrf.mxu0
  %v3674 = vadd.f32 0.0, %v3673
  %v3675 = vpop.f32.mrf.mxu0
  %v3676 = vpop.f32.mrf.mxu0
  %v3677 = vadd.f32 0.0, %v3676
  %v3678 = vpop.f32.mrf.mxu0
  %3679 = vmatprep.mubr.bf16.mxu0 0
  %3680 = vmatmul.mubr.bf16.gmra.mxu0 %v3599
  %v3681 = vpop.f32.mrf.mxu0
  %v3682 = vadd.f32 0.0, %v3681
  %v3683 = vpop.f32.mrf.mxu0
  %v3684 = vpop.f32.mrf.mxu0
  %v3685 = vadd.f32 0.0, %v3684
  %v3686 = vpop.f32.mrf.mxu0
  %3687 = vmatprep.mubr.bf16.mxu0 0
  %3688 = vmatmul.mubr.bf16.gmra.mxu0 %v3602
  %v3689 = vpop.f32.mrf.mxu0
  %v3690 = vadd.f32 0.0, %v3689
  %v3691 = vpop.f32.mrf.mxu0
  %v3692 = vpop.f32.mrf.mxu0
  %v3693 = vadd.f32 0.0, %v3692
  %v3694 = vpop.f32.mrf.mxu0
  %3695 = vmatprep.mubr.bf16.mxu0 0
  %3696 = vmatmul.mubr.bf16.gmra.mxu0 %v3605
  %v3697 = vpop.f32.mrf.mxu0
  %v3698 = vadd.f32 0.0, %v3697
  %v3699 = vpop.f32.mrf.mxu0
  %v3700 = vpop.f32.mrf.mxu0
  %v3701 = vadd.f32 0.0, %v3700
  %v3702 = vpop.f32.mrf.mxu0
  %3703 = vdwg.mxu0
  %v3716 = vunpack.c.l.b16 %v3546
  %v3717 = vunpack.c.l.b16 %v3547
  %v3718 = vunpack.c.l.b16 %v3548
  %v3719 = vunpack.c.l.b16 %v3549
  %v3720 = vunpack.c.l.b16 %v3550
  %v3721 = vunpack.c.l.b16 %v3551
  %v3722 = vunpack.c.l.b16 %v3552
  %v3723 = vunpack.c.l.b16 %v3553
  %v3724 = vunpack.c.l.b16 %v3554
  %v3725 = vunpack.c.l.b16 %v3555
  %v3726 = vunpack.c.l.b16 %v3556
  %v3727 = vunpack.c.l.b16 %v3557
  %v3728 = vpack.c.b16 %v3717, %v3716
  %v3729 = vpack.c.b16 %v3719, %v3718
  %v3730 = vpack.c.b16 %v3721, %v3720
  %v3731 = vpack.c.b16 %v3723, %v3722
  %v3732 = vpack.c.b16 %v3725, %v3724
  %v3733 = vpack.c.b16 %v3727, %v3726
  %vm3740 = vcmask 785408
  %v3742 = vsel %vm3740, %v3538, 0
  %v3745 = vsel %vm3740, %v3539, 0
  %v3748 = vsel %vm3740, %v3540, 0
  %v3751 = vsel %vm3740, %v3541, 0
  %v3754 = vsel %vm3740, %v3542, 0
  %v3757 = vsel %vm3740, %v3543, 0
  %v3760 = vsel %vm3740, %v3544, 0
  %v3763 = vsel %vm3740, %v3545, 0
  %3765 = vmatprep.subr.bf16.mxu0 0
  %3766 = vmatpush1.bf16.msra.mxu0 0
  %3767 = vmatprep.subr.bf16.mxu0 0
  %3768 = vmatpush1.bf16.msra.mxu0 0
  %3769 = vmatprep.subr.bf16.mxu0 0
  %3770 = vmatpush1.bf16.msra.mxu0 %v3733
  %3771 = vmatprep.subr.bf16.mxu0 0
  %3772 = vmatpush1.bf16.msra.mxu0 %v3732
  %3773 = vmatprep.subr.bf16.mxu0 0
  %3774 = vmatpush1.bf16.msra.mxu0 %v3731
  %3775 = vmatprep.subr.bf16.mxu0 0
  %3776 = vmatpush1.bf16.msra.mxu0 %v3730
  %3777 = vmatprep.subr.bf16.mxu0 0
  %3778 = vmatpush1.bf16.msra.mxu0 %v3729
  %3779 = vmatprep.subr.bf16.mxu0 0
  %3780 = vmatpush1.bf16.msra.mxu0 %v3728
  %3781 = vmatprep.subr.bf16.mxu0 0
  %3782 = vmatpush2.bf16.msra.mxu0 0
  %3783 = vmatprep.subr.bf16.mxu0 0
  %3784 = vmatpush2.bf16.msra.mxu0 0
  %3785 = vmatprep.subr.bf16.mxu0 0
  %3786 = vmatpush2.bf16.msra.mxu0 0
  %3787 = vmatprep.subr.bf16.mxu0 0
  %3788 = vmatpush2.bf16.msra.mxu0 0
  %3789 = vmatprep.subr.bf16.mxu0 0
  %3790 = vmatpush2.bf16.msra.mxu0 0
  %3791 = vmatprep.subr.bf16.mxu0 0
  %3792 = vmatpush2.bf16.msra.mxu0 0
  %3793 = vmatprep.subr.bf16.mxu0 0
  %3794 = vmatpush2.bf16.msra.mxu0 0
  %3795 = vmatprep.subr.bf16.mxu0 0
  %3796 = vmatpush2.bf16.msra.mxu0 0
  %3797 = vmatprep.mubr.bf16.mxu0 0
  %3798 = vmatmul.mubr.bf16.gmra.mxu0 %v3742
  %v3799 = vpop.f32.mrf.mxu0
  %v3800 = vadd.f32 %v3642, %v3799
  %v3801 = vpop.f32.mrf.mxu0
  %v3802 = vpop.f32.mrf.mxu0
  %v3803 = vadd.f32 %v3645, %v3802
  %v3804 = vpop.f32.mrf.mxu0
  %3805 = vmatprep.mubr.bf16.mxu0 0
  %3806 = vmatmul.mubr.bf16.gmra.mxu0 %v3745
  %v3807 = vpop.f32.mrf.mxu0
  %v3808 = vadd.f32 %v3650, %v3807
  %v3809 = vpop.f32.mrf.mxu0
  %v3810 = vpop.f32.mrf.mxu0
  %v3811 = vadd.f32 %v3653, %v3810
  %v3812 = vpop.f32.mrf.mxu0
  %3813 = vmatprep.mubr.bf16.mxu0 0
  %3814 = vmatmul.mubr.bf16.gmra.mxu0 %v3748
  %v3815 = vpop.f32.mrf.mxu0
  %v3816 = vadd.f32 %v3658, %v3815
  %v3817 = vpop.f32.mrf.mxu0
  %v3818 = vpop.f32.mrf.mxu0
  %v3819 = vadd.f32 %v3661, %v3818
  %v3820 = vpop.f32.mrf.mxu0
  %3821 = vmatprep.mubr.bf16.mxu0 0
  %3822 = vmatmul.mubr.bf16.gmra.mxu0 %v3751
  %v3823 = vpop.f32.mrf.mxu0
  %v3824 = vadd.f32 %v3666, %v3823
  %v3825 = vpop.f32.mrf.mxu0
  %v3826 = vpop.f32.mrf.mxu0
  %v3827 = vadd.f32 %v3669, %v3826
  %v3828 = vpop.f32.mrf.mxu0
  %3829 = vmatprep.mubr.bf16.mxu0 0
  %3830 = vmatmul.mubr.bf16.gmra.mxu0 %v3754
  %v3831 = vpop.f32.mrf.mxu0
  %v3832 = vadd.f32 %v3674, %v3831
  %v3833 = vpop.f32.mrf.mxu0
  %v3834 = vpop.f32.mrf.mxu0
  %v3835 = vadd.f32 %v3677, %v3834
  %v3836 = vpop.f32.mrf.mxu0
  %3837 = vmatprep.mubr.bf16.mxu0 0
  %3838 = vmatmul.mubr.bf16.gmra.mxu0 %v3757
  %v3839 = vpop.f32.mrf.mxu0
  %v3840 = vadd.f32 %v3682, %v3839
  %v3841 = vpop.f32.mrf.mxu0
  %v3842 = vpop.f32.mrf.mxu0
  %v3843 = vadd.f32 %v3685, %v3842
  %v3844 = vpop.f32.mrf.mxu0
  %3845 = vmatprep.mubr.bf16.mxu0 0
  %3846 = vmatmul.mubr.bf16.gmra.mxu0 %v3760
  %v3847 = vpop.f32.mrf.mxu0
  %v3848 = vadd.f32 %v3690, %v3847
  %v3849 = vpop.f32.mrf.mxu0
  %v3850 = vpop.f32.mrf.mxu0
  %v3851 = vadd.f32 %v3693, %v3850
  %v3852 = vpop.f32.mrf.mxu0
  %3853 = vmatprep.mubr.bf16.mxu0 0
  %3854 = vmatmul.mubr.bf16.gmra.mxu0 %v3763
  %v3855 = vpop.f32.mrf.mxu0
  %v3856 = vadd.f32 %v3698, %v3855
  %v3857 = vpop.f32.mrf.mxu0
  %v3858 = vpop.f32.mrf.mxu0
  %v3859 = vadd.f32 %v3701, %v3858
  %v3860 = vpop.f32.mrf.mxu0
  %3861 = vdwg.mxu0
  %v3862 = vpack.c.bf16 %v2079, %v1976
  %v3863 = vpack.c.bf16 %v2285, %v2182
  %v3864 = vpack.c.bf16 %v2491, %v2388
  %v3865 = vpack.c.bf16 %v2697, %v2594
  %v3866 = vpack.c.bf16 %v2903, %v2800
  %v3867 = vpack.c.bf16 %v3109, %v3006
  %v3868 = vpack.c.bf16 %v3315, %v3212
  %v3869 = vpack.c.bf16 %v3521, %v3418
  %v3870 = vld [vmem:[%s5] sm:$0xf]
  %v3871 = vld [vmem:[%s5 + $0x4] sm:$0xf]
  %v3872 = vld [vmem:[%s5 + $0x8] sm:$0xf]
  %v3873 = vld [vmem:[%s5 + $0xc] sm:$0xf]
  %v3878 = vunpack.c.l.b16 %v3870
  %v3879 = vunpack.c.l.b16 %v3871
  %v3880 = vunpack.c.l.b16 %v3872
  %v3881 = vunpack.c.l.b16 %v3873
  %v3882 = vpack.c.b16 %v3879, %v3878
  %v3883 = vpack.c.b16 %v3881, %v3880
  %v3887 = vsel %vm3582, %v3862, 0
  %v3890 = vsel %vm3582, %v3863, 0
  %v3893 = vsel %vm3582, %v3864, 0
  %v3896 = vsel %vm3582, %v3865, 0
  %v3899 = vsel %vm3582, %v3866, 0
  %v3902 = vsel %vm3582, %v3867, 0
  %v3905 = vsel %vm3582, %v3868, 0
  %v3908 = vsel %vm3582, %v3869, 0
  %3910 = vmatprep.subr.bf16.mxu0 0
  %3911 = vmatpush1.bf16.msra.mxu0 0
  %3912 = vmatprep.subr.bf16.mxu0 0
  %3913 = vmatpush1.bf16.msra.mxu0 0
  %3914 = vmatprep.subr.bf16.mxu0 0
  %3915 = vmatpush1.bf16.msra.mxu0 0
  %3916 = vmatprep.subr.bf16.mxu0 0
  %3917 = vmatpush1.bf16.msra.mxu0 0
  %3918 = vmatprep.subr.bf16.mxu0 0
  %3919 = vmatpush1.bf16.msra.mxu0 0
  %3920 = vmatprep.subr.bf16.mxu0 0
  %3921 = vmatpush1.bf16.msra.mxu0 0
  %3922 = vmatprep.subr.bf16.mxu0 0
  %3923 = vmatpush1.bf16.msra.mxu0 %v3883
  %3924 = vmatprep.subr.bf16.mxu0 0
  %3925 = vmatpush1.bf16.msra.mxu0 %v3882
  %3926 = vmatprep.subr.bf16.mxu0 0
  %3927 = vmatpush2.bf16.msra.mxu0 0
  %3928 = vmatprep.subr.bf16.mxu0 0
  %3929 = vmatpush2.bf16.msra.mxu0 0
  %3930 = vmatprep.subr.bf16.mxu0 0
  %3931 = vmatpush2.bf16.msra.mxu0 0
  %3932 = vmatprep.subr.bf16.mxu0 0
  %3933 = vmatpush2.bf16.msra.mxu0 0
  %3934 = vmatprep.subr.bf16.mxu0 0
  %3935 = vmatpush2.bf16.msra.mxu0 0
  %3936 = vmatprep.subr.bf16.mxu0 0
  %3937 = vmatpush2.bf16.msra.mxu0 0
  %3938 = vmatprep.subr.bf16.mxu0 0
  %3939 = vmatpush2.bf16.msra.mxu0 0
  %3940 = vmatprep.subr.bf16.mxu0 0
  %3941 = vmatpush2.bf16.msra.mxu0 0
  %3942 = vmatprep.mubr.bf16.mxu0 0
  %3943 = vmatmul.mubr.bf16.gmra.mxu0 %v3887
  %v3944 = vpop.f32.mrf.mxu0
  %v3945 = vadd.f32 0.0, %v3944
  %v3946 = vpop.f32.mrf.mxu0
  %v3947 = vpop.f32.mrf.mxu0
  %v3948 = vadd.f32 0.0, %v3947
  %v3949 = vpop.f32.mrf.mxu0
  %3950 = vmatprep.mubr.bf16.mxu0 0
  %3951 = vmatmul.mubr.bf16.gmra.mxu0 %v3890
  %v3952 = vpop.f32.mrf.mxu0
  %v3953 = vadd.f32 0.0, %v3952
  %v3954 = vpop.f32.mrf.mxu0
  %v3955 = vpop.f32.mrf.mxu0
  %v3956 = vadd.f32 0.0, %v3955
  %v3957 = vpop.f32.mrf.mxu0
  %3958 = vmatprep.mubr.bf16.mxu0 0
  %3959 = vmatmul.mubr.bf16.gmra.mxu0 %v3893
  %v3960 = vpop.f32.mrf.mxu0
  %v3961 = vadd.f32 0.0, %v3960
  %v3962 = vpop.f32.mrf.mxu0
  %v3963 = vpop.f32.mrf.mxu0
  %v3964 = vadd.f32 0.0, %v3963
  %v3965 = vpop.f32.mrf.mxu0
  %3966 = vmatprep.mubr.bf16.mxu0 0
  %3967 = vmatmul.mubr.bf16.gmra.mxu0 %v3896
  %v3968 = vpop.f32.mrf.mxu0
  %v3969 = vadd.f32 0.0, %v3968
  %v3970 = vpop.f32.mrf.mxu0
  %v3971 = vpop.f32.mrf.mxu0
  %v3972 = vadd.f32 0.0, %v3971
  %v3973 = vpop.f32.mrf.mxu0
  %3974 = vmatprep.mubr.bf16.mxu0 0
  %3975 = vmatmul.mubr.bf16.gmra.mxu0 %v3899
  %v3976 = vpop.f32.mrf.mxu0
  %v3977 = vadd.f32 0.0, %v3976
  %v3978 = vpop.f32.mrf.mxu0
  %v3979 = vpop.f32.mrf.mxu0
  %v3980 = vadd.f32 0.0, %v3979
  %v3981 = vpop.f32.mrf.mxu0
  %3982 = vmatprep.mubr.bf16.mxu0 0
  %3983 = vmatmul.mubr.bf16.gmra.mxu0 %v3902
  %v3984 = vpop.f32.mrf.mxu0
  %v3985 = vadd.f32 0.0, %v3984
  %v3986 = vpop.f32.mrf.mxu0
  %v3987 = vpop.f32.mrf.mxu0
  %v3988 = vadd.f32 0.0, %v3987
  %v3989 = vpop.f32.mrf.mxu0
  %3990 = vmatprep.mubr.bf16.mxu0 0
  %3991 = vmatmul.mubr.bf16.gmra.mxu0 %v3905
  %v3992 = vpop.f32.mrf.mxu0
  %v3993 = vadd.f32 0.0, %v3992
  %v3994 = vpop.f32.mrf.mxu0
  %v3995 = vpop.f32.mrf.mxu0
  %v3996 = vadd.f32 0.0, %v3995
  %v3997 = vpop.f32.mrf.mxu0
  %3998 = vmatprep.mubr.bf16.mxu0 0
  %3999 = vmatmul.mubr.bf16.gmra.mxu0 %v3908
  %v4000 = vpop.f32.mrf.mxu0
  %v4001 = vadd.f32 0.0, %v4000
  %v4002 = vpop.f32.mrf.mxu0
  %v4003 = vpop.f32.mrf.mxu0
  %v4004 = vadd.f32 0.0, %v4003
  %v4005 = vpop.f32.mrf.mxu0
  %4006 = vdwg.mxu0
  %v4007 = vadd.f32 %v3800, %v3945
  %v4008 = vadd.f32 %v3803, %v3948
  %v4009 = vadd.f32 %v3808, %v3953
  %v4010 = vadd.f32 %v3811, %v3956
  %v4011 = vadd.f32 %v3816, %v3961
  %v4012 = vadd.f32 %v3819, %v3964
  %v4013 = vadd.f32 %v3824, %v3969
  %v4014 = vadd.f32 %v3827, %v3972
  %v4015 = vadd.f32 %v3832, %v3977
  %v4016 = vadd.f32 %v3835, %v3980
  %v4017 = vadd.f32 %v3840, %v3985
  %v4018 = vadd.f32 %v3843, %v3988
  %v4019 = vadd.f32 %v3848, %v3993
  %v4020 = vadd.f32 %v3851, %v3996
  %v4021 = vadd.f32 %v3856, %v4001
  %v4022 = vadd.f32 %v3859, %v4004
  %v4023 = vld [vmem:[%s6] sm:$0x1]
  %v4025 = vlaneseq
  %v4026 = vshrl.u32 %v4025, 7
  %v4027 = vsub.s32 0, %v4026
  %v4028 = vrot.slane %v4023, %v4027
  %v4030 = vadd.f32 %v4007, %v4028
  %v4031 = vadd.f32 %v4008, %v4028
  %v4032 = vadd.f32 %v4009, %v4028
  %v4033 = vadd.f32 %v4010, %v4028
  %v4034 = vadd.f32 %v4011, %v4028
  %v4035 = vadd.f32 %v4012, %v4028
  %v4036 = vadd.f32 %v4013, %v4028
  %v4037 = vadd.f32 %v4014, %v4028
  %v4038 = vadd.f32 %v4015, %v4028
  %v4039 = vadd.f32 %v4016, %v4028
  %v4040 = vadd.f32 %v4017, %v4028
  %v4041 = vadd.f32 %v4018, %v4028
  %v4042 = vadd.f32 %v4019, %v4028
  %v4043 = vadd.f32 %v4020, %v4028
  %v4044 = vadd.f32 %v4021, %v4028
  %v4045 = vadd.f32 %v4022, %v4028
  %4046 = vst [vmem:[%s7] sm:$0xff] %v4030
  %4047 = vst [vmem:[%s7 + $0x8] sm:$0xff] %v4031
  %4048 = vst [vmem:[%s7 + $0x10] sm:$0xff] %v4032
  %4049 = vst [vmem:[%s7 + $0x18] sm:$0xff] %v4033
  %4050 = vst [vmem:[%s7 + $0x20] sm:$0xff] %v4034
  %4051 = vst [vmem:[%s7 + $0x28] sm:$0xff] %v4035
  %4052 = vst [vmem:[%s7 + $0x30] sm:$0xff] %v4036
  %4053 = vst [vmem:[%s7 + $0x38] sm:$0xff] %v4037
  %4054 = vst [vmem:[%s7 + $0x40] sm:$0xff] %v4038
  %4055 = vst [vmem:[%s7 + $0x48] sm:$0xff] %v4039
  %4056 = vst [vmem:[%s7 + $0x50] sm:$0xff] %v4040
  %4057 = vst [vmem:[%s7 + $0x58] sm:$0xff] %v4041
  %4058 = vst [vmem:[%s7 + $0x60] sm:$0xff] %v4042
  %4059 = vst [vmem:[%s7 + $0x68] sm:$0xff] %v4043
  %4060 = vst [vmem:[%s7 + $0x70] sm:$0xff] %v4044
  %4061 = vst [vmem:[%s7 + $0x78] sm:$0xff] %v4045
  // Predicated region
  $region30: #{feat_encode.1} parent=0 // pred_check
    _
  $region31: #{feat_encode.1} parent=0 // pred_check_branch
    %4063 = sbr.rel (0) target = $region33
  $region32: #{feat_encode.1} parent=0 // pred_region
    _
  $region33: #{feat_encode.1} parent=0 // pred_fallthru
    _
  // Predicated region
  $region34: #{feat_encode.1} parent=0 // pred_check
    _
  $region35: #{feat_encode.1} parent=0 // pred_check_branch
    %4065 = sbr.rel (0) target = $region37
  $region36: #{feat_encode.1} parent=0 // pred_region
    _
  $region37: #{feat_encode.1} parent=0 // pred_fallthru
    _

</llo_original>
